<compile_context>
chip_gen: v7x
topology: tpu7x:2x2x1
jax: 0.10.0
libtpu: 0.0.40
codegen_flags: <defaults>
</compile_context>

<pallas_src>
import jax
import jax.numpy as jnp
from jax.experimental import pallas as pl
from jax.experimental.pallas import tpu as pltpu

_LANE = 128
_TILE_BUDGET_BYTES = 24 * 1024 * 1024   # conservative: leaves headroom on v7x (64 MiB VMEM)
_VMEM_LIMIT_CAP = 48 * 1024 * 1024      # < v7x physical VMEM; plenty on v5e/v6e (128 MiB)


def _round_up(x, m):
    return (x + m - 1) // m * m


def _bottleneck_kernel(
    x_ref,      # (1, TH, W, Cp)   bf16  auto-pipelined center rows
    xhbm_ref,   # (N, H, W, Cp)    bf16  raw HBM ref (halo rows)
    w1_ref,     # (Cp, Pp)         bf16  conv1 1x1  (* bn1 scale)
    w2_ref,     # (3*Pp, 3*Pp)     bf16  conv2 3x3 block matrix (* bn2 scale)
    w3_ref,     # (Pp, Cp)         bf16  conv3 1x1  (* bn3 scale)
    b1_ref,     # (1, Pp)  f32
    b2_ref,     # (1, Pp)  f32
    b3_ref,     # (1, Cp)  f32
    o_ref,      # (1, TH, W, Cp)   bf16
    v_ref,      # (TH*W, 3*Pp)     bf16/f32 scratch: conv2 LHS (3 vertical taps)
    xhalo_ref,  # (2, W, Cp)       bf16  scratch: raw halo rows
    sem_ref,    # DMA semaphores (2,)
):
    _, TH, W, Cp = x_ref.shape
    Pp = w1_ref.shape[1]
    M = TH * W

    n = pl.program_id(0)
    t = pl.program_id(1)
    nt = pl.num_programs(1)
    r0 = t * TH
    has_top = t > 0
    has_bot = t < nt - 1

    # Kick off the (tiny) halo-row DMAs early so they overlap the center conv1.
    @pl.when(has_top)
    def _():
        pltpu.make_async_copy(
            xhbm_ref.at[n, pl.ds(r0 - 1, 1)], xhalo_ref.at[pl.ds(0, 1)], sem_ref.at[0]
        ).start()

    @pl.when(has_bot)
    def _():
        pltpu.make_async_copy(
            xhbm_ref.at[n, pl.ds(r0 + TH, 1)], xhalo_ref.at[pl.ds(1, 1)], sem_ref.at[1]
        ).start()

    w1 = w1_ref[...]
    b1 = b1_ref[...]

    # ---- conv1 (1x1) + bn1 shift + relu on the TH center rows.  The result is
    # scattered directly into the three vertical-tap column blocks of the conv2
    # LHS scratch (no separate im2col buffer / concatenate). ----
    y1c = jnp.dot(x_ref[...].reshape(M, Cp), w1, preferred_element_type=jnp.float32)
    y1c = jnp.maximum(y1c + b1, 0.0).astype(v_ref.dtype)
    v_ref[:, Pp:2 * Pp] = y1c                        # kh = 1 tap (same row)
    v_ref[W:M, 0:Pp] = y1c[0:M - W, :]               # kh = 0 tap: v[f] <- y1[f - W]
    v_ref[0:M - W, 2 * Pp:3 * Pp] = y1c[W:M, :]      # kh = 2 tap: v[f] <- y1[f + W]

    # ---- conv1 on the halo rows (zeros at the image top/bottom border) ----
    @pl.when(has_top)
    def _():
        pltpu.make_async_copy(
            xhbm_ref.at[n, pl.ds(r0 - 1, 1)], xhalo_ref.at[pl.ds(0, 1)], sem_ref.at[0]
        ).wait()
        y1t = jnp.maximum(
            jnp.dot(xhalo_ref[0], w1, preferred_element_type=jnp.float32) + b1, 0.0)
        v_ref[0:W, 0:Pp] = y1t.astype(v_ref.dtype)

    @pl.when(t == 0)
    def _():
        v_ref[0:W, 0:Pp] = jnp.zeros((W, Pp), v_ref.dtype)

    @pl.when(has_bot)
    def _():
        pltpu.make_async_copy(
            xhbm_ref.at[n, pl.ds(r0 + TH, 1)], xhalo_ref.at[pl.ds(1, 1)], sem_ref.at[1]
        ).wait()
        y1b = jnp.maximum(
            jnp.dot(xhalo_ref[1], w1, preferred_element_type=jnp.float32) + b1, 0.0)
        v_ref[M - W:M, 2 * Pp:3 * Pp] = y1b.astype(v_ref.dtype)

    @pl.when(t == nt - 1)
    def _():
        v_ref[M - W:M, 2 * Pp:3 * Pp] = jnp.zeros((W, Pp), v_ref.dtype)

    # ---- conv2 (3x3, pad 1) + bn2 shift + relu.  Single MXU matmul with
    # K = N = 3*Pp; the three N-blocks are the horizontal partial sums for
    # kw = 0/1/2.  The +-1 column combine is two XLU row-rolls with left/right
    # boundary masks (the masks also kill the roll wrap-around). ----
    zz = jnp.dot(v_ref[...].astype(jnp.bfloat16), w2_ref[...],
                 preferred_element_type=jnp.float32)            # (M, 3*Pp) f32
    z_m1 = zz[:, 0:Pp]            # kw = 0 taps: consumed by output column w+1
    z_c = zz[:, Pp:2 * Pp]        # kw = 1 taps
    z_p1 = zz[:, 2 * Pp:3 * Pp]   # kw = 2 taps: consumed by output column w-1

    col = jax.lax.broadcasted_iota(jnp.int32, (TH, W, 1), 1).reshape(M, 1)
    from_right = pltpu.roll(z_p1, M - 1, axis=0)   # row f <- z_p1[f + 1]
    from_left = pltpu.roll(z_m1, 1, axis=0)        # row f <- z_m1[f - 1]
    y2 = (z_c
          + jnp.where(col < W - 1, from_right, 0.0)
          + jnp.where(col > 0, from_left, 0.0))
    y2 = jnp.maximum(y2 + b2_ref[...], 0.0)

    # ---- conv3 (1x1) + bn3 shift + residual + relu (all f32 epilogue) ----
    y3 = jnp.dot(y2.astype(jnp.bfloat16), w3_ref[...],
                 preferred_element_type=jnp.float32)
    res = x_ref[...].reshape(M, Cp).astype(jnp.float32)   # re-load: short live range
    out = jnp.maximum(y3 + b3_ref[...] + res, 0.0)
    o_ref[...] = out.reshape(1, TH, W, Cp).astype(o_ref.dtype)


def _tile_vmem_bytes(TH, W, Cp, Pp, v_itemsize):
    """Rough per-grid-step VMEM footprint (double-buffered blocks + scratch + temps)."""
    m = TH * W
    in_block = m * Cp * 2                 # bf16 input block
    out_block = m * Cp * 2                # bf16 output block
    weights = (Cp * Pp + 9 * Pp * Pp + Pp * Cp) * 2
    v_scratch = m * 3 * Pp * v_itemsize
    halo = 2 * W * Cp * 2
    temps = m * (3 * Pp + 2 * Pp + Cp) * 4   # f32 matmul results / epilogue values
    return 2 * (in_block + out_block + weights) + v_scratch + halo + temps


def _pick_row_tile(N, H, W, Cp, Pp, v_itemsize, budget):
    divs = [d for d in range(2, H + 1) if H % d == 0]
    if not divs:
        return H
    best = divs[0]
    for d in divs:                          # ascending -> keeps the largest that fits
        if _tile_vmem_bytes(d, W, Cp, Pp, v_itemsize) <= budget:
            best = d
    # v7x has 2 TensorCores per chip: make sure there are >= 2 "parallel" grid steps.
    if N * (H // best) < 2:
        half = [d for d in divs if d <= H // 2
                and _tile_vmem_bytes(d, W, Cp, Pp, v_itemsize) <= budget]
        if half:
            best = half[-1]
        elif any(d <= H // 2 for d in divs):
            best = max(d for d in divs if d <= H // 2)
    return best


def bottleneck_forward_nhwc(x_nhwc, params, *, row_tile=None):
    """Identity-residual HRNet Bottleneck.  NHWC in -> NHWC bf16 out.

    Preferred entry point: if the surrounding model stays NHWC (and Cout is a
    multiple of 128) no layout transposes / channel-pad copies are needed.
    """
    w1, w2, w3, s1, b1, s2, b2, s3, b3 = params
    N, H, W, Cin = x_nhwc.shape
    P = w1.shape[0]          # planes
    Cout = w3.shape[0]       # planes * expansion

    assert Cout == 4 * P and Cin == Cout, (
        "kernel implements the identity-residual Bottleneck only "
        "(stride=1, downsample=None, inplanes == planes * expansion)")
    assert W % 8 == 0 and H >= 2, "W must be sublane aligned and H >= 2"

    f32 = jnp.float32
    bf16 = jnp.bfloat16
    Cp = _round_up(Cin, _LANE)
    Pp = _round_up(P, _LANE)

    # conv2-LHS scratch: bf16 needs 16-row sublane tiles at the +-W offsets; fall
    # back to f32 when W is only 8-aligned so the stores stay tile aligned.
    v_dtype = bf16 if W % 16 == 0 else f32
    v_itemsize = jnp.dtype(v_dtype).itemsize

    if row_tile is None:
        row_tile = _pick_row_tile(N, H, W, Cp, Pp, v_itemsize, _TILE_BUDGET_BYTES)
    TH = int(row_tile)
    assert TH >= 2 and H % TH == 0
    T = H // TH

    # --- fold BN scales into bf16 matmul weights, zero-pad channels to 128 lanes ---
    def pad2(a, r, c):
        return jnp.pad(a, ((0, r - a.shape[0]), (0, c - a.shape[1])))

    w1_m = pad2(w1[:, :, 0, 0].T * s1[None, :], Cp, Pp).astype(bf16)
    w3_m = pad2(w3[:, :, 0, 0].T * s3[None, :], Pp, Cp).astype(bf16)

    # conv2 block matrix: [kh*Pp + ci, kw*Pp + co] = w2[co, ci, kh, kw] * s2[co]
    w2_sc = jnp.transpose(w2, (2, 1, 3, 0)) * s2[None, None, None, :]   # (3,P,3,P)
    w2_big = jnp.zeros((3, Pp, 3, Pp), f32).at[:, :P, :, :P].set(w2_sc)
    w2_big = w2_big.reshape(3 * Pp, 3 * Pp).astype(bf16)
    # TODO(synk): on v5e with P < 128 the Pp padding makes conv2 ~2.25x more MXU
    #             passes than a round_up(3*P,128) packing; left as-is since the
    #             kernel is HBM-bound on v6e/v7x and the repack costs lane shuffles.

    def padvec(v, nn):
        return jnp.pad(v, (0, nn - v.shape[0])).reshape(1, nn).astype(f32)

    b1_ = padvec(b1, Pp)
    b2_ = padvec(b2, Pp)
    b3_ = padvec(b3, Cp)

    # bf16 HBM I/O (kernel accumulation / epilogue stay f32)
    x_p = jnp.pad(x_nhwc.astype(bf16), ((0, 0), (0, 0), (0, 0), (0, Cp - Cin)))

    def _const_spec(shape):
        return pl.BlockSpec(shape, lambda n, t: (0,) * len(shape))

    est = _tile_vmem_bytes(TH, W, Cp, Pp, v_itemsize)
    vmem_limit = int(min(_VMEM_LIMIT_CAP, max(24 * 1024 * 1024, 2 * est)))

    out_nhwc = pl.pallas_call(
        _bottleneck_kernel,
        out_shape=jax.ShapeDtypeStruct((N, H, W, Cp), bf16),
        grid_spec=pltpu.PrefetchScalarGridSpec(
            num_scalar_prefetch=0,
            grid=(N, T),
            in_specs=[
                pl.BlockSpec((1, TH, W, Cp), lambda n, t: (n, t, 0, 0)),  # center rows
                pl.BlockSpec(memory_space=pl.ANY),                        # raw HBM x (halos)
                _const_spec(w1_m.shape),
                _const_spec(w2_big.shape),
                _const_spec(w3_m.shape),
                _const_spec(b1_.shape),
                _const_spec(b2_.shape),
                _const_spec(b3_.shape),
            ],
            out_specs=pl.BlockSpec((1, TH, W, Cp), lambda n, t: (n, t, 0, 0)),
            scratch_shapes=[
                pltpu.VMEM((TH * W, 3 * Pp), v_dtype),
                pltpu.VMEM((2, W, Cp), bf16),
                pltpu.SemaphoreType.DMA((2,)),
            ],
        ),
        compiler_params=pltpu.CompilerParams(
            dimension_semantics=("parallel", "parallel"),
            vmem_limit_bytes=vmem_limit,
        ),
    )(x_p, x_p, w1_m, w2_big, w3_m, b1_, b2_, b3_)

    return out_nhwc[:, :, :, :Cout]


def bottleneck_forward(x_nchw, params, *, row_tile=None):
    """Drop-in NCHW/f32 interface matching the PyTorch module.

    NOTE: the NCHW<->NHWC transposes here double end-to-end HBM traffic; if the
    surrounding model can stay NHWC, call `bottleneck_forward_nhwc` directly.
    """
    x_nhwc = jnp.transpose(x_nchw, (0, 2, 3, 1))
    out = bottleneck_forward_nhwc(x_nhwc, params, row_tile=row_tile)
    return jnp.transpose(out, (0, 3, 1, 2)).astype(jnp.float32)


# ----------------------- pure-JAX reference (NCHW) -------------------------
def _reference(x, params):
    (w1, w2, w3, s1, b1, s2, b2, s3, b3) = params

    def conv(x, w, pad):
        return jax.lax.conv_general_dilated(
            x, w, (1, 1), [(pad, pad), (pad, pad)],
            dimension_numbers=("NCHW", "OIHW", "NCHW"),
            precision=jax.lax.Precision.HIGHEST,
        )

    def bn(x, s, b):
        return x * s[None, :, None, None] + b[None, :, None, None]

    out = jnp.maximum(bn(conv(x, w1, 0), s1, b1), 0.0)
    out = jnp.maximum(bn(conv(out, w2, 1), s2, b2), 0.0)
    out = bn(conv(out, w3, 0), s3, b3)
    return jnp.maximum(out + x, 0.0)


def _make_params(key, inplanes, planes):
    exp = 4
    ks = jax.random.split(key, 15)
    eps = 1e-5

    def fold_bn(gamma, beta, mean, var):
        scale = gamma / jnp.sqrt(var + eps)
        shift = beta - mean * scale
        return scale, shift

    w1 = jax.random.normal(ks[0], (planes, inplanes, 1, 1), jnp.float32) * 0.1
    w2 = jax.random.normal(ks[1], (planes, planes, 3, 3), jnp.float32) * 0.1
    w3 = jax.random.normal(ks[2], (planes * exp, planes, 1, 1), jnp.float32) * 0.1

    g1 = 1.0 + 0.1 * jax.random.normal(ks[3], (planes,), jnp.float32)
    be1 = 0.1 * jax.random.normal(ks[4], (planes,), jnp.float32)
    m1 = 0.05 * jax.random.normal(ks[5], (planes,), jnp.float32)
    v1 = 1.0 + 0.1 * jax.random.uniform(ks[6], (planes,), jnp.float32)

    g2 = 1.0 + 0.1 * jax.random.normal(ks[7], (planes,), jnp.float32)
    be2 = 0.1 * jax.random.normal(ks[8], (planes,), jnp.float32)
    m2 = 0.05 * jax.random.normal(ks[9], (planes,), jnp.float32)
    v2 = 1.0 + 0.1 * jax.random.uniform(ks[10], (planes,), jnp.float32)

    g3 = 1.0 + 0.1 * jax.random.normal(ks[11], (planes * exp,), jnp.float32)
    be3 = 0.1 * jax.random.normal(ks[12], (planes * exp,), jnp.float32)
    m3 = 0.05 * jax.random.normal(ks[13], (planes * exp,), jnp.float32)
    v3 = 1.0 + 0.1 * jax.random.uniform(ks[14], (planes * exp,), jnp.float32)

    s1, b1 = fold_bn(g1, be1, m1, v1)
    s2, b2 = fold_bn(g2, be2, m2, v2)
    s3, b3 = fold_bn(g3, be3, m3, v3)
    return (w1, w2, w3, s1, b1, s2, b2, s3, b3)


if __name__ == "__main__":
    # Identity residual requires inplanes == planes * expansion.
    N, planes, H, W = 2, 8, 16, 16
    inplanes = planes * 4  # 32

    key = jax.random.PRNGKey(0)
    kx, kp = jax.random.split(key)
    x = jax.random.normal(kx, (N, inplanes, H, W), jnp.float32)
    params = _make_params(kp, inplanes, planes)

    ref = _reference(x, params)

    # 1) auto row-tile (full-H tile, 2 parallel grid steps)
    # 2) forced 2-tile split per image (exercises the halo DMA / recompute path)
    for rt in (None, 8):
        out = jax.block_until_ready(bottleneck_forward(x, params, row_tile=rt))
        assert out.shape == ref.shape == (N, inplanes, H, W)
        err = float(jnp.max(jnp.abs(out - ref)))
        # bf16 HBM I/O + bf16 MXU inputs (f32 accumulation / epilogue): allow a
        # small quantization gap vs. the f32 HIGHEST-precision reference.
        assert jnp.allclose(out, ref, rtol=4e-2, atol=4e-2), (rt, err)
    print("KERNEL_OK")
</pallas_src>

<mosaic_0001>
module attributes {stable_mosaic.version = 11 : i64} {
  func.func @_bottleneck_kernel(%arg0: i32, %arg1: i32, %arg2: memref<1x16x16x128xbf16, #tpu.memory_space<vmem>>, %arg3: memref<2x16x16x128xbf16, #tpu.memory_space<any>>, %arg4: memref<128x128xbf16, #tpu.memory_space<vmem>>, %arg5: memref<384x384xbf16, #tpu.memory_space<vmem>>, %arg6: memref<128x128xbf16, #tpu.memory_space<vmem>>, %arg7: memref<1x128xf32, #tpu.memory_space<vmem>>, %arg8: memref<1x128xf32, #tpu.memory_space<vmem>>, %arg9: memref<1x128xf32, #tpu.memory_space<vmem>>, %arg10: memref<1x16x16x128xbf16, #tpu.memory_space<vmem>>, %arg11: memref<256x384xbf16, #tpu.memory_space<vmem>>, %arg12: memref<2x16x128xbf16, #tpu.memory_space<vmem>>, %arg13: memref<2x!tpu.dma_semaphore, #tpu.memory_space<semaphore_mem>>) attributes {dimension_semantics = [#tpu.dimension_semantics<parallel>, #tpu.dimension_semantics<parallel>], iteration_bounds = array<i64: 2, 1>, scalar_prefetch = 0 : i64, scratch_operands = 3 : i64, tpu.core_type = #tpu.core_type<tc>, window_params = [{transform_indices = @transform_0, window_bounds = array<i64: 1, 16, 16, 128>}, {}, {pipeline_mode = #tpu.pipeline_mode<synchronous>, transform_indices = @transform_2, window_bounds = array<i64: 128, 128>}, {pipeline_mode = #tpu.pipeline_mode<synchronous>, transform_indices = @transform_3, window_bounds = array<i64: 384, 384>}, {pipeline_mode = #tpu.pipeline_mode<synchronous>, transform_indices = @transform_4, window_bounds = array<i64: 128, 128>}, {pipeline_mode = #tpu.pipeline_mode<synchronous>, transform_indices = @transform_5, window_bounds = array<i64: 1, 128>}, {pipeline_mode = #tpu.pipeline_mode<synchronous>, transform_indices = @transform_6, window_bounds = array<i64: 1, 128>}, {pipeline_mode = #tpu.pipeline_mode<synchronous>, transform_indices = @transform_7, window_bounds = array<i64: 1, 128>}, {transform_indices = @transform_8, window_bounds = array<i64: 1, 16, 16, 128>}]} {
    %c16_i32 = arith.constant 16 : i32
    %0 = arith.muli %arg1, %c16_i32 : i32
    %c0_i32 = arith.constant 0 : i32
    %1 = arith.cmpi sgt, %arg1, %c0_i32 : i32
    %c0_i32_0 = arith.constant 0 : i32
    %2 = arith.cmpi slt, %arg1, %c0_i32_0 : i32
    %3 = arith.extui %1 : i1 to i32
    %c0_i32_1 = arith.constant 0 : i32
    %4 = arith.cmpi ne, %3, %c0_i32_1 : i32
    scf.if %4 {
      %c1_i32_45 = arith.constant 1 : i32
      %76 = arith.subi %0, %c1_i32_45 : i32
      %c0_i32_46 = arith.constant 0 : i32
      %c0_i32_47 = arith.constant 0 : i32
      %c0_i32_48 = arith.constant 0 : i32
      %77 = tpu.memref_slice %arg3[%arg0, %76, %c0_i32_47, %c0_i32_48] : memref<2x16x16x128xbf16, #tpu.memory_space<any>> -> memref<1x1x16x128xbf16, #tpu.memory_space<any>>
      %78 = tpu.memref_squeeze %77 : memref<1x1x16x128xbf16, #tpu.memory_space<any>> -> memref<1x16x128xbf16, #tpu.memory_space<any>>
      %c0_i32_49 = arith.constant 0 : i32
      %c0_i32_50 = arith.constant 0 : i32
      %c0_i32_51 = arith.constant 0 : i32
      %79 = tpu.memref_slice %arg12[%c0_i32_49, %c0_i32_50, %c0_i32_51] : memref<2x16x128xbf16, #tpu.memory_space<vmem>> -> memref<1x16x128xbf16, #tpu.memory_space<vmem>>
      %80 = tpu.memref_slice %arg13[%c0_i32_46] : memref<2x!tpu.dma_semaphore, #tpu.memory_space<semaphore_mem>> -> memref<1x!tpu.dma_semaphore, #tpu.memory_space<semaphore_mem>>
      %81 = tpu.memref_squeeze %80 : memref<1x!tpu.dma_semaphore, #tpu.memory_space<semaphore_mem>> -> memref<!tpu.dma_semaphore, #tpu.memory_space<semaphore_mem>>
      tpu.enqueue_dma source(%78 : memref<1x16x128xbf16, #tpu.memory_space<any>>) target(%79 : memref<1x16x128xbf16, #tpu.memory_space<vmem>>) target_semaphore(%81 : memref<!tpu.dma_semaphore, #tpu.memory_space<semaphore_mem>>)
    } else {
    }
    %5 = arith.extui %2 : i1 to i32
    %c0_i32_2 = arith.constant 0 : i32
    %6 = arith.cmpi ne, %5, %c0_i32_2 : i32
    scf.if %6 {
      %c16_i32_45 = arith.constant 16 : i32
      %76 = arith.addi %0, %c16_i32_45 : i32
      %c1_i32_46 = arith.constant 1 : i32
      %c0_i32_47 = arith.constant 0 : i32
      %c0_i32_48 = arith.constant 0 : i32
      %77 = tpu.memref_slice %arg3[%arg0, %76, %c0_i32_47, %c0_i32_48] : memref<2x16x16x128xbf16, #tpu.memory_space<any>> -> memref<1x1x16x128xbf16, #tpu.memory_space<any>>
      %78 = tpu.memref_squeeze %77 : memref<1x1x16x128xbf16, #tpu.memory_space<any>> -> memref<1x16x128xbf16, #tpu.memory_space<any>>
      %c1_i32_49 = arith.constant 1 : i32
      %c0_i32_50 = arith.constant 0 : i32
      %c0_i32_51 = arith.constant 0 : i32
      %79 = tpu.memref_slice %arg12[%c1_i32_49, %c0_i32_50, %c0_i32_51] : memref<2x16x128xbf16, #tpu.memory_space<vmem>> -> memref<1x16x128xbf16, #tpu.memory_space<vmem>>
      %80 = tpu.memref_slice %arg13[%c1_i32_46] : memref<2x!tpu.dma_semaphore, #tpu.memory_space<semaphore_mem>> -> memref<1x!tpu.dma_semaphore, #tpu.memory_space<semaphore_mem>>
      %81 = tpu.memref_squeeze %80 : memref<1x!tpu.dma_semaphore, #tpu.memory_space<semaphore_mem>> -> memref<!tpu.dma_semaphore, #tpu.memory_space<semaphore_mem>>
      tpu.enqueue_dma source(%78 : memref<1x16x128xbf16, #tpu.memory_space<any>>) target(%79 : memref<1x16x128xbf16, #tpu.memory_space<vmem>>) target_semaphore(%81 : memref<!tpu.dma_semaphore, #tpu.memory_space<semaphore_mem>>)
    } else {
    }
    %c0 = arith.constant 0 : index
    %c0_3 = arith.constant 0 : index
    %7 = vector.load %arg4[%c0, %c0_3] : memref<128x128xbf16, #tpu.memory_space<vmem>>, vector<128x128xbf16>
    %c0_4 = arith.constant 0 : index
    %c0_5 = arith.constant 0 : index
    %8 = vector.load %arg7[%c0_4, %c0_5] : memref<1x128xf32, #tpu.memory_space<vmem>>, vector<1x128xf32>
    %c0_6 = arith.constant 0 : index
    %c0_7 = arith.constant 0 : index
    %c0_8 = arith.constant 0 : index
    %c0_9 = arith.constant 0 : index
    %9 = vector.load %arg2[%c0_6, %c0_7, %c0_8, %c0_9] : memref<1x16x16x128xbf16, #tpu.memory_space<vmem>>, vector<1x16x16x128xbf16>
    %10 = vector.shape_cast %9 : vector<1x16x16x128xbf16> to vector<256x128xbf16>
    %cst = arith.constant dense<0.000000e+00> : vector<256x128xf32>
    %11 = tpu.matmul %10, %7, %cst {dimension_numbers = #tpu.dot_dimension_numbers<[1], [0], [0], [1], [0, 0, 1, 1], [], []>} : vector<256x128xbf16>, vector<128x128xbf16>, vector<256x128xf32> -> vector<256x128xf32>
    %12 = vector.broadcast %8 : vector<1x128xf32> to vector<256x128xf32>
    %13 = arith.addf %11, %12 : vector<256x128xf32>
    %cst_10 = arith.constant 0.000000e+00 : f32
    %14 = vector.broadcast %cst_10 : f32 to vector<256x128xf32>
    %15 = arith.maximumf %13, %14 : vector<256x128xf32>
    %16 = arith.truncf %15 : vector<256x128xf32> to vector<256x128xbf16>
    %c0_11 = arith.constant 0 : index
    %c128 = arith.constant 128 : index
    %17 = vector.load %arg11[%c0_11, %c128] : memref<256x384xbf16, #tpu.memory_space<vmem>>, vector<256x128xbf16>
    tpu.vector_store %arg11[%c0_11, %c128], %16 {strides = array<i32>} : memref<256x384xbf16, #tpu.memory_space<vmem>>, vector<256x128xbf16>,
    %18 = vector.extract_strided_slice %16 {offsets = [0, 0], sizes = [240, 128], strides = [1, 1]} : vector<256x128xbf16> to vector<240x128xbf16>
    %c16 = arith.constant 16 : index
    %c0_12 = arith.constant 0 : index
    %19 = vector.load %arg11[%c16, %c0_12] : memref<256x384xbf16, #tpu.memory_space<vmem>>, vector<240x128xbf16>
    tpu.vector_store %arg11[%c16, %c0_12], %18 {strides = array<i32>} : memref<256x384xbf16, #tpu.memory_space<vmem>>, vector<240x128xbf16>,
    %20 = vector.extract_strided_slice %16 {offsets = [16, 0], sizes = [240, 128], strides = [1, 1]} : vector<256x128xbf16> to vector<240x128xbf16>
    %c0_13 = arith.constant 0 : index
    %c256 = arith.constant 256 : index
    %21 = vector.load %arg11[%c0_13, %c256] : memref<256x384xbf16, #tpu.memory_space<vmem>>, vector<240x128xbf16>
    tpu.vector_store %arg11[%c0_13, %c256], %20 {strides = array<i32>} : memref<256x384xbf16, #tpu.memory_space<vmem>>, vector<240x128xbf16>,
    %22 = arith.extui %1 : i1 to i32
    %c0_i32_14 = arith.constant 0 : i32
    %23 = arith.cmpi ne, %22, %c0_i32_14 : i32
    scf.if %23 {
      %c1_i32_45 = arith.constant 1 : i32
      %76 = arith.subi %0, %c1_i32_45 : i32
      %c0_i32_46 = arith.constant 0 : i32
      %c0_i32_47 = arith.constant 0 : i32
      %c0_i32_48 = arith.constant 0 : i32
      %77 = tpu.memref_slice %arg3[%arg0, %76, %c0_i32_47, %c0_i32_48] : memref<2x16x16x128xbf16, #tpu.memory_space<any>> -> memref<1x1x16x128xbf16, #tpu.memory_space<any>>
      %78 = tpu.memref_squeeze %77 : memref<1x1x16x128xbf16, #tpu.memory_space<any>> -> memref<1x16x128xbf16, #tpu.memory_space<any>>
      %c0_i32_49 = arith.constant 0 : i32
      %c0_i32_50 = arith.constant 0 : i32
      %c0_i32_51 = arith.constant 0 : i32
      %79 = tpu.memref_slice %arg12[%c0_i32_49, %c0_i32_50, %c0_i32_51] : memref<2x16x128xbf16, #tpu.memory_space<vmem>> -> memref<1x16x128xbf16, #tpu.memory_space<vmem>>
      %80 = tpu.memref_slice %arg13[%c0_i32_46] : memref<2x!tpu.dma_semaphore, #tpu.memory_space<semaphore_mem>> -> memref<1x!tpu.dma_semaphore, #tpu.memory_space<semaphore_mem>>
      %81 = tpu.memref_squeeze %80 : memref<1x!tpu.dma_semaphore, #tpu.memory_space<semaphore_mem>> -> memref<!tpu.dma_semaphore, #tpu.memory_space<semaphore_mem>>
      tpu.wait_dma2 semaphore(%81 : memref<!tpu.dma_semaphore, #tpu.memory_space<semaphore_mem>>) src(%78 : memref<1x16x128xbf16, #tpu.memory_space<any>>) dst(%79 : memref<1x16x128xbf16, #tpu.memory_space<vmem>>)
      %c0_52 = arith.constant 0 : index
      %c0_53 = arith.constant 0 : index
      %c0_54 = arith.constant 0 : index
      %82 = vector.load %arg12[%c0_52, %c0_53, %c0_54] : memref<2x16x128xbf16, #tpu.memory_space<vmem>>, vector<1x16x128xbf16>
      %83 = vector.shape_cast %82 : vector<1x16x128xbf16> to vector<16x128xbf16>
      %cst_55 = arith.constant dense<0.000000e+00> : vector<16x128xf32>
      %84 = tpu.matmul %83, %7, %cst_55 {dimension_numbers = #tpu.dot_dimension_numbers<[1], [0], [0], [1], [0, 0, 1, 1], [], []>} : vector<16x128xbf16>, vector<128x128xbf16>, vector<16x128xf32> -> vector<16x128xf32>
      %85 = vector.broadcast %8 : vector<1x128xf32> to vector<16x128xf32>
      %86 = arith.addf %84, %85 : vector<16x128xf32>
      %cst_56 = arith.constant 0.000000e+00 : f32
      %87 = vector.broadcast %cst_56 : f32 to vector<16x128xf32>
      %88 = arith.maximumf %86, %87 : vector<16x128xf32>
      %89 = arith.truncf %88 : vector<16x128xf32> to vector<16x128xbf16>
      %c0_57 = arith.constant 0 : index
      %c0_58 = arith.constant 0 : index
      %90 = vector.load %arg11[%c0_57, %c0_58] : memref<256x384xbf16, #tpu.memory_space<vmem>>, vector<16x128xbf16>
      tpu.vector_store %arg11[%c0_57, %c0_58], %89 {strides = array<i32>} : memref<256x384xbf16, #tpu.memory_space<vmem>>, vector<16x128xbf16>,
    } else {
    }
    %c0_i32_15 = arith.constant 0 : i32
    %24 = arith.cmpi eq, %arg1, %c0_i32_15 : i32
    %25 = arith.extui %24 : i1 to i32
    %c0_i32_16 = arith.constant 0 : i32
    %26 = arith.cmpi ne, %25, %c0_i32_16 : i32
    scf.if %26 {
      %cst_45 = arith.constant 0.000000e+00 : bf16
      %76 = vector.broadcast %cst_45 : bf16 to vector<16x128xbf16>
      %c0_46 = arith.constant 0 : index
      %c0_47 = arith.constant 0 : index
      %77 = vector.load %arg11[%c0_46, %c0_47] : memref<256x384xbf16, #tpu.memory_space<vmem>>, vector<16x128xbf16>
      tpu.vector_store %arg11[%c0_46, %c0_47], %76 {strides = array<i32>} : memref<256x384xbf16, #tpu.memory_space<vmem>>, vector<16x128xbf16>,
    } else {
    }
    %27 = arith.extui %2 : i1 to i32
    %c0_i32_17 = arith.constant 0 : i32
    %28 = arith.cmpi ne, %27, %c0_i32_17 : i32
    scf.if %28 {
      %c16_i32_45 = arith.constant 16 : i32
      %76 = arith.addi %0, %c16_i32_45 : i32
      %c1_i32_46 = arith.constant 1 : i32
      %c0_i32_47 = arith.constant 0 : i32
      %c0_i32_48 = arith.constant 0 : i32
      %77 = tpu.memref_slice %arg3[%arg0, %76, %c0_i32_47, %c0_i32_48] : memref<2x16x16x128xbf16, #tpu.memory_space<any>> -> memref<1x1x16x128xbf16, #tpu.memory_space<any>>
      %78 = tpu.memref_squeeze %77 : memref<1x1x16x128xbf16, #tpu.memory_space<any>> -> memref<1x16x128xbf16, #tpu.memory_space<any>>
      %c1_i32_49 = arith.constant 1 : i32
      %c0_i32_50 = arith.constant 0 : i32
      %c0_i32_51 = arith.constant 0 : i32
      %79 = tpu.memref_slice %arg12[%c1_i32_49, %c0_i32_50, %c0_i32_51] : memref<2x16x128xbf16, #tpu.memory_space<vmem>> -> memref<1x16x128xbf16, #tpu.memory_space<vmem>>
      %80 = tpu.memref_slice %arg13[%c1_i32_46] : memref<2x!tpu.dma_semaphore, #tpu.memory_space<semaphore_mem>> -> memref<1x!tpu.dma_semaphore, #tpu.memory_space<semaphore_mem>>
      %81 = tpu.memref_squeeze %80 : memref<1x!tpu.dma_semaphore, #tpu.memory_space<semaphore_mem>> -> memref<!tpu.dma_semaphore, #tpu.memory_space<semaphore_mem>>
      tpu.wait_dma2 semaphore(%81 : memref<!tpu.dma_semaphore, #tpu.memory_space<semaphore_mem>>) src(%78 : memref<1x16x128xbf16, #tpu.memory_space<any>>) dst(%79 : memref<1x16x128xbf16, #tpu.memory_space<vmem>>)
      %c1 = arith.constant 1 : index
      %c0_52 = arith.constant 0 : index
      %c0_53 = arith.constant 0 : index
      %82 = vector.load %arg12[%c1, %c0_52, %c0_53] : memref<2x16x128xbf16, #tpu.memory_space<vmem>>, vector<1x16x128xbf16>
      %83 = vector.shape_cast %82 : vector<1x16x128xbf16> to vector<16x128xbf16>
      %cst_54 = arith.constant dense<0.000000e+00> : vector<16x128xf32>
      %84 = tpu.matmul %83, %7, %cst_54 {dimension_numbers = #tpu.dot_dimension_numbers<[1], [0], [0], [1], [0, 0, 1, 1], [], []>} : vector<16x128xbf16>, vector<128x128xbf16>, vector<16x128xf32> -> vector<16x128xf32>
      %85 = vector.broadcast %8 : vector<1x128xf32> to vector<16x128xf32>
      %86 = arith.addf %84, %85 : vector<16x128xf32>
      %cst_55 = arith.constant 0.000000e+00 : f32
      %87 = vector.broadcast %cst_55 : f32 to vector<16x128xf32>
      %88 = arith.maximumf %86, %87 : vector<16x128xf32>
      %89 = arith.truncf %88 : vector<16x128xf32> to vector<16x128xbf16>
      %c240 = arith.constant 240 : index
      %c256_56 = arith.constant 256 : index
      %90 = vector.load %arg11[%c240, %c256_56] : memref<256x384xbf16, #tpu.memory_space<vmem>>, vector<16x128xbf16>
      tpu.vector_store %arg11[%c240, %c256_56], %89 {strides = array<i32>} : memref<256x384xbf16, #tpu.memory_space<vmem>>, vector<16x128xbf16>,
    } else {
    }
    %c0_i32_18 = arith.constant 0 : i32
    %29 = arith.cmpi eq, %arg1, %c0_i32_18 : i32
    %30 = arith.extui %29 : i1 to i32
    %c0_i32_19 = arith.constant 0 : i32
    %31 = arith.cmpi ne, %30, %c0_i32_19 : i32
    scf.if %31 {
      %cst_45 = arith.constant 0.000000e+00 : bf16
      %76 = vector.broadcast %cst_45 : bf16 to vector<16x128xbf16>
      %c240 = arith.constant 240 : index
      %c256_46 = arith.constant 256 : index
      %77 = vector.load %arg11[%c240, %c256_46] : memref<256x384xbf16, #tpu.memory_space<vmem>>, vector<16x128xbf16>
      tpu.vector_store %arg11[%c240, %c256_46], %76 {strides = array<i32>} : memref<256x384xbf16, #tpu.memory_space<vmem>>, vector<16x128xbf16>,
    } else {
    }
    %c0_20 = arith.constant 0 : index
    %c0_21 = arith.constant 0 : index
    %32 = vector.load %arg11[%c0_20, %c0_21] : memref<256x384xbf16, #tpu.memory_space<vmem>>, vector<256x384xbf16>
    %c0_22 = arith.constant 0 : index
    %c0_23 = arith.constant 0 : index
    %33 = vector.load %arg5[%c0_22, %c0_23] : memref<384x384xbf16, #tpu.memory_space<vmem>>, vector<384x384xbf16>
    %cst_24 = arith.constant dense<0.000000e+00> : vector<256x384xf32>
    %34 = tpu.matmul %32, %33, %cst_24 {dimension_numbers = #tpu.dot_dimension_numbers<[1], [0], [0], [1], [0, 0, 1, 1], [], []>} : vector<256x384xbf16>, vector<384x384xbf16>, vector<256x384xf32> -> vector<256x384xf32>
    %35 = vector.extract_strided_slice %34 {offsets = [0, 0], sizes = [256, 128], strides = [1, 1]} : vector<256x384xf32> to vector<256x128xf32>
    %36 = vector.extract_strided_slice %34 {offsets = [0, 128], sizes = [256, 128], strides = [1, 1]} : vector<256x384xf32> to vector<256x128xf32>
    %37 = vector.extract_strided_slice %34 {offsets = [0, 256], sizes = [256, 128], strides = [1, 1]} : vector<256x384xf32> to vector<256x128xf32>
    %38 = tpu.iota {dimensions = array<i32: 1>} : vector<16x16x1xi32>
    %39 = vector.shape_cast %38 : vector<16x16x1xi32> to vector<256x1xi32>
    %c255_i32 = arith.constant 255 : i32
    %40 = tpu.dynamic_rotate %37 by %c255_i32 dim 0 : vector<256x128xf32>, i32 -> vector<256x128xf32>
    %c1_i32 = arith.constant 1 : i32
    %41 = tpu.dynamic_rotate %35 by %c1_i32 dim 0 : vector<256x128xf32>, i32 -> vector<256x128xf32>
    %c15_i32 = arith.constant 15 : i32
    %42 = vector.broadcast %c15_i32 : i32 to vector<256x1xi32>
    %43 = arith.cmpi slt, %39, %42 : vector<256x1xi32>
    %cst_25 = arith.constant 0.000000e+00 : f32
    %44 = vector.shape_cast %43 : vector<256x1xi1> to vector<256x1xi1>
    %45 = vector.broadcast %44 : vector<256x1xi1> to vector<256x128xi1>
    %46 = vector.broadcast %cst_25 : f32 to vector<256x128xf32>
    %47 = arith.select %45, %40, %46 : vector<256x128xi1>, vector<256x128xf32>
    %48 = arith.addf %36, %47 : vector<256x128xf32>
    %c0_i32_26 = arith.constant 0 : i32
    %49 = vector.broadcast %c0_i32_26 : i32 to vector<256x1xi32>
    %50 = arith.cmpi sgt, %39, %49 : vector<256x1xi32>
    %cst_27 = arith.constant 0.000000e+00 : f32
    %51 = vector.shape_cast %50 : vector<256x1xi1> to vector<256x1xi1>
    %52 = vector.broadcast %51 : vector<256x1xi1> to vector<256x128xi1>
    %53 = vector.broadcast %cst_27 : f32 to vector<256x128xf32>
    %54 = arith.select %52, %41, %53 : vector<256x128xi1>, vector<256x128xf32>
    %55 = arith.addf %48, %54 : vector<256x128xf32>
    %c0_28 = arith.constant 0 : index
    %c0_29 = arith.constant 0 : index
    %56 = vector.load %arg8[%c0_28, %c0_29] : memref<1x128xf32, #tpu.memory_space<vmem>>, vector<1x128xf32>
    %57 = vector.broadcast %56 : vector<1x128xf32> to vector<256x128xf32>
    %58 = arith.addf %55, %57 : vector<256x128xf32>
    %cst_30 = arith.constant 0.000000e+00 : f32
    %59 = vector.broadcast %cst_30 : f32 to vector<256x128xf32>
    %60 = arith.maximumf %58, %59 : vector<256x128xf32>
    %61 = arith.truncf %60 : vector<256x128xf32> to vector<256x128xbf16>
    %c0_31 = arith.constant 0 : index
    %c0_32 = arith.constant 0 : index
    %62 = vector.load %arg6[%c0_31, %c0_32] : memref<128x128xbf16, #tpu.memory_space<vmem>>, vector<128x128xbf16>
    %cst_33 = arith.constant dense<0.000000e+00> : vector<256x128xf32>
    %63 = tpu.matmul %61, %62, %cst_33 {dimension_numbers = #tpu.dot_dimension_numbers<[1], [0], [0], [1], [0, 0, 1, 1], [], []>} : vector<256x128xbf16>, vector<128x128xbf16>, vector<256x128xf32> -> vector<256x128xf32>
    %c0_34 = arith.constant 0 : index
    %c0_35 = arith.constant 0 : index
    %c0_36 = arith.constant 0 : index
    %c0_37 = arith.constant 0 : index
    %64 = vector.load %arg2[%c0_34, %c0_35, %c0_36, %c0_37] : memref<1x16x16x128xbf16, #tpu.memory_space<vmem>>, vector<1x16x16x128xbf16>
    %65 = vector.shape_cast %64 : vector<1x16x16x128xbf16> to vector<256x128xbf16>
    %66 = arith.extf %65 : vector<256x128xbf16> to vector<256x128xf32>
    %c0_38 = arith.constant 0 : index
    %c0_39 = arith.constant 0 : index
    %67 = vector.load %arg9[%c0_38, %c0_39] : memref<1x128xf32, #tpu.memory_space<vmem>>, vector<1x128xf32>
    %68 = vector.broadcast %67 : vector<1x128xf32> to vector<256x128xf32>
    %69 = arith.addf %63, %68 : vector<256x128xf32>
    %70 = arith.addf %69, %66 : vector<256x128xf32>
    %cst_40 = arith.constant 0.000000e+00 : f32
    %71 = vector.broadcast %cst_40 : f32 to vector<256x128xf32>
    %72 = arith.maximumf %70, %71 : vector<256x128xf32>
    %73 = vector.shape_cast %72 : vector<256x128xf32> to vector<1x16x16x128xf32>
    %74 = arith.truncf %73 : vector<1x16x16x128xf32> to vector<1x16x16x128xbf16>
    %c0_41 = arith.constant 0 : index
    %c0_42 = arith.constant 0 : index
    %c0_43 = arith.constant 0 : index
    %c0_44 = arith.constant 0 : index
    %75 = vector.load %arg10[%c0_41, %c0_42, %c0_43, %c0_44] : memref<1x16x16x128xbf16, #tpu.memory_space<vmem>>, vector<1x16x16x128xbf16>
    tpu.vector_store %arg10[%c0_41, %c0_42, %c0_43, %c0_44], %74 {strides = array<i32>} : memref<1x16x16x128xbf16, #tpu.memory_space<vmem>>, vector<1x16x16x128xbf16>,
    return
  }
  func.func @transform_0(%arg0: i32, %arg1: i32) -> (i32, i32, i32, i32) {
    %c0_i32 = arith.constant 0 : i32
    %c0_i32_0 = arith.constant 0 : i32
    %c0_i32_1 = arith.constant 0 : i32
    return %arg0, %arg1, %c0_i32, %c0_i32_0 : i32, i32, i32, i32
  }
  func.func @transform_2(%arg0: i32, %arg1: i32) -> (i32, i32) {
    %c0_i32 = arith.constant 0 : i32
    %c0_i32_0 = arith.constant 0 : i32
    %c0_i32_1 = arith.constant 0 : i32
    return %c0_i32, %c0_i32_0 : i32, i32
  }
  func.func @transform_3(%arg0: i32, %arg1: i32) -> (i32, i32) {
    %c0_i32 = arith.constant 0 : i32
    %c0_i32_0 = arith.constant 0 : i32
    %c0_i32_1 = arith.constant 0 : i32
    return %c0_i32, %c0_i32_0 : i32, i32
  }
  func.func @transform_4(%arg0: i32, %arg1: i32) -> (i32, i32) {
    %c0_i32 = arith.constant 0 : i32
    %c0_i32_0 = arith.constant 0 : i32
    %c0_i32_1 = arith.constant 0 : i32
    return %c0_i32, %c0_i32_0 : i32, i32
  }
  func.func @transform_5(%arg0: i32, %arg1: i32) -> (i32, i32) {
    %c0_i32 = arith.constant 0 : i32
    %c0_i32_0 = arith.constant 0 : i32
    %c0_i32_1 = arith.constant 0 : i32
    return %c0_i32, %c0_i32_0 : i32, i32
  }
  func.func @transform_6(%arg0: i32, %arg1: i32) -> (i32, i32) {
    %c0_i32 = arith.constant 0 : i32
    %c0_i32_0 = arith.constant 0 : i32
    %c0_i32_1 = arith.constant 0 : i32
    return %c0_i32, %c0_i32_0 : i32, i32
  }
  func.func @transform_7(%arg0: i32, %arg1: i32) -> (i32, i32) {
    %c0_i32 = arith.constant 0 : i32
    %c0_i32_0 = arith.constant 0 : i32
    %c0_i32_1 = arith.constant 0 : i32
    return %c0_i32, %c0_i32_0 : i32, i32
  }
  func.func @transform_8(%arg0: i32, %arg1: i32) -> (i32, i32, i32, i32) {
    %c0_i32 = arith.constant 0 : i32
    %c0_i32_0 = arith.constant 0 : i32
    %c0_i32_1 = arith.constant 0 : i32
    return %arg0, %arg1, %c0_i32, %c0_i32_0 : i32, i32, i32, i32
  }
}

</mosaic_0001>

<llo_original>
// kernel: tpu_custom_call.1
$region0: #{tpu_custom_call.1}
  #allocation0 [shape = 'u32[]', space=smem, size = 0x4, offset = 0x4, fixed_abs, tag = 'smem constant byte address 0x4 - core index']
  #allocation1 [shape = 'u32[144,128]{1,0:T(1,128)}', space=vmem, size = 0x12000, scoped, tag = 'internal scratch']
  #allocation2 [shape = 'bf16[256,384]{1,0:T(16,128)(2,1)}', space=vmem, size = 0x30000, scoped, tag = 'scratch operand']
  #allocation3 [shape = 'bf16[2,16,128]{2,1,0:T(16,128)(2,1)}', space=vmem, size = 0x2000, scoped, tag = 'scratch operand']
  #allocation4 [shape = 's32[2]{0}', space=sflag, size = 0x8, scoped, tag = 'scratch operand']
  #allocation14 [shape = 's32[]', space=sflag, size = 0x4, offset = 0, fixed_abs, tag = 'sflag constant byte address 0x0 - dummy sync flag']
  #allocation15 [shape = 's32[]', space=sflag, size = 0x4, offset = 0, fixed_abs, tag = 'sflag constant byte address 0x0 - dummy sync flag']
  #allocation16 [shape = 'u32[]', space=smem, size = 0x4, offset = 0x44, fixed_abs, tag = 'smem constant byte address 0x44 - assertion arg 0']
  #allocation17 [shape = 'u32[]', space=smem, size = 0x4, offset = 0x48, fixed_abs, tag = 'smem constant byte address 0x48 - assertion arg 1']
  #allocation18 [shape = 's32[]', space=sflag, size = 0x4, offset = 0, fixed_abs, tag = 'sflag constant byte address 0x0 - dummy sync flag']
  #allocation19 [shape = 's32[]', space=sflag, size = 0x4, offset = 0, fixed_abs, tag = 'sflag constant byte address 0x0 - dummy sync flag']
  %s0 = inlined_call_operand.hbm [shape: bf16[2,16,16,128], index: 0, kind: input, shape index: {}]
  %s1 = inlined_call_operand.hbm [shape: bf16[2,16,16,128], index: 1, kind: input, shape index: {}]
  %s2 = inlined_call_operand.hbm [shape: bf16[128,128], index: 2, kind: input, shape index: {}]
  %s3 = inlined_call_operand.hbm [shape: bf16[384,384], index: 3, kind: input, shape index: {}]
  %s4 = inlined_call_operand.hbm [shape: bf16[128,128], index: 4, kind: input, shape index: {}]
  %s5 = inlined_call_operand.vmem [shape: f32[1,128], index: 5, kind: input, shape index: {}]
  %s6 = inlined_call_operand.vmem [shape: f32[1,128], index: 6, kind: input, shape index: {}]
  %s7 = inlined_call_operand.vmem [shape: f32[1,128], index: 7, kind: input, shape index: {}]
  %s8 = inlined_call_operand.hbm [shape: bf16[2,16,16,128], index: 8, kind: output, shape index: {}]
  %s9 = sld [smem:[#allocation0]]
  $region109: #{tpu_custom_call.1} parent=0
    _
  %s11 = ssub.s32 1, %s9
  %s12 = scalar_select 0, %s11, %s9
  $region1: #{tpu_custom_call.1} parent=0
    #allocation5 [shape = 'u8[131072]{0}', space=vmem, size = 0x20000, scoped, tag = 'input window, operand 0']
    #allocation6 [shape = 's32[2]{0}', space=sflag, size = 0x8, scoped, tag = 'scoped memory for tpu_custom_call.1']
    #allocation7 [shape = 's32[2]{0}', space=sflag, size = 0x8, scoped, tag = 'scoped memory for tpu_custom_call.1']
    #allocation8 [shape = 'u8[32768]{0}', space=vmem, size = 0x8000, scoped, tag = 'input window, operand 2, single buffered']
    #allocation9 [shape = 's32[1]{0}', space=sflag, size = 0x4, scoped, tag = 'scoped memory for tpu_custom_call.1']
    #allocation10 [shape = 'u8[294912]{0}', space=vmem, size = 0x48000, scoped, tag = 'input window, operand 3, single buffered']
    #allocation11 [shape = 'u8[32768]{0}', space=vmem, size = 0x8000, scoped, tag = 'input window, operand 4, single buffered']
    #allocation12 [shape = 's32[1]{0}', space=sflag, size = 0x4, scoped, tag = 'scoped memory for tpu_custom_call.1']
    #allocation13 [shape = 'u8[131072]{0}', space=vmem, size = 0x20000, scoped, tag = 'output window, operand 0']
    %13 = vsyncpa [#allocation6], 0
    %s14 = scalar_lea.sflag [#allocation6], 1
    %15 = vsyncpa %s14, 0
    %16 = vsyncpa [#allocation9], 0
    %17 = vsyncpa [#allocation12], 0
    %18 = vsyncpa [#allocation7], 0
    %s19 = scalar_lea.sflag [#allocation7], 1
    %20 = vsyncpa %s19, 0
    loop: start=0, step=1, limit=4
    $region2: #{tpu_custom_call.1} parent=1 // loop_pre_header
      _
    $region3: #{tpu_custom_call.1} parent=1 // loop_header
      %s22 = sphi 0, %s26
      %p23 = scmp.ge.s32.totalorder %s22, 4
      %s29 = sphi 0, %s41
      %s30 = sphi 0, %s37
      %s31 = sphi 0, %s29
      %s32 = sphi 0, %s30
      %s33 = sphi 0, %s31
      %s34 = sphi 0, %s32
      %s46 = sphi 0, %s48
      %s49 = sphi 0, %s46
      %s50 = sphi 0, %s49
      %s66 = sphi 0, %s50
      %s70 = sphi 0, %s70
      %s72 = sphi 0, %s70
      %s73 = sphi 0, %s72
      %s87 = sphi 0, %s73
      %s91 = sphi 0, %s91
      %s93 = sphi 0, %s91
      %s94 = sphi 0, %s93
      %s108 = sphi 0, %s94
      %s112 = sphi 0, %s112
      %s114 = sphi 0, %s112
      %s115 = sphi 0, %s114
      %s129 = sphi 0, %s115
      %s133 = sphi 0, %s133
      %s135 = sphi 0, %s133
      %s136 = sphi 0, %s135
      %s150 = sphi 0, %s136
      %s154 = sphi 0, %s154
      %s156 = sphi 0, %s154
      %s157 = sphi 0, %s156
      %s171 = sphi 0, %s157
      %s175 = sphi 0, %s175
      %s177 = sphi 0, %s175
      %s178 = sphi 0, %s177
      %s192 = sphi 0, %s178
      %s200 = sphi 0, %s202
      %s203 = sphi 0, %s200
      %s204 = sphi 0, %s203
      %s220 = sphi 0, %s204
    $region4: #{tpu_custom_call.1} parent=1 // loop_header_branch
      %25 = sbr.rel (%p23) target = $region8
    $region5: #{tpu_custom_call.1} parent=1 // loop_body
      %s27 = ssub.s32 %s22, 1
      %s28 = ssub.s32 %s22, 2
      %s35 = sadd.s32 1, %s30
      %p36 = scmp.ge.s32.totalorder %s35, 1
      %s37 = scalar_select %p36, 0, %s35
      %s38 = sadd.s32 1, %s29
      %s39 = scalar_select %p36, %s38, %s29
      %p40 = scmp.ge.s32.totalorder %s39, 2
      %s41 = scalar_select %p40, 0, %s39
      %s42 = ssub.s32 %s29, %s41
      %s43 = ssub.s32 %s30, %s37
      %s44 = sor.u32 %s42, %s43
      %p45 = scmp.eq.s32.totalorder %s44, 0
      %s47 = sadd.s32 %s46, 1
      %s48 = scalar_select %p45, %s46, %s47
      %p51 = pneg %p45
      %p52 = scmp.eq.s32.totalorder %s22, 1
      %p53 = por %p51, %p52
      %p54 = scmp.ne.s32.totalorder %s46, %s49
      %p55 = scmp.eq.s32.totalorder %s22, 0
      %p56 = por %p54, %p55
      %p57 = scmp.ne.s32.totalorder %s46, %s49
      %p58 = scmp.eq.s32.totalorder %s27, 1
      %p59 = por %p57, %p58
      %p60 = scmp.ne.s32.totalorder %s49, %s50
      %p61 = scmp.eq.s32.totalorder %s27, 0
      %p62 = por %p60, %p61
      %p63 = scmp.ne.s32.totalorder %s49, %s50
      %p64 = scmp.eq.s32.totalorder %s28, 1
      %p65 = por %p63, %p64
      %p67 = scmp.ne.s32.totalorder %s50, %s66
      %p68 = scmp.eq.s32.totalorder %s28, 0
      %p69 = por %p67, %p68
      %s71 = sadd.s32 %s70, 1
      %p74 = scmp.eq.s32.totalorder %s22, 1
      %p75 = scmp.ne.s32.totalorder %s70, %s72
      %p76 = scmp.eq.s32.totalorder %s22, 0
      %p77 = por %p75, %p76
      %p78 = scmp.ne.s32.totalorder %s70, %s72
      %p79 = scmp.eq.s32.totalorder %s27, 1
      %p80 = por %p78, %p79
      %p81 = scmp.ne.s32.totalorder %s72, %s73
      %p82 = scmp.eq.s32.totalorder %s27, 0
      %p83 = por %p81, %p82
      %p84 = scmp.ne.s32.totalorder %s72, %s73
      %p85 = scmp.eq.s32.totalorder %s28, 1
      %p86 = por %p84, %p85
      %p88 = scmp.ne.s32.totalorder %s73, %s87
      %p89 = scmp.eq.s32.totalorder %s28, 0
      %p90 = por %p88, %p89
      %s92 = sadd.s32 %s91, 1
      %p95 = scmp.eq.s32.totalorder %s22, 1
      %p96 = scmp.ne.s32.totalorder %s91, %s93
      %p97 = scmp.eq.s32.totalorder %s22, 0
      %p98 = por %p96, %p97
      %p99 = scmp.ne.s32.totalorder %s91, %s93
      %p100 = scmp.eq.s32.totalorder %s27, 1
      %p101 = por %p99, %p100
      %p102 = scmp.ne.s32.totalorder %s93, %s94
      %p103 = scmp.eq.s32.totalorder %s27, 0
      %p104 = por %p102, %p103
      %p105 = scmp.ne.s32.totalorder %s93, %s94
      %p106 = scmp.eq.s32.totalorder %s28, 1
      %p107 = por %p105, %p106
      %p109 = scmp.ne.s32.totalorder %s94, %s108
      %p110 = scmp.eq.s32.totalorder %s28, 0
      %p111 = por %p109, %p110
      %s113 = sadd.s32 %s112, 1
      %p116 = scmp.eq.s32.totalorder %s22, 1
      %p117 = scmp.ne.s32.totalorder %s112, %s114
      %p118 = scmp.eq.s32.totalorder %s22, 0
      %p119 = por %p117, %p118
      %p120 = scmp.ne.s32.totalorder %s112, %s114
      %p121 = scmp.eq.s32.totalorder %s27, 1
      %p122 = por %p120, %p121
      %p123 = scmp.ne.s32.totalorder %s114, %s115
      %p124 = scmp.eq.s32.totalorder %s27, 0
      %p125 = por %p123, %p124
      %p126 = scmp.ne.s32.totalorder %s114, %s115
      %p127 = scmp.eq.s32.totalorder %s28, 1
      %p128 = por %p126, %p127
      %p130 = scmp.ne.s32.totalorder %s115, %s129
      %p131 = scmp.eq.s32.totalorder %s28, 0
      %p132 = por %p130, %p131
      %s134 = sadd.s32 %s133, 1
      %p137 = scmp.eq.s32.totalorder %s22, 1
      %p138 = scmp.ne.s32.totalorder %s133, %s135
      %p139 = scmp.eq.s32.totalorder %s22, 0
      %p140 = por %p138, %p139
      %p141 = scmp.ne.s32.totalorder %s133, %s135
      %p142 = scmp.eq.s32.totalorder %s27, 1
      %p143 = por %p141, %p142
      %p144 = scmp.ne.s32.totalorder %s135, %s136
      %p145 = scmp.eq.s32.totalorder %s27, 0
      %p146 = por %p144, %p145
      %p147 = scmp.ne.s32.totalorder %s135, %s136
      %p148 = scmp.eq.s32.totalorder %s28, 1
      %p149 = por %p147, %p148
      %p151 = scmp.ne.s32.totalorder %s136, %s150
      %p152 = scmp.eq.s32.totalorder %s28, 0
      %p153 = por %p151, %p152
      %s155 = sadd.s32 %s154, 1
      %p158 = scmp.eq.s32.totalorder %s22, 1
      %p159 = scmp.ne.s32.totalorder %s154, %s156
      %p160 = scmp.eq.s32.totalorder %s22, 0
      %p161 = por %p159, %p160
      %p162 = scmp.ne.s32.totalorder %s154, %s156
      %p163 = scmp.eq.s32.totalorder %s27, 1
      %p164 = por %p162, %p163
      %p165 = scmp.ne.s32.totalorder %s156, %s157
      %p166 = scmp.eq.s32.totalorder %s27, 0
      %p167 = por %p165, %p166
      %p168 = scmp.ne.s32.totalorder %s156, %s157
      %p169 = scmp.eq.s32.totalorder %s28, 1
      %p170 = por %p168, %p169
      %p172 = scmp.ne.s32.totalorder %s157, %s171
      %p173 = scmp.eq.s32.totalorder %s28, 0
      %p174 = por %p172, %p173
      %s176 = sadd.s32 %s175, 1
      %p179 = scmp.eq.s32.totalorder %s22, 1
      %p180 = scmp.ne.s32.totalorder %s175, %s177
      %p181 = scmp.eq.s32.totalorder %s22, 0
      %p182 = por %p180, %p181
      %p183 = scmp.ne.s32.totalorder %s175, %s177
      %p184 = scmp.eq.s32.totalorder %s27, 1
      %p185 = por %p183, %p184
      %p186 = scmp.ne.s32.totalorder %s177, %s178
      %p187 = scmp.eq.s32.totalorder %s27, 0
      %p188 = por %p186, %p187
      %p189 = scmp.ne.s32.totalorder %s177, %s178
      %p190 = scmp.eq.s32.totalorder %s28, 1
      %p191 = por %p189, %p190
      %p193 = scmp.ne.s32.totalorder %s178, %s192
      %p194 = scmp.eq.s32.totalorder %s28, 0
      %p195 = por %p193, %p194
      %s196 = ssub.s32 %s29, %s41
      %s197 = ssub.s32 %s30, %s37
      %s198 = sor.u32 %s196, %s197
      %p199 = scmp.eq.s32.totalorder %s198, 0
      %s201 = sadd.s32 %s200, 1
      %s202 = scalar_select %p199, %s200, %s201
      %p205 = pneg %p199
      %p206 = scmp.eq.s32.totalorder %s22, 1
      %p207 = por %p205, %p206
      %p208 = scmp.ne.s32.totalorder %s200, %s203
      %p209 = scmp.eq.s32.totalorder %s22, 0
      %p210 = por %p208, %p209
      %p211 = scmp.ne.s32.totalorder %s200, %s203
      %p212 = scmp.eq.s32.totalorder %s27, 1
      %p213 = por %p211, %p212
      %p214 = scmp.ne.s32.totalorder %s203, %s204
      %p215 = scmp.eq.s32.totalorder %s27, 0
      %p216 = por %p214, %p215
      %p217 = scmp.ne.s32.totalorder %s203, %s204
      %p218 = scmp.eq.s32.totalorder %s28, 1
      %p219 = por %p217, %p218
      %p221 = scmp.ne.s32.totalorder %s204, %s220
      %p222 = scmp.eq.s32.totalorder %s28, 0
      %p223 = por %p221, %p222
      %p224 = scmp.le.s32.totalorder 1, %s22
      %p225 = scmp.lt.s32.totalorder %s22, 3
      %p226 = pnand %p224, %p225
      %p227 = pneg %p226
      // Predicated region
      $region9: #{tpu_custom_call.1} parent=5 // pred_check
        _
      $region10: #{tpu_custom_call.1} parent=5 // pred_check_branch
        %229 = sbr.rel (%p226) target = $region12
      $region11: #{tpu_custom_call.1} parent=5 // pred_region
        %s230 = ssub.s32 %s22, 1
        // Predicated region
        $region13: #{tpu_custom_call.1} parent=11 // pred_check
          %p231 = pneg %p83
        $region14: #{tpu_custom_call.1} parent=11 // pred_check_branch
          %233 = sbr.rel (%p231) target = $region16
        $region15: #{tpu_custom_call.1} parent=11 // pred_region
          %s235 = ssub.s32 1024, 1024
          %236 = vsyncadd [#allocation9], %s235
          %s237 = sshll.u32 [#allocation8], 4
          %s238 = int_to_ptr.vmem [resolvable:$true] %s237
          %243 = dma.hbm_to_vmem [thread:$0]  %s2, 1024, %s238, [#allocation9], 64, 64, 4
        $region16: #{tpu_custom_call.1} parent=11 // pred_fallthru
          _
        // Predicated region
        $region17: #{tpu_custom_call.1} parent=11 // pred_check
          %p244 = pneg %p104
        $region18: #{tpu_custom_call.1} parent=11 // pred_check_branch
          %246 = sbr.rel (%p244) target = $region20
        $region19: #{tpu_custom_call.1} parent=11 // pred_region
          %s248 = ssub.s32 9216, 9216
          %249 = vsyncadd [#allocation9], %s248
          %s250 = sshll.u32 [#allocation10], 4
          %s251 = int_to_ptr.vmem [resolvable:$true] %s250
          %256 = dma.hbm_to_vmem [thread:$0]  %s3, 9216, %s251, [#allocation9], 192, 192, 12
        $region20: #{tpu_custom_call.1} parent=11 // pred_fallthru
          _
        // Predicated region
        $region21: #{tpu_custom_call.1} parent=11 // pred_check
          %p257 = pneg %p125
        $region22: #{tpu_custom_call.1} parent=11 // pred_check_branch
          %259 = sbr.rel (%p257) target = $region24
        $region23: #{tpu_custom_call.1} parent=11 // pred_region
          %s261 = ssub.s32 1024, 1024
          %262 = vsyncadd [#allocation12], %s261
          %s263 = sshll.u32 [#allocation11], 4
          %s264 = int_to_ptr.vmem [resolvable:$true] %s263
          %269 = dma.hbm_to_vmem [thread:$0]  %s4, 1024, %s264, [#allocation12], 64, 64, 4
        $region24: #{tpu_custom_call.1} parent=11 // pred_fallthru
          _
        // Predicated region
        $region25: #{tpu_custom_call.1} parent=11 // pred_check
          %p270 = pneg %p146
        $region26: #{tpu_custom_call.1} parent=11 // pred_check_branch
          %272 = sbr.rel (%p270) target = $region28
        $region27: #{tpu_custom_call.1} parent=11 // pred_region
          _
        $region28: #{tpu_custom_call.1} parent=11 // pred_fallthru
          _
        // Predicated region
        $region29: #{tpu_custom_call.1} parent=11 // pred_check
          %p273 = pneg %p167
        $region30: #{tpu_custom_call.1} parent=11 // pred_check_branch
          %275 = sbr.rel (%p273) target = $region32
        $region31: #{tpu_custom_call.1} parent=11 // pred_region
          _
        $region32: #{tpu_custom_call.1} parent=11 // pred_fallthru
          _
        // Predicated region
        $region33: #{tpu_custom_call.1} parent=11 // pred_check
          %p276 = pneg %p188
        $region34: #{tpu_custom_call.1} parent=11 // pred_check_branch
          %278 = sbr.rel (%p276) target = $region36
        $region35: #{tpu_custom_call.1} parent=11 // pred_region
          _
        $region36: #{tpu_custom_call.1} parent=11 // pred_fallthru
          _
      $region12: #{tpu_custom_call.1} parent=5 // pred_fallthru
        _
      %p279 = scmp.lt.s32.totalorder %s22, 2
      // Predicated region
      $region37: #{tpu_custom_call.1} parent=5 // pred_check
        %p280 = pneg %p279
      $region38: #{tpu_custom_call.1} parent=5 // pred_check_branch
        %282 = sbr.rel (%p280) target = $region40
      $region39: #{tpu_custom_call.1} parent=5 // pred_region
        // Predicated region
        $region41: #{tpu_custom_call.1} parent=39 // pred_check
          %p283 = pneg %p56
        $region42: #{tpu_custom_call.1} parent=39 // pred_check_branch
          %285 = sbr.rel (%p283) target = $region44
        $region43: #{tpu_custom_call.1} parent=39 // pred_region
          %s286 = sand.u32 %s46, 1
          %s287 = scalar_lea.sflag [#allocation6], %s286
          %s288 = sand.u32 %s46, 1
          %s289 = smul.addr %s288, 128
          %s290 = scalar_lea.vmem [#allocation5], %s289
          %s291 = smul.u32 16, %s30
          %s293 = ssub.s32 2048, 2048
          %294 = vsyncadd %s287, %s293
          %s295 = smul.addr %s291, 2
          %s296 = smul.addr %s29, 32
          %s297 = sadd.s32 %s295, %s296
          %s298 = smul.addr %s297, 64
          %s299 = scalar_lea.hbm %s0, %s298
          %s300 = sshll.u32 %s290, 4
          %s301 = int_to_ptr.vmem [resolvable:$true] %s300
          %306 = dma.hbm_to_vmem [thread:$0]  %s299, 2048, %s301, %s287, 64, 64, 4
        $region44: #{tpu_custom_call.1} parent=39 // pred_fallthru
          _
      $region40: #{tpu_custom_call.1} parent=5 // pred_fallthru
        _
      %p307 = scmp.le.s32.totalorder 1, %s22
      %p308 = scmp.lt.s32.totalorder %s22, 3
      %p309 = pnand %p307, %p308
      %p310 = pneg %p309
      // Predicated region
      $region45: #{tpu_custom_call.1} parent=5 // pred_check
        _
      $region46: #{tpu_custom_call.1} parent=5 // pred_check_branch
        %312 = sbr.rel (%p309) target = $region48
      $region47: #{tpu_custom_call.1} parent=5 // pred_region
        %s313 = ssub.s32 %s22, 1
        %s314 = sand.u32 %s49, 1
        %s315 = scalar_lea.sflag [#allocation6], %s314
        %s316 = sand.u32 %s49, 1
        %s317 = smul.addr %s316, 128
        %s318 = scalar_lea.vmem [#allocation5], %s317
        // Predicated region
        $region49: #{tpu_custom_call.1} parent=47 // pred_check
          %p319 = pneg %p62
        $region50: #{tpu_custom_call.1} parent=47 // pred_check_branch
          %321 = sbr.rel (%p319) target = $region52
        $region51: #{tpu_custom_call.1} parent=47 // pred_region
          %322 = dma.done %s315, 2048
        $region52: #{tpu_custom_call.1} parent=47 // pred_fallthru
          _
        // Predicated region
        $region53: #{tpu_custom_call.1} parent=47 // pred_check
          %p323 = pneg %p83
        $region54: #{tpu_custom_call.1} parent=47 // pred_check_branch
          %325 = sbr.rel (%p323) target = $region56
        $region55: #{tpu_custom_call.1} parent=47 // pred_region
          %326 = dma.done [#allocation9], 1024
        $region56: #{tpu_custom_call.1} parent=47 // pred_fallthru
          _
        // Predicated region
        $region57: #{tpu_custom_call.1} parent=47 // pred_check
          %p327 = pneg %p104
        $region58: #{tpu_custom_call.1} parent=47 // pred_check_branch
          %329 = sbr.rel (%p327) target = $region60
        $region59: #{tpu_custom_call.1} parent=47 // pred_region
          %330 = dma.done [#allocation9], 9216
        $region60: #{tpu_custom_call.1} parent=47 // pred_fallthru
          _
        // Predicated region
        $region61: #{tpu_custom_call.1} parent=47 // pred_check
          %p331 = pneg %p125
        $region62: #{tpu_custom_call.1} parent=47 // pred_check_branch
          %333 = sbr.rel (%p331) target = $region64
        $region63: #{tpu_custom_call.1} parent=47 // pred_region
          %334 = dma.done [#allocation12], 1024
        $region64: #{tpu_custom_call.1} parent=47 // pred_fallthru
          _
        %s335 = sand.u32 %s49, 1
        %s336 = scalar_lea.sflag [#allocation6], %s335
        %s337 = sand.u32 %s49, 1
        %s338 = smul.addr %s337, 128
        %s339 = scalar_lea.vmem [#allocation5], %s338
        %p340 = pneg %p62
        %p341 = pneg %p59
        %p342 = pneg %p83
        %p343 = pneg %p80
        %p344 = pneg %p104
        %p345 = pneg %p101
        %p346 = pneg %p125
        %p347 = pneg %p122
        %p348 = pneg %p146
        %p349 = pneg %p143
        %p350 = pneg %p167
        %p351 = pneg %p164
        %p352 = pneg %p188
        %p353 = pneg %p185
        %p354 = pneg %p216
        %p355 = pneg %p213
        %s356 = sand.u32 %s203, 1
        %s357 = scalar_lea.sflag [#allocation7], %s356
        %s358 = sand.u32 %s203, 1
        %s359 = smul.addr %s358, 128
        %s360 = scalar_lea.vmem [#allocation13], %s359
        %s361 = smul.u32 16, %s32
        %s362 = smul.u32 16, %s32
        %s364 = smul.u32 %s32, 16
        %p365 = scmp.gt.s32.totalorder %s32, 0
        %p366 = scmp.lt.s32.totalorder %s32, 0
        // Predicated region
        $region65: #{tpu_custom_call.1} parent=47 // pred_check
          %p367 = pneg %p365
        $region66: #{tpu_custom_call.1} parent=47 // pred_check_branch
          %369 = sbr.rel (%p367) target = $region68
        $region67: #{tpu_custom_call.1} parent=47 // pred_region
          %s370 = ssub.s32 %s364, 1
          %s371 = smul.u32 %s370, 2
          %s372 = smul.u32 %s31, 32
          %s373 = sadd.s32 %s371, %s372
          %s374 = smul.addr %s373, 64
          %s375 = scalar_lea.hbm %s1, %s374
          // Predicated region
          $region69: #{tpu_custom_call.1} parent=67 // pred_check
            _
          $region70: #{tpu_custom_call.1} parent=67 // pred_check_branch
            %377 = sbr.rel target = $region72
          $region71: #{tpu_custom_call.1} parent=67 // pred_region
            %378 = sst [smem:[#allocation16]] [#allocation15]
            %379 = sst [smem:[#allocation17]] [#allocation14]
          $region72: #{tpu_custom_call.1} parent=67 // pred_fallthru
            _
          %381 = shalt.err (0)
          %s383 = sshll.u32 [#allocation3], 4
          %s384 = int_to_ptr.vmem [resolvable:$true] %s383
          %386 = dma.hbm_to_vmem [thread:$0]  %s375, 128, %s384, [#allocation4]
        $region68: #{tpu_custom_call.1} parent=47 // pred_fallthru
          _
        // Predicated region
        $region73: #{tpu_custom_call.1} parent=47 // pred_check
          %p387 = pneg %p366
        $region74: #{tpu_custom_call.1} parent=47 // pred_check_branch
          %389 = sbr.rel (%p387) target = $region76
        $region75: #{tpu_custom_call.1} parent=47 // pred_region
          %s390 = sadd.s32 %s364, 16
          %s391 = smul.u32 %s390, 2
          %s392 = smul.u32 %s31, 32
          %s393 = sadd.s32 %s391, %s392
          %s394 = smul.addr %s393, 64
          %s395 = scalar_lea.hbm %s1, %s394
          %s396 = scalar_lea.vmem [#allocation3], 8
          %s397 = scalar_lea.sflag [#allocation4], 1
          // Predicated region
          $region77: #{tpu_custom_call.1} parent=75 // pred_check
            _
          $region78: #{tpu_custom_call.1} parent=75 // pred_check_branch
            %399 = sbr.rel target = $region80
          $region79: #{tpu_custom_call.1} parent=75 // pred_region
            %400 = sst [smem:[#allocation16]] [#allocation19]
            %401 = sst [smem:[#allocation17]] [#allocation18]
          $region80: #{tpu_custom_call.1} parent=75 // pred_fallthru
            _
          %403 = shalt.err (0)
          %s405 = sshll.u32 %s396, 4
          %s406 = int_to_ptr.vmem [resolvable:$true] %s405
          %408 = dma.hbm_to_vmem [thread:$0]  %s395, 128, %s406, %s397
        $region76: #{tpu_custom_call.1} parent=47 // pred_fallthru
          _
        %v409 = vld [vmem:[#allocation8] sm:$0xf]
        %v410 = vld [vmem:[#allocation8 + $0x4] sm:$0xf]
        %v411 = vld [vmem:[#allocation8 + $0x8] sm:$0xf]
        %v412 = vld [vmem:[#allocation8 + $0xc] sm:$0xf]
        %v413 = vld [vmem:[#allocation8 + $0x10] sm:$0xf]
        %v414 = vld [vmem:[#allocation8 + $0x14] sm:$0xf]
        %v415 = vld [vmem:[#allocation8 + $0x18] sm:$0xf]
        %v416 = vld [vmem:[#allocation8 + $0x1c] sm:$0xf]
        %v417 = vld [vmem:[#allocation8 + $0x20] sm:$0xf]
        %v418 = vld [vmem:[#allocation8 + $0x24] sm:$0xf]
        %v419 = vld [vmem:[#allocation8 + $0x28] sm:$0xf]
        %v420 = vld [vmem:[#allocation8 + $0x2c] sm:$0xf]
        %v421 = vld [vmem:[#allocation8 + $0x30] sm:$0xf]
        %v422 = vld [vmem:[#allocation8 + $0x34] sm:$0xf]
        %v423 = vld [vmem:[#allocation8 + $0x38] sm:$0xf]
        %v424 = vld [vmem:[#allocation8 + $0x3c] sm:$0xf]
        %v425 = vld [vmem:[%s5] sm:$0x1]
        %v426 = vld [vmem:[%s318] sm:$0xf]
        %v427 = vld [vmem:[%s318 + $0x4] sm:$0xf]
        %v428 = vld [vmem:[%s318 + $0x8] sm:$0xf]
        %v429 = vld [vmem:[%s318 + $0xc] sm:$0xf]
        %v430 = vld [vmem:[%s318 + $0x10] sm:$0xf]
        %v431 = vld [vmem:[%s318 + $0x14] sm:$0xf]
        %v432 = vld [vmem:[%s318 + $0x18] sm:$0xf]
        %v433 = vld [vmem:[%s318 + $0x1c] sm:$0xf]
        %v434 = vld [vmem:[%s318 + $0x20] sm:$0xf]
        %v435 = vld [vmem:[%s318 + $0x24] sm:$0xf]
        %v436 = vld [vmem:[%s318 + $0x28] sm:$0xf]
        %v437 = vld [vmem:[%s318 + $0x2c] sm:$0xf]
        %v438 = vld [vmem:[%s318 + $0x30] sm:$0xf]
        %v439 = vld [vmem:[%s318 + $0x34] sm:$0xf]
        %v440 = vld [vmem:[%s318 + $0x38] sm:$0xf]
        %v441 = vld [vmem:[%s318 + $0x3c] sm:$0xf]
        %v442 = vld [vmem:[%s318 + $0x40] sm:$0xf]
        %v443 = vld [vmem:[%s318 + $0x44] sm:$0xf]
        %v444 = vld [vmem:[%s318 + $0x48] sm:$0xf]
        %v445 = vld [vmem:[%s318 + $0x4c] sm:$0xf]
        %v446 = vld [vmem:[%s318 + $0x50] sm:$0xf]
        %v447 = vld [vmem:[%s318 + $0x54] sm:$0xf]
        %v448 = vld [vmem:[%s318 + $0x58] sm:$0xf]
        %v449 = vld [vmem:[%s318 + $0x5c] sm:$0xf]
        %v450 = vld [vmem:[%s318 + $0x60] sm:$0xf]
        %v451 = vld [vmem:[%s318 + $0x64] sm:$0xf]
        %v452 = vld [vmem:[%s318 + $0x68] sm:$0xf]
        %v453 = vld [vmem:[%s318 + $0x6c] sm:$0xf]
        %v454 = vld [vmem:[%s318 + $0x70] sm:$0xf]
        %v455 = vld [vmem:[%s318 + $0x74] sm:$0xf]
        %v456 = vld [vmem:[%s318 + $0x78] sm:$0xf]
        %v457 = vld [vmem:[%s318 + $0x7c] sm:$0xf]
        %v459 = vlaneseq
        %v460 = vshrl.u32 %v459, 7
        %v461 = vsub.s32 0, %v460
        %v462 = vrot.slane %v425, %v461
        %v496 = vunpack.c.l.b16 %v426
        %v497 = vunpack.c.l.b16 %v427
        %v498 = vunpack.c.l.b16 %v428
        %v499 = vunpack.c.l.b16 %v429
        %v500 = vunpack.c.l.b16 %v430
        %v501 = vunpack.c.l.b16 %v431
        %v502 = vunpack.c.l.b16 %v432
        %v503 = vunpack.c.l.b16 %v433
        %v504 = vunpack.c.l.b16 %v434
        %v505 = vunpack.c.l.b16 %v435
        %v506 = vunpack.c.l.b16 %v436
        %v507 = vunpack.c.l.b16 %v437
        %v508 = vunpack.c.l.b16 %v438
        %v509 = vunpack.c.l.b16 %v439
        %v510 = vunpack.c.l.b16 %v440
        %v511 = vunpack.c.l.b16 %v441
        %v512 = vunpack.c.l.b16 %v442
        %v513 = vunpack.c.l.b16 %v443
        %v514 = vunpack.c.l.b16 %v444
        %v515 = vunpack.c.l.b16 %v445
        %v516 = vunpack.c.l.b16 %v446
        %v517 = vunpack.c.l.b16 %v447
        %v518 = vunpack.c.l.b16 %v448
        %v519 = vunpack.c.l.b16 %v449
        %v520 = vunpack.c.l.b16 %v450
        %v521 = vunpack.c.l.b16 %v451
        %v522 = vunpack.c.l.b16 %v452
        %v523 = vunpack.c.l.b16 %v453
        %v524 = vunpack.c.l.b16 %v454
        %v525 = vunpack.c.l.b16 %v455
        %v526 = vunpack.c.l.b16 %v456
        %v527 = vunpack.c.l.b16 %v457
        %v528 = vpack.c.b16 %v497, %v496
        %v529 = vpack.c.b16 %v499, %v498
        %v530 = vpack.c.b16 %v501, %v500
        %v531 = vpack.c.b16 %v503, %v502
        %v532 = vpack.c.b16 %v505, %v504
        %v533 = vpack.c.b16 %v507, %v506
        %v534 = vpack.c.b16 %v509, %v508
        %v535 = vpack.c.b16 %v511, %v510
        %v536 = vpack.c.b16 %v513, %v512
        %v537 = vpack.c.b16 %v515, %v514
        %v538 = vpack.c.b16 %v517, %v516
        %v539 = vpack.c.b16 %v519, %v518
        %v540 = vpack.c.b16 %v521, %v520
        %v541 = vpack.c.b16 %v523, %v522
        %v542 = vpack.c.b16 %v525, %v524
        %v543 = vpack.c.b16 %v527, %v526
        %v576 = vunpack.c.l.b16 %v409
        %v577 = vunpack.c.l.b16 %v410
        %v578 = vunpack.c.l.b16 %v411
        %v579 = vunpack.c.l.b16 %v412
        %v580 = vunpack.c.l.b16 %v413
        %v581 = vunpack.c.l.b16 %v414
        %v582 = vunpack.c.l.b16 %v415
        %v583 = vunpack.c.l.b16 %v416
        %v584 = vunpack.c.l.b16 %v417
        %v585 = vunpack.c.l.b16 %v418
        %v586 = vunpack.c.l.b16 %v419
        %v587 = vunpack.c.l.b16 %v420
        %v588 = vunpack.c.l.b16 %v421
        %v589 = vunpack.c.l.b16 %v422
        %v590 = vunpack.c.l.b16 %v423
        %v591 = vunpack.c.l.b16 %v424
        %v592 = vpack.c.b16 %v577, %v576
        %v593 = vpack.c.b16 %v579, %v578
        %v594 = vpack.c.b16 %v581, %v580
        %v595 = vpack.c.b16 %v583, %v582
        %v596 = vpack.c.b16 %v585, %v584
        %v597 = vpack.c.b16 %v587, %v586
        %v598 = vpack.c.b16 %v589, %v588
        %v599 = vpack.c.b16 %v591, %v590
        %608 = vmatprep.subr.bf16.mxu0 0
        %609 = vmatpush1.bf16.msra.mxu0 %v592
        %610 = vmatprep.subr.bf16.mxu0 0
        %611 = vmatpush1.bf16.msra.mxu0 %v593
        %612 = vmatprep.subr.bf16.mxu0 0
        %613 = vmatpush1.bf16.msra.mxu0 %v594
        %614 = vmatprep.subr.bf16.mxu0 0
        %615 = vmatpush1.bf16.msra.mxu0 %v595
        %616 = vmatprep.subr.bf16.mxu0 0
        %617 = vmatpush1.bf16.msra.mxu0 %v596
        %618 = vmatprep.subr.bf16.mxu0 0
        %619 = vmatpush1.bf16.msra.mxu0 %v597
        %620 = vmatprep.subr.bf16.mxu0 0
        %621 = vmatpush1.bf16.msra.mxu0 %v598
        %622 = vmatprep.subr.bf16.mxu0 0
        %623 = vmatpush1.bf16.msra.mxu0 %v599
        %624 = vmatprep.subr.bf16.mxu0 0
        %625 = vmatpush1.bf16.msra.mxu0 0
        %626 = vmatprep.subr.bf16.mxu0 0
        %627 = vmatpush1.bf16.msra.mxu0 0
        %628 = vmatprep.subr.bf16.mxu0 0
        %629 = vmatpush1.bf16.msra.mxu0 0
        %630 = vmatprep.subr.bf16.mxu0 0
        %631 = vmatpush1.bf16.msra.mxu0 0
        %632 = vmatprep.subr.bf16.mxu0 0
        %633 = vmatpush1.bf16.msra.mxu0 0
        %634 = vmatprep.subr.bf16.mxu0 0
        %635 = vmatpush1.bf16.msra.mxu0 0
        %636 = vmatprep.subr.bf16.mxu0 0
        %637 = vmatpush1.bf16.msra.mxu0 0
        %638 = vmatprep.subr.bf16.mxu0 0
        %639 = vmatpush1.bf16.msra.mxu0 0
        %640 = vmatprep.mubr.bf16.mxu0 0
        %641 = vmatmul.mubr.bf16.gmra.mrb[0].mxu0 %v528
        %v642 = vpop.f32.mrb[0].mxu0
        %v643 = vadd.f32 %v462, %v642
        %v644 = vpop.f32.mrb[0].mxu0
        %v645 = vpop.f32.mrb[0].mxu0
        %v646 = vadd.f32 %v462, %v645
        %v647 = vpop.f32.mrb[0].mxu0
        %648 = vmatprep.mubr.bf16.mxu0 0
        %649 = vmatmul.mubr.bf16.gmra.mrb[0].mxu0 %v529
        %v650 = vpop.f32.mrb[0].mxu0
        %v651 = vadd.f32 %v462, %v650
        %v652 = vpop.f32.mrb[0].mxu0
        %v653 = vpop.f32.mrb[0].mxu0
        %v654 = vadd.f32 %v462, %v653
        %v655 = vpop.f32.mrb[0].mxu0
        %656 = vmatprep.mubr.bf16.mxu0 0
        %657 = vmatmul.mubr.bf16.gmra.mrb[0].mxu0 %v530
        %v658 = vpop.f32.mrb[0].mxu0
        %v659 = vadd.f32 %v462, %v658
        %v660 = vpop.f32.mrb[0].mxu0
        %v661 = vpop.f32.mrb[0].mxu0
        %v662 = vadd.f32 %v462, %v661
        %v663 = vpop.f32.mrb[0].mxu0
        %664 = vmatprep.mubr.bf16.mxu0 0
        %665 = vmatmul.mubr.bf16.gmra.mrb[0].mxu0 %v531
        %v666 = vpop.f32.mrb[0].mxu0
        %v667 = vadd.f32 %v462, %v666
        %v668 = vpop.f32.mrb[0].mxu0
        %v669 = vpop.f32.mrb[0].mxu0
        %v670 = vadd.f32 %v462, %v669
        %v671 = vpop.f32.mrb[0].mxu0
        %672 = vmatprep.mubr.bf16.mxu0 0
        %673 = vmatmul.mubr.bf16.gmra.mrb[0].mxu0 %v532
        %v674 = vpop.f32.mrb[0].mxu0
        %v675 = vadd.f32 %v462, %v674
        %v676 = vpop.f32.mrb[0].mxu0
        %v677 = vpop.f32.mrb[0].mxu0
        %v678 = vadd.f32 %v462, %v677
        %v679 = vpop.f32.mrb[0].mxu0
        %680 = vmatprep.mubr.bf16.mxu0 0
        %681 = vmatmul.mubr.bf16.gmra.mrb[0].mxu0 %v533
        %v682 = vpop.f32.mrb[0].mxu0
        %v683 = vadd.f32 %v462, %v682
        %v684 = vpop.f32.mrb[0].mxu0
        %v685 = vpop.f32.mrb[0].mxu0
        %v686 = vadd.f32 %v462, %v685
        %v687 = vpop.f32.mrb[0].mxu0
        %688 = vmatprep.mubr.bf16.mxu0 0
        %689 = vmatmul.mubr.bf16.gmra.mrb[0].mxu0 %v534
        %v690 = vpop.f32.mrb[0].mxu0
        %v691 = vadd.f32 %v462, %v690
        %v692 = vpop.f32.mrb[0].mxu0
        %v693 = vpop.f32.mrb[0].mxu0
        %v694 = vadd.f32 %v462, %v693
        %v695 = vpop.f32.mrb[0].mxu0
        %696 = vmatprep.mubr.bf16.mxu0 0
        %697 = vmatmul.mubr.bf16.gmra.mrb[0].mxu0 %v535
        %v698 = vpop.f32.mrb[0].mxu0
        %v699 = vadd.f32 %v462, %v698
        %v700 = vpop.f32.mrb[0].mxu0
        %v701 = vpop.f32.mrb[0].mxu0
        %v702 = vadd.f32 %v462, %v701
        %v703 = vpop.f32.mrb[0].mxu0
        %704 = vmatprep.mubr.bf16.mxu0 0
        %705 = vmatmul.mubr.bf16.gmra.mrb[0].mxu0 %v536
        %v706 = vpop.f32.mrb[0].mxu0
        %v707 = vadd.f32 %v462, %v706
        %v708 = vpop.f32.mrb[0].mxu0
        %v709 = vpop.f32.mrb[0].mxu0
        %v710 = vadd.f32 %v462, %v709
        %v711 = vpop.f32.mrb[0].mxu0
        %712 = vmatprep.mubr.bf16.mxu0 0
        %713 = vmatmul.mubr.bf16.gmra.mrb[0].mxu0 %v537
        %v714 = vpop.f32.mrb[0].mxu0
        %v715 = vadd.f32 %v462, %v714
        %v716 = vpop.f32.mrb[0].mxu0
        %v717 = vpop.f32.mrb[0].mxu0
        %v718 = vadd.f32 %v462, %v717
        %v719 = vpop.f32.mrb[0].mxu0
        %720 = vmatprep.mubr.bf16.mxu0 0
        %721 = vmatmul.mubr.bf16.gmra.mrb[0].mxu0 %v538
        %v722 = vpop.f32.mrb[0].mxu0
        %v723 = vadd.f32 %v462, %v722
        %v724 = vpop.f32.mrb[0].mxu0
        %v725 = vpop.f32.mrb[0].mxu0
        %v726 = vadd.f32 %v462, %v725
        %v727 = vpop.f32.mrb[0].mxu0
        %728 = vmatprep.mubr.bf16.mxu0 0
        %729 = vmatmul.mubr.bf16.gmra.mrb[0].mxu0 %v539
        %v730 = vpop.f32.mrb[0].mxu0
        %v731 = vadd.f32 %v462, %v730
        %v732 = vpop.f32.mrb[0].mxu0
        %v733 = vpop.f32.mrb[0].mxu0
        %v734 = vadd.f32 %v462, %v733
        %v735 = vpop.f32.mrb[0].mxu0
        %736 = vmatprep.mubr.bf16.mxu0 0
        %737 = vmatmul.mubr.bf16.gmra.mrb[0].mxu0 %v540
        %v738 = vpop.f32.mrb[0].mxu0
        %v739 = vadd.f32 %v462, %v738
        %v740 = vpop.f32.mrb[0].mxu0
        %v741 = vpop.f32.mrb[0].mxu0
        %v742 = vadd.f32 %v462, %v741
        %v743 = vpop.f32.mrb[0].mxu0
        %744 = vmatprep.mubr.bf16.mxu0 0
        %745 = vmatmul.mubr.bf16.gmra.mrb[0].mxu0 %v541
        %v746 = vpop.f32.mrb[0].mxu0
        %v747 = vadd.f32 %v462, %v746
        %v748 = vpop.f32.mrb[0].mxu0
        %v749 = vpop.f32.mrb[0].mxu0
        %v750 = vadd.f32 %v462, %v749
        %v751 = vpop.f32.mrb[0].mxu0
        %752 = vmatprep.mubr.bf16.mxu0 0
        %753 = vmatmul.mubr.bf16.gmra.mrb[0].mxu0 %v542
        %v754 = vpop.f32.mrb[0].mxu0
        %v755 = vadd.f32 %v462, %v754
        %v756 = vpop.f32.mrb[0].mxu0
        %v757 = vpop.f32.mrb[0].mxu0
        %v758 = vadd.f32 %v462, %v757
        %v759 = vpop.f32.mrb[0].mxu0
        %760 = vmatprep.mubr.bf16.mxu0 0
        %761 = vmatmul.mubr.bf16.gmra.mrb[0].mxu0 %v543
        %v762 = vpop.f32.mrb[0].mxu0
        %v763 = vadd.f32 %v462, %v762
        %v764 = vpop.f32.mrb[0].mxu0
        %v765 = vpop.f32.mrb[0].mxu0
        %v766 = vadd.f32 %v462, %v765
        %v767 = vpop.f32.mrb[0].mxu0
        %768 = vdwg.mxu0
        %v769 = vmax.f32 %v643, 0.0
        %v770 = vmax.f32 %v646, 0.0
        %v771 = vmax.f32 %v651, 0.0
        %v772 = vmax.f32 %v654, 0.0
        %v773 = vmax.f32 %v659, 0.0
        %v774 = vmax.f32 %v662, 0.0
        %v775 = vmax.f32 %v667, 0.0
        %v776 = vmax.f32 %v670, 0.0
        %v777 = vmax.f32 %v675, 0.0
        %v778 = vmax.f32 %v678, 0.0
        %v779 = vmax.f32 %v683, 0.0
        %v780 = vmax.f32 %v686, 0.0
        %v781 = vmax.f32 %v691, 0.0
        %v782 = vmax.f32 %v694, 0.0
        %v783 = vmax.f32 %v699, 0.0
        %v784 = vmax.f32 %v702, 0.0
        %v785 = vmax.f32 %v707, 0.0
        %v786 = vmax.f32 %v710, 0.0
        %v787 = vmax.f32 %v715, 0.0
        %v788 = vmax.f32 %v718, 0.0
        %v789 = vmax.f32 %v723, 0.0
        %v790 = vmax.f32 %v726, 0.0
        %v791 = vmax.f32 %v731, 0.0
        %v792 = vmax.f32 %v734, 0.0
        %v793 = vmax.f32 %v739, 0.0
        %v794 = vmax.f32 %v742, 0.0
        %v795 = vmax.f32 %v747, 0.0
        %v796 = vmax.f32 %v750, 0.0
        %v797 = vmax.f32 %v755, 0.0
        %v798 = vmax.f32 %v758, 0.0
        %v799 = vmax.f32 %v763, 0.0
        %v800 = vmax.f32 %v766, 0.0
        %v801 = vpack.c.bf16 %v770, %v769
        %v802 = vpack.c.bf16 %v772, %v771
        %v803 = vpack.c.bf16 %v774, %v773
        %v804 = vpack.c.bf16 %v776, %v775
        %v805 = vpack.c.bf16 %v778, %v777
        %v806 = vpack.c.bf16 %v780, %v779
        %v807 = vpack.c.bf16 %v782, %v781
        %v808 = vpack.c.bf16 %v784, %v783
        %v809 = vpack.c.bf16 %v786, %v785
        %v810 = vpack.c.bf16 %v788, %v787
        %v811 = vpack.c.bf16 %v790, %v789
        %v812 = vpack.c.bf16 %v792, %v791
        %v813 = vpack.c.bf16 %v794, %v793
        %v814 = vpack.c.bf16 %v796, %v795
        %v815 = vpack.c.bf16 %v798, %v797
        %v816 = vpack.c.bf16 %v800, %v799
        %817 = vst [vmem:[#allocation2 + $0x8] sm:$0xff] %v801
        %818 = vst [vmem:[#allocation2 + $0x20] sm:$0xff] %v802
        %819 = vst [vmem:[#allocation2 + $0x38] sm:$0xff] %v803
        %820 = vst [vmem:[#allocation2 + $0x50] sm:$0xff] %v804
        %821 = vst [vmem:[#allocation2 + $0x68] sm:$0xff] %v805
        %822 = vst [vmem:[#allocation2 + $0x80] sm:$0xff] %v806
        %823 = vst [vmem:[#allocation2 + $0x98] sm:$0xff] %v807
        %824 = vst [vmem:[#allocation2 + $0xb0] sm:$0xff] %v808
        %825 = vst [vmem:[#allocation2 + $0xc8] sm:$0xff] %v809
        %826 = vst [vmem:[#allocation2 + $0xe0] sm:$0xff] %v810
        %827 = vst [vmem:[#allocation2 + $0xf8] sm:$0xff] %v811
        %828 = vst [vmem:[#allocation2 + $0x110] sm:$0xff] %v812
        %829 = vst [vmem:[#allocation2 + $0x128] sm:$0xff] %v813
        %830 = vst [vmem:[#allocation2 + $0x140] sm:$0xff] %v814
        %831 = vst [vmem:[#allocation2 + $0x158] sm:$0xff] %v815
        %832 = vst [vmem:[#allocation2 + $0x170] sm:$0xff] %v816
        %833 = vst [vmem:[#allocation2 + $0x18] sm:$0xff] %v801
        %834 = vst [vmem:[#allocation2 + $0x30] sm:$0xff] %v802
        %835 = vst [vmem:[#allocation2 + $0x48] sm:$0xff] %v803
        %836 = vst [vmem:[#allocation2 + $0x60] sm:$0xff] %v804
        %837 = vst [vmem:[#allocation2 + $0x78] sm:$0xff] %v805
        %838 = vst [vmem:[#allocation2 + $0x90] sm:$0xff] %v806
        %839 = vst [vmem:[#allocation2 + $0xa8] sm:$0xff] %v807
        %840 = vst [vmem:[#allocation2 + $0xc0] sm:$0xff] %v808
        %841 = vst [vmem:[#allocation2 + $0xd8] sm:$0xff] %v809
        %842 = vst [vmem:[#allocation2 + $0xf0] sm:$0xff] %v810
        %843 = vst [vmem:[#allocation2 + $0x108] sm:$0xff] %v811
        %844 = vst [vmem:[#allocation2 + $0x120] sm:$0xff] %v812
        %845 = vst [vmem:[#allocation2 + $0x138] sm:$0xff] %v813
        %846 = vst [vmem:[#allocation2 + $0x150] sm:$0xff] %v814
        %847 = vst [vmem:[#allocation2 + $0x168] sm:$0xff] %v815
        %848 = vst [vmem:[#allocation2 + $0x10] sm:$0xff] %v802
        %849 = vst [vmem:[#allocation2 + $0x28] sm:$0xff] %v803
        %850 = vst [vmem:[#allocation2 + $0x40] sm:$0xff] %v804
        %851 = vst [vmem:[#allocation2 + $0x58] sm:$0xff] %v805
        %852 = vst [vmem:[#allocation2 + $0x70] sm:$0xff] %v806
        %853 = vst [vmem:[#allocation2 + $0x88] sm:$0xff] %v807
        %854 = vst [vmem:[#allocation2 + $0xa0] sm:$0xff] %v808
        %855 = vst [vmem:[#allocation2 + $0xb8] sm:$0xff] %v809
        %856 = vst [vmem:[#allocation2 + $0xd0] sm:$0xff] %v810
        %857 = vst [vmem:[#allocation2 + $0xe8] sm:$0xff] %v811
        %858 = vst [vmem:[#allocation2 + $0x100] sm:$0xff] %v812
        %859 = vst [vmem:[#allocation2 + $0x118] sm:$0xff] %v813
        %860 = vst [vmem:[#allocation2 + $0x130] sm:$0xff] %v814
        %861 = vst [vmem:[#allocation2 + $0x148] sm:$0xff] %v815
        %862 = vst [vmem:[#allocation2 + $0x160] sm:$0xff] %v816
        // Predicated region
        $region81: #{tpu_custom_call.1} parent=47 // pred_check
          %p863 = pneg %p365
        $region82: #{tpu_custom_call.1} parent=47 // pred_check_branch
          %865 = sbr.rel (%p863) target = $region84
        $region83: #{tpu_custom_call.1} parent=47 // pred_region
          %s866 = smul.u32 4, 1
          %s867 = smul.u32 %s866, 2
          %s868 = smul.u32 %s867, 1
          %s869 = sshll.u32 %s868, 4
          %870 = dma.done [#allocation4], %s869
          %v871 = vld [vmem:[#allocation3] sm:$0xff]
          %872 = vmatprep.subr.bf16.mxu0 0
          %873 = vmatpush1.bf16.msra.mxu0 %v592
          %874 = vmatprep.subr.bf16.mxu0 0
          %875 = vmatpush1.bf16.msra.mxu0 %v593
          %876 = vmatprep.subr.bf16.mxu0 0
          %877 = vmatpush1.bf16.msra.mxu0 %v594
          %878 = vmatprep.subr.bf16.mxu0 0
          %879 = vmatpush1.bf16.msra.mxu0 %v595
          %880 = vmatprep.subr.bf16.mxu0 0
          %881 = vmatpush1.bf16.msra.mxu0 %v596
          %882 = vmatprep.subr.bf16.mxu0 0
          %883 = vmatpush1.bf16.msra.mxu0 %v597
          %884 = vmatprep.subr.bf16.mxu0 0
          %885 = vmatpush1.bf16.msra.mxu0 %v598
          %886 = vmatprep.subr.bf16.mxu0 0
          %887 = vmatpush1.bf16.msra.mxu0 %v599
          %888 = vmatprep.subr.bf16.mxu0 0
          %889 = vmatpush1.bf16.msra.mxu0 0
          %890 = vmatprep.subr.bf16.mxu0 0
          %891 = vmatpush1.bf16.msra.mxu0 0
          %892 = vmatprep.subr.bf16.mxu0 0
          %893 = vmatpush1.bf16.msra.mxu0 0
          %894 = vmatprep.subr.bf16.mxu0 0
          %895 = vmatpush1.bf16.msra.mxu0 0
          %896 = vmatprep.subr.bf16.mxu0 0
          %897 = vmatpush1.bf16.msra.mxu0 0
          %898 = vmatprep.subr.bf16.mxu0 0
          %899 = vmatpush1.bf16.msra.mxu0 0
          %900 = vmatprep.subr.bf16.mxu0 0
          %901 = vmatpush1.bf16.msra.mxu0 0
          %902 = vmatprep.subr.bf16.mxu0 0
          %903 = vmatpush1.bf16.msra.mxu0 0
          %904 = vmatprep.mubr.bf16.mxu0 0
          %905 = vmatmul.mubr.bf16.gmra.mrb[0].mxu0 %v871
          %v906 = vpop.f32.mrb[0].mxu0
          %v907 = vadd.f32 %v462, %v906
          %v908 = vpop.f32.mrb[0].mxu0
          %v909 = vpop.f32.mrb[0].mxu0
          %v910 = vadd.f32 %v462, %v909
          %v911 = vpop.f32.mrb[0].mxu0
          %912 = vdwg.mxu0
          %v913 = vmax.f32 %v907, 0.0
          %v914 = vmax.f32 %v910, 0.0
          %v915 = vpack.c.bf16 %v914, %v913
          %916 = vst [vmem:[#allocation2] sm:$0xff] %v915
        $region84: #{tpu_custom_call.1} parent=47 // pred_fallthru
          _
        %p917 = scmp.eq.s32.totalorder %s32, 0
        // Predicated region
        $region85: #{tpu_custom_call.1} parent=47 // pred_check
          %p918 = pneg %p917
        $region86: #{tpu_custom_call.1} parent=47 // pred_check_branch
          %920 = sbr.rel (%p918) target = $region88
        $region87: #{tpu_custom_call.1} parent=47 // pred_region
          %921 = vst [vmem:[#allocation2] sm:$0xff] 0
        $region88: #{tpu_custom_call.1} parent=47 // pred_fallthru
          _
        // Predicated region
        $region89: #{tpu_custom_call.1} parent=47 // pred_check
          %p922 = pneg %p366
        $region90: #{tpu_custom_call.1} parent=47 // pred_check_branch
          %924 = sbr.rel (%p922) target = $region92
        $region91: #{tpu_custom_call.1} parent=47 // pred_region
          %s925 = scalar_lea.vmem [#allocation3], 8
          %s926 = scalar_lea.sflag [#allocation4], 1
          %s927 = smul.u32 4, 1
          %s928 = smul.u32 %s927, 2
          %s929 = smul.u32 %s928, 1
          %s930 = sshll.u32 %s929, 4
          %931 = dma.done %s926, %s930
          %v932 = vld [vmem:[%s925] sm:$0xff]
          %933 = vmatprep.subr.bf16.mxu0 0
          %934 = vmatpush1.bf16.msra.mxu0 %v592
          %935 = vmatprep.subr.bf16.mxu0 0
          %936 = vmatpush1.bf16.msra.mxu0 %v593
          %937 = vmatprep.subr.bf16.mxu0 0
          %938 = vmatpush1.bf16.msra.mxu0 %v594
          %939 = vmatprep.subr.bf16.mxu0 0
          %940 = vmatpush1.bf16.msra.mxu0 %v595
          %941 = vmatprep.subr.bf16.mxu0 0
          %942 = vmatpush1.bf16.msra.mxu0 %v596
          %943 = vmatprep.subr.bf16.mxu0 0
          %944 = vmatpush1.bf16.msra.mxu0 %v597
          %945 = vmatprep.subr.bf16.mxu0 0
          %946 = vmatpush1.bf16.msra.mxu0 %v598
          %947 = vmatprep.subr.bf16.mxu0 0
          %948 = vmatpush1.bf16.msra.mxu0 %v599
          %949 = vmatprep.subr.bf16.mxu0 0
          %950 = vmatpush1.bf16.msra.mxu0 0
          %951 = vmatprep.subr.bf16.mxu0 0
          %952 = vmatpush1.bf16.msra.mxu0 0
          %953 = vmatprep.subr.bf16.mxu0 0
          %954 = vmatpush1.bf16.msra.mxu0 0
          %955 = vmatprep.subr.bf16.mxu0 0
          %956 = vmatpush1.bf16.msra.mxu0 0
          %957 = vmatprep.subr.bf16.mxu0 0
          %958 = vmatpush1.bf16.msra.mxu0 0
          %959 = vmatprep.subr.bf16.mxu0 0
          %960 = vmatpush1.bf16.msra.mxu0 0
          %961 = vmatprep.subr.bf16.mxu0 0
          %962 = vmatpush1.bf16.msra.mxu0 0
          %963 = vmatprep.subr.bf16.mxu0 0
          %964 = vmatpush1.bf16.msra.mxu0 0
          %965 = vmatprep.mubr.bf16.mxu0 0
          %966 = vmatmul.mubr.bf16.gmra.mrb[0].mxu0 %v932
          %v967 = vpop.f32.mrb[0].mxu0
          %v968 = vadd.f32 %v462, %v967
          %v969 = vpop.f32.mrb[0].mxu0
          %v970 = vpop.f32.mrb[0].mxu0
          %v971 = vadd.f32 %v462, %v970
          %v972 = vpop.f32.mrb[0].mxu0
          %973 = vdwg.mxu0
          %v974 = vmax.f32 %v968, 0.0
          %v975 = vmax.f32 %v971, 0.0
          %v976 = vpack.c.bf16 %v975, %v974
          %977 = vst [vmem:[#allocation2 + $0x178] sm:$0xff] %v976
        $region92: #{tpu_custom_call.1} parent=47 // pred_fallthru
          _
        // Predicated region
        $region93: #{tpu_custom_call.1} parent=47 // pred_check
          %p978 = pneg %p917
        $region94: #{tpu_custom_call.1} parent=47 // pred_check_branch
          %980 = sbr.rel (%p978) target = $region96
        $region95: #{tpu_custom_call.1} parent=47 // pred_region
          %981 = vst [vmem:[#allocation2 + $0x178] sm:$0xff] 0
        $region96: #{tpu_custom_call.1} parent=47 // pred_fallthru
          _
        %v982 = vld [vmem:[#allocation2] sm:$0xff]
        %v983 = vld [vmem:[#allocation2 + $0x8] sm:$0xff]
        %v984 = vld [vmem:[#allocation2 + $0x10] sm:$0xff]
        %v985 = vld [vmem:[#allocation2 + $0x18] sm:$0xff]
        %v986 = vld [vmem:[#allocation2 + $0x20] sm:$0xff]
        %v987 = vld [vmem:[#allocation2 + $0x28] sm:$0xff]
        %v988 = vld [vmem:[#allocation2 + $0x30] sm:$0xff]
        %v989 = vld [vmem:[#allocation2 + $0x38] sm:$0xff]
        %v990 = vld [vmem:[#allocation2 + $0x40] sm:$0xff]
        %v991 = vld [vmem:[#allocation2 + $0x48] sm:$0xff]
        %v992 = vld [vmem:[#allocation2 + $0x50] sm:$0xff]
        %v993 = vld [vmem:[#allocation2 + $0x58] sm:$0xff]
        %v994 = vld [vmem:[#allocation2 + $0x60] sm:$0xff]
        %v995 = vld [vmem:[#allocation2 + $0x68] sm:$0xff]
        %v996 = vld [vmem:[#allocation2 + $0x70] sm:$0xff]
        %v997 = vld [vmem:[#allocation2 + $0x78] sm:$0xff]
        %v998 = vld [vmem:[#allocation2 + $0x80] sm:$0xff]
        %v999 = vld [vmem:[#allocation2 + $0x88] sm:$0xff]
        %v1000 = vld [vmem:[#allocation2 + $0x90] sm:$0xff]
        %v1001 = vld [vmem:[#allocation2 + $0x98] sm:$0xff]
        %v1002 = vld [vmem:[#allocation2 + $0xa0] sm:$0xff]
        %v1003 = vld [vmem:[#allocation2 + $0xa8] sm:$0xff]
        %v1004 = vld [vmem:[#allocation2 + $0xb0] sm:$0xff]
        %v1005 = vld [vmem:[#allocation2 + $0xb8] sm:$0xff]
        %v1006 = vld [vmem:[#allocation2 + $0xc0] sm:$0xff]
        %v1007 = vld [vmem:[#allocation2 + $0xc8] sm:$0xff]
        %v1008 = vld [vmem:[#allocation2 + $0xd0] sm:$0xff]
        %v1009 = vld [vmem:[#allocation2 + $0xd8] sm:$0xff]
        %v1010 = vld [vmem:[#allocation2 + $0xe0] sm:$0xff]
        %v1011 = vld [vmem:[#allocation2 + $0xe8] sm:$0xff]
        %v1012 = vld [vmem:[#allocation2 + $0xf0] sm:$0xff]
        %v1013 = vld [vmem:[#allocation2 + $0xf8] sm:$0xff]
        %v1014 = vld [vmem:[#allocation2 + $0x100] sm:$0xff]
        %v1015 = vld [vmem:[#allocation2 + $0x108] sm:$0xff]
        %v1016 = vld [vmem:[#allocation2 + $0x110] sm:$0xff]
        %v1017 = vld [vmem:[#allocation2 + $0x118] sm:$0xff]
        %v1018 = vld [vmem:[#allocation2 + $0x120] sm:$0xff]
        %v1019 = vld [vmem:[#allocation2 + $0x128] sm:$0xff]
        %v1020 = vld [vmem:[#allocation2 + $0x130] sm:$0xff]
        %v1021 = vld [vmem:[#allocation2 + $0x138] sm:$0xff]
        %v1022 = vld [vmem:[#allocation2 + $0x140] sm:$0xff]
        %v1023 = vld [vmem:[#allocation2 + $0x148] sm:$0xff]
        %v1024 = vld [vmem:[#allocation2 + $0x150] sm:$0xff]
        %v1025 = vld [vmem:[#allocation2 + $0x158] sm:$0xff]
        %v1026 = vld [vmem:[#allocation2 + $0x160] sm:$0xff]
        %v1027 = vld [vmem:[#allocation2 + $0x168] sm:$0xff]
        %v1028 = vld [vmem:[#allocation2 + $0x170] sm:$0xff]
        %v1029 = vld [vmem:[#allocation2 + $0x178] sm:$0xff]
        %v1030 = vld [vmem:[#allocation10] sm:$0xff]
        %v1031 = vld [vmem:[#allocation10 + $0x8] sm:$0xf]
        %v1032 = vld [vmem:[#allocation10 + $0xc] sm:$0xff]
        %v1033 = vld [vmem:[#allocation10 + $0x14] sm:$0xf]
        %v1034 = vld [vmem:[#allocation10 + $0x18] sm:$0xff]
        %v1035 = vld [vmem:[#allocation10 + $0x20] sm:$0xf]
        %v1036 = vld [vmem:[#allocation10 + $0x24] sm:$0xff]
        %v1037 = vld [vmem:[#allocation10 + $0x2c] sm:$0xf]
        %v1038 = vld [vmem:[#allocation10 + $0x30] sm:$0xff]
        %v1039 = vld [vmem:[#allocation10 + $0x38] sm:$0xf]
        %v1040 = vld [vmem:[#allocation10 + $0x3c] sm:$0xff]
        %v1041 = vld [vmem:[#allocation10 + $0x44] sm:$0xf]
        %v1042 = vld [vmem:[#allocation10 + $0x48] sm:$0xff]
        %v1043 = vld [vmem:[#allocation10 + $0x50] sm:$0xf]
        %v1044 = vld [vmem:[#allocation10 + $0x54] sm:$0xff]
        %v1045 = vld [vmem:[#allocation10 + $0x5c] sm:$0xf]
        %v1046 = vld [vmem:[#allocation10 + $0x60] sm:$0xff]
        %v1047 = vld [vmem:[#allocation10 + $0x68] sm:$0xf]
        %v1048 = vld [vmem:[#allocation10 + $0x6c] sm:$0xff]
        %v1049 = vld [vmem:[#allocation10 + $0x74] sm:$0xf]
        %v1050 = vld [vmem:[#allocation10 + $0x78] sm:$0xff]
        %v1051 = vld [vmem:[#allocation10 + $0x80] sm:$0xf]
        %v1052 = vld [vmem:[#allocation10 + $0x84] sm:$0xff]
        %v1053 = vld [vmem:[#allocation10 + $0x8c] sm:$0xf]
        %v1054 = vld [vmem:[#allocation10 + $0x90] sm:$0xff]
        %v1055 = vld [vmem:[#allocation10 + $0x98] sm:$0xf]
        %v1056 = vld [vmem:[#allocation10 + $0x9c] sm:$0xff]
        %v1057 = vld [vmem:[#allocation10 + $0xa4] sm:$0xf]
        %v1058 = vld [vmem:[#allocation10 + $0xa8] sm:$0xff]
        %v1059 = vld [vmem:[#allocation10 + $0xb0] sm:$0xf]
        %v1060 = vld [vmem:[#allocation10 + $0xb4] sm:$0xff]
        %v1061 = vld [vmem:[#allocation10 + $0xbc] sm:$0xf]
        %v1062 = vld [vmem:[#allocation10 + $0xc0] sm:$0xff]
        %v1063 = vld [vmem:[#allocation10 + $0xc8] sm:$0xf]
        %v1064 = vld [vmem:[#allocation10 + $0xcc] sm:$0xff]
        %v1065 = vld [vmem:[#allocation10 + $0xd4] sm:$0xf]
        %v1066 = vld [vmem:[#allocation10 + $0xd8] sm:$0xff]
        %v1067 = vld [vmem:[#allocation10 + $0xe0] sm:$0xf]
        %v1068 = vld [vmem:[#allocation10 + $0xe4] sm:$0xff]
        %v1069 = vld [vmem:[#allocation10 + $0xec] sm:$0xf]
        %v1070 = vld [vmem:[#allocation10 + $0xf0] sm:$0xff]
        %v1071 = vld [vmem:[#allocation10 + $0xf8] sm:$0xf]
        %v1072 = vld [vmem:[#allocation10 + $0xfc] sm:$0xff]
        %v1073 = vld [vmem:[#allocation10 + $0x104] sm:$0xf]
        %v1074 = vld [vmem:[#allocation10 + $0x108] sm:$0xff]
        %v1075 = vld [vmem:[#allocation10 + $0x110] sm:$0xf]
        %v1076 = vld [vmem:[#allocation10 + $0x114] sm:$0xff]
        %v1077 = vld [vmem:[#allocation10 + $0x11c] sm:$0xf]
        %v1078 = vld [vmem:[#allocation10 + $0x120] sm:$0xff]
        %v1079 = vld [vmem:[#allocation10 + $0x128] sm:$0xf]
        %v1080 = vld [vmem:[#allocation10 + $0x12c] sm:$0xff]
        %v1081 = vld [vmem:[#allocation10 + $0x134] sm:$0xf]
        %v1082 = vld [vmem:[#allocation10 + $0x138] sm:$0xff]
        %v1083 = vld [vmem:[#allocation10 + $0x140] sm:$0xf]
        %v1084 = vld [vmem:[#allocation10 + $0x144] sm:$0xff]
        %v1085 = vld [vmem:[#allocation10 + $0x14c] sm:$0xf]
        %v1086 = vld [vmem:[#allocation10 + $0x150] sm:$0xff]
        %v1087 = vld [vmem:[#allocation10 + $0x158] sm:$0xf]
        %v1088 = vld [vmem:[#allocation10 + $0x15c] sm:$0xff]
        %v1089 = vld [vmem:[#allocation10 + $0x164] sm:$0xf]
        %v1090 = vld [vmem:[#allocation10 + $0x168] sm:$0xff]
        %v1091 = vld [vmem:[#allocation10 + $0x170] sm:$0xf]
        %v1092 = vld [vmem:[#allocation10 + $0x174] sm:$0xff]
        %v1093 = vld [vmem:[#allocation10 + $0x17c] sm:$0xf]
        %v1094 = vld [vmem:[#allocation10 + $0x180] sm:$0xff]
        %v1095 = vld [vmem:[#allocation10 + $0x188] sm:$0xf]
        %v1096 = vld [vmem:[#allocation10 + $0x18c] sm:$0xff]
        %v1097 = vld [vmem:[#allocation10 + $0x194] sm:$0xf]
        %v1098 = vld [vmem:[#allocation10 + $0x198] sm:$0xff]
        %v1099 = vld [vmem:[#allocation10 + $0x1a0] sm:$0xf]
        %v1100 = vld [vmem:[#allocation10 + $0x1a4] sm:$0xff]
        %v1101 = vld [vmem:[#allocation10 + $0x1ac] sm:$0xf]
        %v1102 = vld [vmem:[#allocation10 + $0x1b0] sm:$0xff]
        %v1103 = vld [vmem:[#allocation10 + $0x1b8] sm:$0xf]
        %v1104 = vld [vmem:[#allocation10 + $0x1bc] sm:$0xff]
        %v1105 = vld [vmem:[#allocation10 + $0x1c4] sm:$0xf]
        %v1106 = vld [vmem:[#allocation10 + $0x1c8] sm:$0xff]
        %v1107 = vld [vmem:[#allocation10 + $0x1d0] sm:$0xf]
        %v1108 = vld [vmem:[#allocation10 + $0x1d4] sm:$0xff]
        %v1109 = vld [vmem:[#allocation10 + $0x1dc] sm:$0xf]
        %v1110 = vld [vmem:[#allocation10 + $0x1e0] sm:$0xff]
        %v1111 = vld [vmem:[#allocation10 + $0x1e8] sm:$0xf]
        %v1112 = vld [vmem:[#allocation10 + $0x1ec] sm:$0xff]
        %v1113 = vld [vmem:[#allocation10 + $0x1f4] sm:$0xf]
        %v1114 = vld [vmem:[#allocation10 + $0x1f8] sm:$0xff]
        %v1115 = vld [vmem:[#allocation10 + $0x200] sm:$0xf]
        %v1116 = vld [vmem:[#allocation10 + $0x204] sm:$0xff]
        %v1117 = vld [vmem:[#allocation10 + $0x20c] sm:$0xf]
        %v1118 = vld [vmem:[#allocation10 + $0x210] sm:$0xff]
        %v1119 = vld [vmem:[#allocation10 + $0x218] sm:$0xf]
        %v1120 = vld [vmem:[#allocation10 + $0x21c] sm:$0xff]
        %v1121 = vld [vmem:[#allocation10 + $0x224] sm:$0xf]
        %v1122 = vld [vmem:[#allocation10 + $0x228] sm:$0xff]
        %v1123 = vld [vmem:[#allocation10 + $0x230] sm:$0xf]
        %v1124 = vld [vmem:[#allocation10 + $0x234] sm:$0xff]
        %v1125 = vld [vmem:[#allocation10 + $0x23c] sm:$0xf]
        %v1222 = vunpack.c.l.b16 %v1030
        %v1223 = vunpack.c.h.b16 %v1030
        %v1224 = vunpack.c.l.b16 %v1031
        %v1225 = vunpack.c.l.b16 %v1032
        %v1226 = vunpack.c.h.b16 %v1032
        %v1227 = vunpack.c.l.b16 %v1033
        %v1228 = vunpack.c.l.b16 %v1034
        %v1229 = vunpack.c.h.b16 %v1034
        %v1230 = vunpack.c.l.b16 %v1035
        %v1231 = vunpack.c.l.b16 %v1036
        %v1232 = vunpack.c.h.b16 %v1036
        %v1233 = vunpack.c.l.b16 %v1037
        %v1234 = vunpack.c.l.b16 %v1038
        %v1235 = vunpack.c.h.b16 %v1038
        %v1236 = vunpack.c.l.b16 %v1039
        %v1237 = vunpack.c.l.b16 %v1040
        %v1238 = vunpack.c.h.b16 %v1040
        %v1239 = vunpack.c.l.b16 %v1041
        %v1240 = vunpack.c.l.b16 %v1042
        %v1241 = vunpack.c.h.b16 %v1042
        %v1242 = vunpack.c.l.b16 %v1043
        %v1243 = vunpack.c.l.b16 %v1044
        %v1244 = vunpack.c.h.b16 %v1044
        %v1245 = vunpack.c.l.b16 %v1045
        %v1246 = vunpack.c.l.b16 %v1046
        %v1247 = vunpack.c.h.b16 %v1046
        %v1248 = vunpack.c.l.b16 %v1047
        %v1249 = vunpack.c.l.b16 %v1048
        %v1250 = vunpack.c.h.b16 %v1048
        %v1251 = vunpack.c.l.b16 %v1049
        %v1252 = vunpack.c.l.b16 %v1050
        %v1253 = vunpack.c.h.b16 %v1050
        %v1254 = vunpack.c.l.b16 %v1051
        %v1255 = vunpack.c.l.b16 %v1052
        %v1256 = vunpack.c.h.b16 %v1052
        %v1257 = vunpack.c.l.b16 %v1053
        %v1258 = vunpack.c.l.b16 %v1054
        %v1259 = vunpack.c.h.b16 %v1054
        %v1260 = vunpack.c.l.b16 %v1055
        %v1261 = vunpack.c.l.b16 %v1056
        %v1262 = vunpack.c.h.b16 %v1056
        %v1263 = vunpack.c.l.b16 %v1057
        %v1264 = vunpack.c.l.b16 %v1058
        %v1265 = vunpack.c.h.b16 %v1058
        %v1266 = vunpack.c.l.b16 %v1059
        %v1267 = vunpack.c.l.b16 %v1060
        %v1268 = vunpack.c.h.b16 %v1060
        %v1269 = vunpack.c.l.b16 %v1061
        %v1270 = vunpack.c.l.b16 %v1062
        %v1271 = vunpack.c.h.b16 %v1062
        %v1272 = vunpack.c.l.b16 %v1063
        %v1273 = vunpack.c.l.b16 %v1064
        %v1274 = vunpack.c.h.b16 %v1064
        %v1275 = vunpack.c.l.b16 %v1065
        %v1276 = vunpack.c.l.b16 %v1066
        %v1277 = vunpack.c.h.b16 %v1066
        %v1278 = vunpack.c.l.b16 %v1067
        %v1279 = vunpack.c.l.b16 %v1068
        %v1280 = vunpack.c.h.b16 %v1068
        %v1281 = vunpack.c.l.b16 %v1069
        %v1282 = vunpack.c.l.b16 %v1070
        %v1283 = vunpack.c.h.b16 %v1070
        %v1284 = vunpack.c.l.b16 %v1071
        %v1285 = vunpack.c.l.b16 %v1072
        %v1286 = vunpack.c.h.b16 %v1072
        %v1287 = vunpack.c.l.b16 %v1073
        %v1288 = vunpack.c.l.b16 %v1074
        %v1289 = vunpack.c.h.b16 %v1074
        %v1290 = vunpack.c.l.b16 %v1075
        %v1291 = vunpack.c.l.b16 %v1076
        %v1292 = vunpack.c.h.b16 %v1076
        %v1293 = vunpack.c.l.b16 %v1077
        %v1294 = vunpack.c.l.b16 %v1078
        %v1295 = vunpack.c.h.b16 %v1078
        %v1296 = vunpack.c.l.b16 %v1079
        %v1297 = vunpack.c.l.b16 %v1080
        %v1298 = vunpack.c.h.b16 %v1080
        %v1299 = vunpack.c.l.b16 %v1081
        %v1300 = vunpack.c.l.b16 %v1082
        %v1301 = vunpack.c.h.b16 %v1082
        %v1302 = vunpack.c.l.b16 %v1083
        %v1303 = vunpack.c.l.b16 %v1084
        %v1304 = vunpack.c.h.b16 %v1084
        %v1305 = vunpack.c.l.b16 %v1085
        %v1306 = vunpack.c.l.b16 %v1086
        %v1307 = vunpack.c.h.b16 %v1086
        %v1308 = vunpack.c.l.b16 %v1087
        %v1309 = vunpack.c.l.b16 %v1088
        %v1310 = vunpack.c.h.b16 %v1088
        %v1311 = vunpack.c.l.b16 %v1089
        %v1312 = vunpack.c.l.b16 %v1090
        %v1313 = vunpack.c.h.b16 %v1090
        %v1314 = vunpack.c.l.b16 %v1091
        %v1315 = vunpack.c.l.b16 %v1092
        %v1316 = vunpack.c.h.b16 %v1092
        %v1317 = vunpack.c.l.b16 %v1093
        %v1318 = vunpack.c.l.b16 %v1094
        %v1319 = vunpack.c.h.b16 %v1094
        %v1320 = vunpack.c.l.b16 %v1095
        %v1321 = vunpack.c.l.b16 %v1096
        %v1322 = vunpack.c.h.b16 %v1096
        %v1323 = vunpack.c.l.b16 %v1097
        %v1324 = vunpack.c.l.b16 %v1098
        %v1325 = vunpack.c.h.b16 %v1098
        %v1326 = vunpack.c.l.b16 %v1099
        %v1327 = vunpack.c.l.b16 %v1100
        %v1328 = vunpack.c.h.b16 %v1100
        %v1329 = vunpack.c.l.b16 %v1101
        %v1330 = vunpack.c.l.b16 %v1102
        %v1331 = vunpack.c.h.b16 %v1102
        %v1332 = vunpack.c.l.b16 %v1103
        %v1333 = vunpack.c.l.b16 %v1104
        %v1334 = vunpack.c.h.b16 %v1104
        %v1335 = vunpack.c.l.b16 %v1105
        %v1336 = vunpack.c.l.b16 %v1106
        %v1337 = vunpack.c.h.b16 %v1106
        %v1338 = vunpack.c.l.b16 %v1107
        %v1339 = vunpack.c.l.b16 %v1108
        %v1340 = vunpack.c.h.b16 %v1108
        %v1341 = vunpack.c.l.b16 %v1109
        %v1342 = vunpack.c.l.b16 %v1110
        %v1343 = vunpack.c.h.b16 %v1110
        %v1344 = vunpack.c.l.b16 %v1111
        %v1345 = vunpack.c.l.b16 %v1112
        %v1346 = vunpack.c.h.b16 %v1112
        %v1347 = vunpack.c.l.b16 %v1113
        %v1348 = vunpack.c.l.b16 %v1114
        %v1349 = vunpack.c.h.b16 %v1114
        %v1350 = vunpack.c.l.b16 %v1115
        %v1351 = vunpack.c.l.b16 %v1116
        %v1352 = vunpack.c.h.b16 %v1116
        %v1353 = vunpack.c.l.b16 %v1117
        %v1354 = vunpack.c.l.b16 %v1118
        %v1355 = vunpack.c.h.b16 %v1118
        %v1356 = vunpack.c.l.b16 %v1119
        %v1357 = vunpack.c.l.b16 %v1120
        %v1358 = vunpack.c.h.b16 %v1120
        %v1359 = vunpack.c.l.b16 %v1121
        %v1360 = vunpack.c.l.b16 %v1122
        %v1361 = vunpack.c.h.b16 %v1122
        %v1362 = vunpack.c.l.b16 %v1123
        %v1363 = vunpack.c.l.b16 %v1124
        %v1364 = vunpack.c.h.b16 %v1124
        %v1365 = vunpack.c.l.b16 %v1125
        %v1366 = vpack.c.b16 %v1225, %v1222
        %v1367 = vpack.c.b16 %v1226, %v1223
        %v1368 = vpack.c.b16 %v1227, %v1224
        %v1369 = vpack.c.b16 %v1231, %v1228
        %v1370 = vpack.c.b16 %v1232, %v1229
        %v1371 = vpack.c.b16 %v1233, %v1230
        %v1372 = vpack.c.b16 %v1237, %v1234
        %v1373 = vpack.c.b16 %v1238, %v1235
        %v1374 = vpack.c.b16 %v1239, %v1236
        %v1375 = vpack.c.b16 %v1243, %v1240
        %v1376 = vpack.c.b16 %v1244, %v1241
        %v1377 = vpack.c.b16 %v1245, %v1242
        %v1378 = vpack.c.b16 %v1249, %v1246
        %v1379 = vpack.c.b16 %v1250, %v1247
        %v1380 = vpack.c.b16 %v1251, %v1248
        %v1381 = vpack.c.b16 %v1255, %v1252
        %v1382 = vpack.c.b16 %v1256, %v1253
        %v1383 = vpack.c.b16 %v1257, %v1254
        %v1384 = vpack.c.b16 %v1261, %v1258
        %v1385 = vpack.c.b16 %v1262, %v1259
        %v1386 = vpack.c.b16 %v1263, %v1260
        %v1387 = vpack.c.b16 %v1267, %v1264
        %v1388 = vpack.c.b16 %v1268, %v1265
        %v1389 = vpack.c.b16 %v1269, %v1266
        %v1390 = vpack.c.b16 %v1273, %v1270
        %v1391 = vpack.c.b16 %v1274, %v1271
        %v1392 = vpack.c.b16 %v1275, %v1272
        %v1393 = vpack.c.b16 %v1279, %v1276
        %v1394 = vpack.c.b16 %v1280, %v1277
        %v1395 = vpack.c.b16 %v1281, %v1278
        %v1396 = vpack.c.b16 %v1285, %v1282
        %v1397 = vpack.c.b16 %v1286, %v1283
        %v1398 = vpack.c.b16 %v1287, %v1284
        %v1399 = vpack.c.b16 %v1291, %v1288
        %v1400 = vpack.c.b16 %v1292, %v1289
        %v1401 = vpack.c.b16 %v1293, %v1290
        %v1402 = vpack.c.b16 %v1297, %v1294
        %v1403 = vpack.c.b16 %v1298, %v1295
        %v1404 = vpack.c.b16 %v1299, %v1296
        %v1405 = vpack.c.b16 %v1303, %v1300
        %v1406 = vpack.c.b16 %v1304, %v1301
        %v1407 = vpack.c.b16 %v1305, %v1302
        %v1408 = vpack.c.b16 %v1309, %v1306
        %v1409 = vpack.c.b16 %v1310, %v1307
        %v1410 = vpack.c.b16 %v1311, %v1308
        %v1411 = vpack.c.b16 %v1315, %v1312
        %v1412 = vpack.c.b16 %v1316, %v1313
        %v1413 = vpack.c.b16 %v1317, %v1314
        %v1414 = vpack.c.b16 %v1321, %v1318
        %v1415 = vpack.c.b16 %v1322, %v1319
        %v1416 = vpack.c.b16 %v1323, %v1320
        %v1417 = vpack.c.b16 %v1327, %v1324
        %v1418 = vpack.c.b16 %v1328, %v1325
        %v1419 = vpack.c.b16 %v1329, %v1326
        %v1420 = vpack.c.b16 %v1333, %v1330
        %v1421 = vpack.c.b16 %v1334, %v1331
        %v1422 = vpack.c.b16 %v1335, %v1332
        %v1423 = vpack.c.b16 %v1339, %v1336
        %v1424 = vpack.c.b16 %v1340, %v1337
        %v1425 = vpack.c.b16 %v1341, %v1338
        %v1426 = vpack.c.b16 %v1345, %v1342
        %v1427 = vpack.c.b16 %v1346, %v1343
        %v1428 = vpack.c.b16 %v1347, %v1344
        %v1429 = vpack.c.b16 %v1351, %v1348
        %v1430 = vpack.c.b16 %v1352, %v1349
        %v1431 = vpack.c.b16 %v1353, %v1350
        %v1432 = vpack.c.b16 %v1357, %v1354
        %v1433 = vpack.c.b16 %v1358, %v1355
        %v1434 = vpack.c.b16 %v1359, %v1356
        %v1435 = vpack.c.b16 %v1363, %v1360
        %v1436 = vpack.c.b16 %v1364, %v1361
        %v1437 = vpack.c.b16 %v1365, %v1362
        %1510 = vmatprep.subr.bf16.mxu0 %v1367
        %1511 = vmatpush1.bf16.msra.mxu0 %v1366
        %1512 = vmatprep.subr.bf16.mxu0 %v1370
        %1513 = vmatpush1.bf16.msra.mxu0 %v1369
        %1514 = vmatprep.subr.bf16.mxu0 %v1373
        %1515 = vmatpush1.bf16.msra.mxu0 %v1372
        %1516 = vmatprep.subr.bf16.mxu0 %v1376
        %1517 = vmatpush1.bf16.msra.mxu0 %v1375
        %1518 = vmatprep.subr.bf16.mxu0 %v1379
        %1519 = vmatpush1.bf16.msra.mxu0 %v1378
        %1520 = vmatprep.subr.bf16.mxu0 %v1382
        %1521 = vmatpush1.bf16.msra.mxu0 %v1381
        %1522 = vmatprep.subr.bf16.mxu0 %v1385
        %1523 = vmatpush1.bf16.msra.mxu0 %v1384
        %1524 = vmatprep.subr.bf16.mxu0 %v1388
        %1525 = vmatpush1.bf16.msra.mxu0 %v1387
        %1526 = vmatprep.subr.bf16.mxu0 %v1391
        %1527 = vmatpush1.bf16.msra.mxu0 %v1390
        %1528 = vmatprep.subr.bf16.mxu0 %v1394
        %1529 = vmatpush1.bf16.msra.mxu0 %v1393
        %1530 = vmatprep.subr.bf16.mxu0 %v1397
        %1531 = vmatpush1.bf16.msra.mxu0 %v1396
        %1532 = vmatprep.subr.bf16.mxu0 %v1400
        %1533 = vmatpush1.bf16.msra.mxu0 %v1399
        %1534 = vmatprep.subr.bf16.mxu0 %v1403
        %1535 = vmatpush1.bf16.msra.mxu0 %v1402
        %1536 = vmatprep.subr.bf16.mxu0 %v1406
        %1537 = vmatpush1.bf16.msra.mxu0 %v1405
        %1538 = vmatprep.subr.bf16.mxu0 %v1409
        %1539 = vmatpush1.bf16.msra.mxu0 %v1408
        %1540 = vmatprep.subr.bf16.mxu0 %v1412
        %1541 = vmatpush1.bf16.msra.mxu0 %v1411
        %1542 = vmatprep.mubr.bf16.mxu0 %v983
        %1543 = vmatmul.mubr.bf16.gmra.mrb[0].mxu0 %v982
        %v1544 = vpop.f32.mrb[0].mxu0
        %v1545 = vadd.f32 0.0, %v1544
        %v1546 = vpop.f32.mrb[0].mxu0
        %v1547 = vadd.f32 0.0, %v1546
        %v1548 = vpop.f32.mrb[0].mxu0
        %v1549 = vadd.f32 0.0, %v1548
        %v1550 = vpop.f32.mrb[0].mxu0
        %v1551 = vadd.f32 0.0, %v1550
        %1552 = vmatprep.mubr.bf16.mxu0 %v986
        %1553 = vmatmul.mubr.bf16.gmra.mrb[0].mxu0 %v985
        %v1554 = vpop.f32.mrb[0].mxu0
        %v1555 = vadd.f32 0.0, %v1554
        %v1556 = vpop.f32.mrb[0].mxu0
        %v1557 = vadd.f32 0.0, %v1556
        %v1558 = vpop.f32.mrb[0].mxu0
        %v1559 = vadd.f32 0.0, %v1558
        %v1560 = vpop.f32.mrb[0].mxu0
        %v1561 = vadd.f32 0.0, %v1560
        %1562 = vmatprep.mubr.bf16.mxu0 %v989
        %1563 = vmatmul.mubr.bf16.gmra.mrb[0].mxu0 %v988
        %v1564 = vpop.f32.mrb[0].mxu0
        %v1565 = vadd.f32 0.0, %v1564
        %v1566 = vpop.f32.mrb[0].mxu0
        %v1567 = vadd.f32 0.0, %v1566
        %v1568 = vpop.f32.mrb[0].mxu0
        %v1569 = vadd.f32 0.0, %v1568
        %v1570 = vpop.f32.mrb[0].mxu0
        %v1571 = vadd.f32 0.0, %v1570
        %1572 = vmatprep.mubr.bf16.mxu0 %v992
        %1573 = vmatmul.mubr.bf16.gmra.mrb[0].mxu0 %v991
        %v1574 = vpop.f32.mrb[0].mxu0
        %v1575 = vadd.f32 0.0, %v1574
        %v1576 = vpop.f32.mrb[0].mxu0
        %v1577 = vadd.f32 0.0, %v1576
        %v1578 = vpop.f32.mrb[0].mxu0
        %v1579 = vadd.f32 0.0, %v1578
        %v1580 = vpop.f32.mrb[0].mxu0
        %v1581 = vadd.f32 0.0, %v1580
        %1582 = vmatprep.mubr.bf16.mxu0 %v995
        %1583 = vmatmul.mubr.bf16.gmra.mrb[0].mxu0 %v994
        %v1584 = vpop.f32.mrb[0].mxu0
        %v1585 = vadd.f32 0.0, %v1584
        %v1586 = vpop.f32.mrb[0].mxu0
        %v1587 = vadd.f32 0.0, %v1586
        %v1588 = vpop.f32.mrb[0].mxu0
        %v1589 = vadd.f32 0.0, %v1588
        %v1590 = vpop.f32.mrb[0].mxu0
        %v1591 = vadd.f32 0.0, %v1590
        %1592 = vmatprep.mubr.bf16.mxu0 %v998
        %1593 = vmatmul.mubr.bf16.gmra.mrb[0].mxu0 %v997
        %v1594 = vpop.f32.mrb[0].mxu0
        %v1595 = vadd.f32 0.0, %v1594
        %v1596 = vpop.f32.mrb[0].mxu0
        %v1597 = vadd.f32 0.0, %v1596
        %v1598 = vpop.f32.mrb[0].mxu0
        %v1599 = vadd.f32 0.0, %v1598
        %v1600 = vpop.f32.mrb[0].mxu0
        %v1601 = vadd.f32 0.0, %v1600
        %1602 = vmatprep.mubr.bf16.mxu0 %v1001
        %1603 = vmatmul.mubr.bf16.gmra.mrb[0].mxu0 %v1000
        %v1604 = vpop.f32.mrb[0].mxu0
        %v1605 = vadd.f32 0.0, %v1604
        %v1606 = vpop.f32.mrb[0].mxu0
        %v1607 = vadd.f32 0.0, %v1606
        %v1608 = vpop.f32.mrb[0].mxu0
        %v1609 = vadd.f32 0.0, %v1608
        %v1610 = vpop.f32.mrb[0].mxu0
        %v1611 = vadd.f32 0.0, %v1610
        %1612 = vmatprep.mubr.bf16.mxu0 %v1004
        %1613 = vmatmul.mubr.bf16.gmra.mrb[0].mxu0 %v1003
        %v1614 = vpop.f32.mrb[0].mxu0
        %v1615 = vadd.f32 0.0, %v1614
        %v1616 = vpop.f32.mrb[0].mxu0
        %v1617 = vadd.f32 0.0, %v1616
        %v1618 = vpop.f32.mrb[0].mxu0
        %v1619 = vadd.f32 0.0, %v1618
        %v1620 = vpop.f32.mrb[0].mxu0
        %v1621 = vadd.f32 0.0, %v1620
        %1622 = vmatprep.mubr.bf16.mxu0 %v1007
        %1623 = vmatmul.mubr.bf16.gmra.mrb[0].mxu0 %v1006
        %v1624 = vpop.f32.mrb[0].mxu0
        %v1625 = vadd.f32 0.0, %v1624
        %v1626 = vpop.f32.mrb[0].mxu0
        %v1627 = vadd.f32 0.0, %v1626
        %v1628 = vpop.f32.mrb[0].mxu0
        %v1629 = vadd.f32 0.0, %v1628
        %v1630 = vpop.f32.mrb[0].mxu0
        %v1631 = vadd.f32 0.0, %v1630
        %1632 = vmatprep.mubr.bf16.mxu0 %v1010
        %1633 = vmatmul.mubr.bf16.gmra.mrb[0].mxu0 %v1009
        %v1634 = vpop.f32.mrb[0].mxu0
        %v1635 = vadd.f32 0.0, %v1634
        %v1636 = vpop.f32.mrb[0].mxu0
        %v1637 = vadd.f32 0.0, %v1636
        %v1638 = vpop.f32.mrb[0].mxu0
        %v1639 = vadd.f32 0.0, %v1638
        %v1640 = vpop.f32.mrb[0].mxu0
        %v1641 = vadd.f32 0.0, %v1640
        %1642 = vmatprep.mubr.bf16.mxu0 %v1013
        %1643 = vmatmul.mubr.bf16.gmra.mrb[0].mxu0 %v1012
        %v1644 = vpop.f32.mrb[0].mxu0
        %v1645 = vadd.f32 0.0, %v1644
        %v1646 = vpop.f32.mrb[0].mxu0
        %v1647 = vadd.f32 0.0, %v1646
        %v1648 = vpop.f32.mrb[0].mxu0
        %v1649 = vadd.f32 0.0, %v1648
        %v1650 = vpop.f32.mrb[0].mxu0
        %v1651 = vadd.f32 0.0, %v1650
        %1652 = vmatprep.mubr.bf16.mxu0 %v1016
        %1653 = vmatmul.mubr.bf16.gmra.mrb[0].mxu0 %v1015
        %v1654 = vpop.f32.mrb[0].mxu0
        %v1655 = vadd.f32 0.0, %v1654
        %v1656 = vpop.f32.mrb[0].mxu0
        %v1657 = vadd.f32 0.0, %v1656
        %v1658 = vpop.f32.mrb[0].mxu0
        %v1659 = vadd.f32 0.0, %v1658
        %v1660 = vpop.f32.mrb[0].mxu0
        %v1661 = vadd.f32 0.0, %v1660
        %1662 = vmatprep.mubr.bf16.mxu0 %v1019
        %1663 = vmatmul.mubr.bf16.gmra.mrb[0].mxu0 %v1018
        %v1664 = vpop.f32.mrb[0].mxu0
        %v1665 = vadd.f32 0.0, %v1664
        %v1666 = vpop.f32.mrb[0].mxu0
        %v1667 = vadd.f32 0.0, %v1666
        %v1668 = vpop.f32.mrb[0].mxu0
        %v1669 = vadd.f32 0.0, %v1668
        %v1670 = vpop.f32.mrb[0].mxu0
        %v1671 = vadd.f32 0.0, %v1670
        %1672 = vmatprep.mubr.bf16.mxu0 %v1022
        %1673 = vmatmul.mubr.bf16.gmra.mrb[0].mxu0 %v1021
        %v1674 = vpop.f32.mrb[0].mxu0
        %v1675 = vadd.f32 0.0, %v1674
        %v1676 = vpop.f32.mrb[0].mxu0
        %v1677 = vadd.f32 0.0, %v1676
        %v1678 = vpop.f32.mrb[0].mxu0
        %v1679 = vadd.f32 0.0, %v1678
        %v1680 = vpop.f32.mrb[0].mxu0
        %v1681 = vadd.f32 0.0, %v1680
        %1682 = vmatprep.mubr.bf16.mxu0 %v1025
        %1683 = vmatmul.mubr.bf16.gmra.mrb[0].mxu0 %v1024
        %v1684 = vpop.f32.mrb[0].mxu0
        %v1685 = vadd.f32 0.0, %v1684
        %v1686 = vpop.f32.mrb[0].mxu0
        %v1687 = vadd.f32 0.0, %v1686
        %v1688 = vpop.f32.mrb[0].mxu0
        %v1689 = vadd.f32 0.0, %v1688
        %v1690 = vpop.f32.mrb[0].mxu0
        %v1691 = vadd.f32 0.0, %v1690
        %1692 = vmatprep.mubr.bf16.mxu0 %v1028
        %1693 = vmatmul.mubr.bf16.gmra.mrb[0].mxu0 %v1027
        %v1694 = vpop.f32.mrb[0].mxu0
        %v1695 = vadd.f32 0.0, %v1694
        %v1696 = vpop.f32.mrb[0].mxu0
        %v1697 = vadd.f32 0.0, %v1696
        %v1698 = vpop.f32.mrb[0].mxu0
        %v1699 = vadd.f32 0.0, %v1698
        %v1700 = vpop.f32.mrb[0].mxu0
        %v1701 = vadd.f32 0.0, %v1700
        %1702 = vdwg.mxu0
        %1703 = vmatprep.subr.bf16.mxu0 %v1415
        %1704 = vmatpush1.bf16.msra.mxu0 %v1414
        %1705 = vmatprep.subr.bf16.mxu0 %v1418
        %1706 = vmatpush1.bf16.msra.mxu0 %v1417
        %1707 = vmatprep.subr.bf16.mxu0 %v1421
        %1708 = vmatpush1.bf16.msra.mxu0 %v1420
        %1709 = vmatprep.subr.bf16.mxu0 %v1424
        %1710 = vmatpush1.bf16.msra.mxu0 %v1423
        %1711 = vmatprep.subr.bf16.mxu0 %v1427
        %1712 = vmatpush1.bf16.msra.mxu0 %v1426
        %1713 = vmatprep.subr.bf16.mxu0 %v1430
        %1714 = vmatpush1.bf16.msra.mxu0 %v1429
        %1715 = vmatprep.subr.bf16.mxu0 %v1433
        %1716 = vmatpush1.bf16.msra.mxu0 %v1432
        %1717 = vmatprep.subr.bf16.mxu0 %v1436
        %1718 = vmatpush1.bf16.msra.mxu0 %v1435
        %1719 = vmatprep.subr.bf16.mxu0 0
        %1720 = vmatpush1.bf16.msra.mxu0 0
        %1721 = vmatprep.subr.bf16.mxu0 0
        %1722 = vmatpush1.bf16.msra.mxu0 0
        %1723 = vmatprep.subr.bf16.mxu0 0
        %1724 = vmatpush1.bf16.msra.mxu0 0
        %1725 = vmatprep.subr.bf16.mxu0 0
        %1726 = vmatpush1.bf16.msra.mxu0 0
        %1727 = vmatprep.subr.bf16.mxu0 0
        %1728 = vmatpush1.bf16.msra.mxu0 0
        %1729 = vmatprep.subr.bf16.mxu0 0
        %1730 = vmatpush1.bf16.msra.mxu0 0
        %1731 = vmatprep.subr.bf16.mxu0 0
        %1732 = vmatpush1.bf16.msra.mxu0 0
        %1733 = vmatprep.subr.bf16.mxu0 0
        %1734 = vmatpush1.bf16.msra.mxu0 0
        %1735 = vmatprep.mubr.bf16.mxu0 0
        %1736 = vmatmul.mubr.bf16.gmra.mrb[0].mxu0 %v984
        %v1737 = vpop.f32.mrb[0].mxu0
        %v1738 = vadd.f32 %v1545, %v1737
        %v1739 = vpop.f32.mrb[0].mxu0
        %v1740 = vadd.f32 %v1547, %v1739
        %v1741 = vpop.f32.mrb[0].mxu0
        %v1742 = vadd.f32 %v1549, %v1741
        %v1743 = vpop.f32.mrb[0].mxu0
        %v1744 = vadd.f32 %v1551, %v1743
        %1745 = vmatprep.mubr.bf16.mxu0 0
        %1746 = vmatmul.mubr.bf16.gmra.mrb[0].mxu0 %v987
        %v1747 = vpop.f32.mrb[0].mxu0
        %v1748 = vadd.f32 %v1555, %v1747
        %v1749 = vpop.f32.mrb[0].mxu0
        %v1750 = vadd.f32 %v1557, %v1749
        %v1751 = vpop.f32.mrb[0].mxu0
        %v1752 = vadd.f32 %v1559, %v1751
        %v1753 = vpop.f32.mrb[0].mxu0
        %v1754 = vadd.f32 %v1561, %v1753
        %1755 = vmatprep.mubr.bf16.mxu0 0
        %1756 = vmatmul.mubr.bf16.gmra.mrb[0].mxu0 %v990
        %v1757 = vpop.f32.mrb[0].mxu0
        %v1758 = vadd.f32 %v1565, %v1757
        %v1759 = vpop.f32.mrb[0].mxu0
        %v1760 = vadd.f32 %v1567, %v1759
        %v1761 = vpop.f32.mrb[0].mxu0
        %v1762 = vadd.f32 %v1569, %v1761
        %v1763 = vpop.f32.mrb[0].mxu0
        %v1764 = vadd.f32 %v1571, %v1763
        %1765 = vmatprep.mubr.bf16.mxu0 0
        %1766 = vmatmul.mubr.bf16.gmra.mrb[0].mxu0 %v993
        %v1767 = vpop.f32.mrb[0].mxu0
        %v1768 = vadd.f32 %v1575, %v1767
        %v1769 = vpop.f32.mrb[0].mxu0
        %v1770 = vadd.f32 %v1577, %v1769
        %v1771 = vpop.f32.mrb[0].mxu0
        %v1772 = vadd.f32 %v1579, %v1771
        %v1773 = vpop.f32.mrb[0].mxu0
        %v1774 = vadd.f32 %v1581, %v1773
        %1775 = vmatprep.mubr.bf16.mxu0 0
        %1776 = vmatmul.mubr.bf16.gmra.mrb[0].mxu0 %v996
        %v1777 = vpop.f32.mrb[0].mxu0
        %v1778 = vadd.f32 %v1585, %v1777
        %v1779 = vpop.f32.mrb[0].mxu0
        %v1780 = vadd.f32 %v1587, %v1779
        %v1781 = vpop.f32.mrb[0].mxu0
        %v1782 = vadd.f32 %v1589, %v1781
        %v1783 = vpop.f32.mrb[0].mxu0
        %v1784 = vadd.f32 %v1591, %v1783
        %1785 = vmatprep.mubr.bf16.mxu0 0
        %1786 = vmatmul.mubr.bf16.gmra.mrb[0].mxu0 %v999
        %v1787 = vpop.f32.mrb[0].mxu0
        %v1788 = vadd.f32 %v1595, %v1787
        %v1789 = vpop.f32.mrb[0].mxu0
        %v1790 = vadd.f32 %v1597, %v1789
        %v1791 = vpop.f32.mrb[0].mxu0
        %v1792 = vadd.f32 %v1599, %v1791
        %v1793 = vpop.f32.mrb[0].mxu0
        %v1794 = vadd.f32 %v1601, %v1793
        %1795 = vmatprep.mubr.bf16.mxu0 0
        %1796 = vmatmul.mubr.bf16.gmra.mrb[0].mxu0 %v1002
        %v1797 = vpop.f32.mrb[0].mxu0
        %v1798 = vadd.f32 %v1605, %v1797
        %v1799 = vpop.f32.mrb[0].mxu0
        %v1800 = vadd.f32 %v1607, %v1799
        %v1801 = vpop.f32.mrb[0].mxu0
        %v1802 = vadd.f32 %v1609, %v1801
        %v1803 = vpop.f32.mrb[0].mxu0
        %v1804 = vadd.f32 %v1611, %v1803
        %1805 = vmatprep.mubr.bf16.mxu0 0
        %1806 = vmatmul.mubr.bf16.gmra.mrb[0].mxu0 %v1005
        %v1807 = vpop.f32.mrb[0].mxu0
        %v1808 = vadd.f32 %v1615, %v1807
        %v1809 = vpop.f32.mrb[0].mxu0
        %v1810 = vadd.f32 %v1617, %v1809
        %v1811 = vpop.f32.mrb[0].mxu0
        %v1812 = vadd.f32 %v1619, %v1811
        %v1813 = vpop.f32.mrb[0].mxu0
        %v1814 = vadd.f32 %v1621, %v1813
        %1815 = vmatprep.mubr.bf16.mxu0 0
        %1816 = vmatmul.mubr.bf16.gmra.mrb[0].mxu0 %v1008
        %v1817 = vpop.f32.mrb[0].mxu0
        %v1818 = vadd.f32 %v1625, %v1817
        %v1819 = vpop.f32.mrb[0].mxu0
        %v1820 = vadd.f32 %v1627, %v1819
        %v1821 = vpop.f32.mrb[0].mxu0
        %v1822 = vadd.f32 %v1629, %v1821
        %v1823 = vpop.f32.mrb[0].mxu0
        %v1824 = vadd.f32 %v1631, %v1823
        %1825 = vmatprep.mubr.bf16.mxu0 0
        %1826 = vmatmul.mubr.bf16.gmra.mrb[0].mxu0 %v1011
        %v1827 = vpop.f32.mrb[0].mxu0
        %v1828 = vadd.f32 %v1635, %v1827
        %v1829 = vpop.f32.mrb[0].mxu0
        %v1830 = vadd.f32 %v1637, %v1829
        %v1831 = vpop.f32.mrb[0].mxu0
        %v1832 = vadd.f32 %v1639, %v1831
        %v1833 = vpop.f32.mrb[0].mxu0
        %v1834 = vadd.f32 %v1641, %v1833
        %1835 = vmatprep.mubr.bf16.mxu0 0
        %1836 = vmatmul.mubr.bf16.gmra.mrb[0].mxu0 %v1014
        %v1837 = vpop.f32.mrb[0].mxu0
        %v1838 = vadd.f32 %v1645, %v1837
        %v1839 = vpop.f32.mrb[0].mxu0
        %v1840 = vadd.f32 %v1647, %v1839
        %v1841 = vpop.f32.mrb[0].mxu0
        %v1842 = vadd.f32 %v1649, %v1841
        %v1843 = vpop.f32.mrb[0].mxu0
        %v1844 = vadd.f32 %v1651, %v1843
        %1845 = vmatprep.mubr.bf16.mxu0 0
        %1846 = vmatmul.mubr.bf16.gmra.mrb[0].mxu0 %v1017
        %v1847 = vpop.f32.mrb[0].mxu0
        %v1848 = vadd.f32 %v1655, %v1847
        %v1849 = vpop.f32.mrb[0].mxu0
        %v1850 = vadd.f32 %v1657, %v1849
        %v1851 = vpop.f32.mrb[0].mxu0
        %v1852 = vadd.f32 %v1659, %v1851
        %v1853 = vpop.f32.mrb[0].mxu0
        %v1854 = vadd.f32 %v1661, %v1853
        %1855 = vmatprep.mubr.bf16.mxu0 0
        %1856 = vmatmul.mubr.bf16.gmra.mrb[0].mxu0 %v1020
        %v1857 = vpop.f32.mrb[0].mxu0
        %v1858 = vadd.f32 %v1665, %v1857
        %v1859 = vpop.f32.mrb[0].mxu0
        %v1860 = vadd.f32 %v1667, %v1859
        %v1861 = vpop.f32.mrb[0].mxu0
        %v1862 = vadd.f32 %v1669, %v1861
        %v1863 = vpop.f32.mrb[0].mxu0
        %v1864 = vadd.f32 %v1671, %v1863
        %1865 = vmatprep.mubr.bf16.mxu0 0
        %1866 = vmatmul.mubr.bf16.gmra.mrb[0].mxu0 %v1023
        %v1867 = vpop.f32.mrb[0].mxu0
        %v1868 = vadd.f32 %v1675, %v1867
        %v1869 = vpop.f32.mrb[0].mxu0
        %v1870 = vadd.f32 %v1677, %v1869
        %v1871 = vpop.f32.mrb[0].mxu0
        %v1872 = vadd.f32 %v1679, %v1871
        %v1873 = vpop.f32.mrb[0].mxu0
        %v1874 = vadd.f32 %v1681, %v1873
        %1875 = vmatprep.mubr.bf16.mxu0 0
        %1876 = vmatmul.mubr.bf16.gmra.mrb[0].mxu0 %v1026
        %v1877 = vpop.f32.mrb[0].mxu0
        %v1878 = vadd.f32 %v1685, %v1877
        %v1879 = vpop.f32.mrb[0].mxu0
        %v1880 = vadd.f32 %v1687, %v1879
        %v1881 = vpop.f32.mrb[0].mxu0
        %v1882 = vadd.f32 %v1689, %v1881
        %v1883 = vpop.f32.mrb[0].mxu0
        %v1884 = vadd.f32 %v1691, %v1883
        %1885 = vmatprep.mubr.bf16.mxu0 0
        %1886 = vmatmul.mubr.bf16.gmra.mrb[0].mxu0 %v1029
        %v1887 = vpop.f32.mrb[0].mxu0
        %v1888 = vadd.f32 %v1695, %v1887
        %v1889 = vpop.f32.mrb[0].mxu0
        %v1890 = vadd.f32 %v1697, %v1889
        %v1891 = vpop.f32.mrb[0].mxu0
        %v1892 = vadd.f32 %v1699, %v1891
        %v1893 = vpop.f32.mrb[0].mxu0
        %v1894 = vadd.f32 %v1701, %v1893
        %1895 = vdwg.mxu0
        %1896 = vmatprep.subr.bf16.mxu0 0
        %1897 = vmatpush1.bf16.msra.mxu0 %v1368
        %1898 = vmatprep.subr.bf16.mxu0 0
        %1899 = vmatpush1.bf16.msra.mxu0 %v1371
        %1900 = vmatprep.subr.bf16.mxu0 0
        %1901 = vmatpush1.bf16.msra.mxu0 %v1374
        %1902 = vmatprep.subr.bf16.mxu0 0
        %1903 = vmatpush1.bf16.msra.mxu0 %v1377
        %1904 = vmatprep.subr.bf16.mxu0 0
        %1905 = vmatpush1.bf16.msra.mxu0 %v1380
        %1906 = vmatprep.subr.bf16.mxu0 0
        %1907 = vmatpush1.bf16.msra.mxu0 %v1383
        %1908 = vmatprep.subr.bf16.mxu0 0
        %1909 = vmatpush1.bf16.msra.mxu0 %v1386
        %1910 = vmatprep.subr.bf16.mxu0 0
        %1911 = vmatpush1.bf16.msra.mxu0 %v1389
        %1912 = vmatprep.subr.bf16.mxu0 0
        %1913 = vmatpush1.bf16.msra.mxu0 %v1392
        %1914 = vmatprep.subr.bf16.mxu0 0
        %1915 = vmatpush1.bf16.msra.mxu0 %v1395
        %1916 = vmatprep.subr.bf16.mxu0 0
        %1917 = vmatpush1.bf16.msra.mxu0 %v1398
        %1918 = vmatprep.subr.bf16.mxu0 0
        %1919 = vmatpush1.bf16.msra.mxu0 %v1401
        %1920 = vmatprep.subr.bf16.mxu0 0
        %1921 = vmatpush1.bf16.msra.mxu0 %v1404
        %1922 = vmatprep.subr.bf16.mxu0 0
        %1923 = vmatpush1.bf16.msra.mxu0 %v1407
        %1924 = vmatprep.subr.bf16.mxu0 0
        %1925 = vmatpush1.bf16.msra.mxu0 %v1410
        %1926 = vmatprep.subr.bf16.mxu0 0
        %1927 = vmatpush1.bf16.msra.mxu0 %v1413
        %1928 = vmatprep.mubr.bf16.mxu0 %v983
        %1929 = vmatmul.mubr.bf16.gmra.mrb[0].mxu0 %v982
        %v1930 = vpop.f32.mrb[0].mxu0
        %v1931 = vadd.f32 0.0, %v1930
        %v1932 = vpop.f32.mrb[0].mxu0
        %v1933 = vpop.f32.mrb[0].mxu0
        %v1934 = vadd.f32 0.0, %v1933
        %v1935 = vpop.f32.mrb[0].mxu0
        %1936 = vmatprep.mubr.bf16.mxu0 %v986
        %1937 = vmatmul.mubr.bf16.gmra.mrb[0].mxu0 %v985
        %v1938 = vpop.f32.mrb[0].mxu0
        %v1939 = vadd.f32 0.0, %v1938
        %v1940 = vpop.f32.mrb[0].mxu0
        %v1941 = vpop.f32.mrb[0].mxu0
        %v1942 = vadd.f32 0.0, %v1941
        %v1943 = vpop.f32.mrb[0].mxu0
        %1944 = vmatprep.mubr.bf16.mxu0 %v989
        %1945 = vmatmul.mubr.bf16.gmra.mrb[0].mxu0 %v988
        %v1946 = vpop.f32.mrb[0].mxu0
        %v1947 = vadd.f32 0.0, %v1946
        %v1948 = vpop.f32.mrb[0].mxu0
        %v1949 = vpop.f32.mrb[0].mxu0
        %v1950 = vadd.f32 0.0, %v1949
        %v1951 = vpop.f32.mrb[0].mxu0
        %1952 = vmatprep.mubr.bf16.mxu0 %v992
        %1953 = vmatmul.mubr.bf16.gmra.mrb[0].mxu0 %v991
        %v1954 = vpop.f32.mrb[0].mxu0
        %v1955 = vadd.f32 0.0, %v1954
        %v1956 = vpop.f32.mrb[0].mxu0
        %v1957 = vpop.f32.mrb[0].mxu0
        %v1958 = vadd.f32 0.0, %v1957
        %v1959 = vpop.f32.mrb[0].mxu0
        %1960 = vmatprep.mubr.bf16.mxu0 %v995
        %1961 = vmatmul.mubr.bf16.gmra.mrb[0].mxu0 %v994
        %v1962 = vpop.f32.mrb[0].mxu0
        %v1963 = vadd.f32 0.0, %v1962
        %v1964 = vpop.f32.mrb[0].mxu0
        %v1965 = vpop.f32.mrb[0].mxu0
        %v1966 = vadd.f32 0.0, %v1965
        %v1967 = vpop.f32.mrb[0].mxu0
        %1968 = vmatprep.mubr.bf16.mxu0 %v998
        %1969 = vmatmul.mubr.bf16.gmra.mrb[0].mxu0 %v997
        %v1970 = vpop.f32.mrb[0].mxu0
        %v1971 = vadd.f32 0.0, %v1970
        %v1972 = vpop.f32.mrb[0].mxu0
        %v1973 = vpop.f32.mrb[0].mxu0
        %v1974 = vadd.f32 0.0, %v1973
        %v1975 = vpop.f32.mrb[0].mxu0
        %1976 = vmatprep.mubr.bf16.mxu0 %v1001
        %1977 = vmatmul.mubr.bf16.gmra.mrb[0].mxu0 %v1000
        %v1978 = vpop.f32.mrb[0].mxu0
        %v1979 = vadd.f32 0.0, %v1978
        %v1980 = vpop.f32.mrb[0].mxu0
        %v1981 = vpop.f32.mrb[0].mxu0
        %v1982 = vadd.f32 0.0, %v1981
        %v1983 = vpop.f32.mrb[0].mxu0
        %1984 = vmatprep.mubr.bf16.mxu0 %v1004
        %1985 = vmatmul.mubr.bf16.gmra.mrb[0].mxu0 %v1003
        %v1986 = vpop.f32.mrb[0].mxu0
        %v1987 = vadd.f32 0.0, %v1986
        %v1988 = vpop.f32.mrb[0].mxu0
        %v1989 = vpop.f32.mrb[0].mxu0
        %v1990 = vadd.f32 0.0, %v1989
        %v1991 = vpop.f32.mrb[0].mxu0
        %1992 = vmatprep.mubr.bf16.mxu0 %v1007
        %1993 = vmatmul.mubr.bf16.gmra.mrb[0].mxu0 %v1006
        %v1994 = vpop.f32.mrb[0].mxu0
        %v1995 = vadd.f32 0.0, %v1994
        %v1996 = vpop.f32.mrb[0].mxu0
        %v1997 = vpop.f32.mrb[0].mxu0
        %v1998 = vadd.f32 0.0, %v1997
        %v1999 = vpop.f32.mrb[0].mxu0
        %2000 = vmatprep.mubr.bf16.mxu0 %v1010
        %2001 = vmatmul.mubr.bf16.gmra.mrb[0].mxu0 %v1009
        %v2002 = vpop.f32.mrb[0].mxu0
        %v2003 = vadd.f32 0.0, %v2002
        %v2004 = vpop.f32.mrb[0].mxu0
        %v2005 = vpop.f32.mrb[0].mxu0
        %v2006 = vadd.f32 0.0, %v2005
        %v2007 = vpop.f32.mrb[0].mxu0
        %2008 = vmatprep.mubr.bf16.mxu0 %v1013
        %2009 = vmatmul.mubr.bf16.gmra.mrb[0].mxu0 %v1012
        %v2010 = vpop.f32.mrb[0].mxu0
        %v2011 = vadd.f32 0.0, %v2010
        %v2012 = vpop.f32.mrb[0].mxu0
        %v2013 = vpop.f32.mrb[0].mxu0
        %v2014 = vadd.f32 0.0, %v2013
        %v2015 = vpop.f32.mrb[0].mxu0
        %2016 = vmatprep.mubr.bf16.mxu0 %v1016
        %2017 = vmatmul.mubr.bf16.gmra.mrb[0].mxu0 %v1015
        %v2018 = vpop.f32.mrb[0].mxu0
        %v2019 = vadd.f32 0.0, %v2018
        %v2020 = vpop.f32.mrb[0].mxu0
        %v2021 = vpop.f32.mrb[0].mxu0
        %v2022 = vadd.f32 0.0, %v2021
        %v2023 = vpop.f32.mrb[0].mxu0
        %2024 = vmatprep.mubr.bf16.mxu0 %v1019
        %2025 = vmatmul.mubr.bf16.gmra.mrb[0].mxu0 %v1018
        %v2026 = vpop.f32.mrb[0].mxu0
        %v2027 = vadd.f32 0.0, %v2026
        %v2028 = vpop.f32.mrb[0].mxu0
        %v2029 = vpop.f32.mrb[0].mxu0
        %v2030 = vadd.f32 0.0, %v2029
        %v2031 = vpop.f32.mrb[0].mxu0
        %2032 = vmatprep.mubr.bf16.mxu0 %v1022
        %2033 = vmatmul.mubr.bf16.gmra.mrb[0].mxu0 %v1021
        %v2034 = vpop.f32.mrb[0].mxu0
        %v2035 = vadd.f32 0.0, %v2034
        %v2036 = vpop.f32.mrb[0].mxu0
        %v2037 = vpop.f32.mrb[0].mxu0
        %v2038 = vadd.f32 0.0, %v2037
        %v2039 = vpop.f32.mrb[0].mxu0
        %2040 = vmatprep.mubr.bf16.mxu0 %v1025
        %2041 = vmatmul.mubr.bf16.gmra.mrb[0].mxu0 %v1024
        %v2042 = vpop.f32.mrb[0].mxu0
        %v2043 = vadd.f32 0.0, %v2042
        %v2044 = vpop.f32.mrb[0].mxu0
        %v2045 = vpop.f32.mrb[0].mxu0
        %v2046 = vadd.f32 0.0, %v2045
        %v2047 = vpop.f32.mrb[0].mxu0
        %2048 = vmatprep.mubr.bf16.mxu0 %v1028
        %2049 = vmatmul.mubr.bf16.gmra.mrb[0].mxu0 %v1027
        %v2050 = vpop.f32.mrb[0].mxu0
        %v2051 = vadd.f32 0.0, %v2050
        %v2052 = vpop.f32.mrb[0].mxu0
        %v2053 = vpop.f32.mrb[0].mxu0
        %v2054 = vadd.f32 0.0, %v2053
        %v2055 = vpop.f32.mrb[0].mxu0
        %2056 = vdwg.mxu0
        %2057 = vmatprep.subr.bf16.mxu0 0
        %2058 = vmatpush1.bf16.msra.mxu0 %v1416
        %2059 = vmatprep.subr.bf16.mxu0 0
        %2060 = vmatpush1.bf16.msra.mxu0 %v1419
        %2061 = vmatprep.subr.bf16.mxu0 0
        %2062 = vmatpush1.bf16.msra.mxu0 %v1422
        %2063 = vmatprep.subr.bf16.mxu0 0
        %2064 = vmatpush1.bf16.msra.mxu0 %v1425
        %2065 = vmatprep.subr.bf16.mxu0 0
        %2066 = vmatpush1.bf16.msra.mxu0 %v1428
        %2067 = vmatprep.subr.bf16.mxu0 0
        %2068 = vmatpush1.bf16.msra.mxu0 %v1431
        %2069 = vmatprep.subr.bf16.mxu0 0
        %2070 = vmatpush1.bf16.msra.mxu0 %v1434
        %2071 = vmatprep.subr.bf16.mxu0 0
        %2072 = vmatpush1.bf16.msra.mxu0 %v1437
        %2073 = vmatprep.subr.bf16.mxu0 0
        %2074 = vmatpush1.bf16.msra.mxu0 0
        %2075 = vmatprep.subr.bf16.mxu0 0
        %2076 = vmatpush1.bf16.msra.mxu0 0
        %2077 = vmatprep.subr.bf16.mxu0 0
        %2078 = vmatpush1.bf16.msra.mxu0 0
        %2079 = vmatprep.subr.bf16.mxu0 0
        %2080 = vmatpush1.bf16.msra.mxu0 0
        %2081 = vmatprep.subr.bf16.mxu0 0
        %2082 = vmatpush1.bf16.msra.mxu0 0
        %2083 = vmatprep.subr.bf16.mxu0 0
        %2084 = vmatpush1.bf16.msra.mxu0 0
        %2085 = vmatprep.subr.bf16.mxu0 0
        %2086 = vmatpush1.bf16.msra.mxu0 0
        %2087 = vmatprep.subr.bf16.mxu0 0
        %2088 = vmatpush1.bf16.msra.mxu0 0
        %2089 = vmatprep.mubr.bf16.mxu0 0
        %2090 = vmatmul.mubr.bf16.gmra.mrb[0].mxu0 %v984
        %v2091 = vpop.f32.mrb[0].mxu0
        %v2092 = vadd.f32 %v1931, %v2091
        %v2093 = vpop.f32.mrb[0].mxu0
        %v2094 = vpop.f32.mrb[0].mxu0
        %v2095 = vadd.f32 %v1934, %v2094
        %v2096 = vpop.f32.mrb[0].mxu0
        %2097 = vmatprep.mubr.bf16.mxu0 0
        %2098 = vmatmul.mubr.bf16.gmra.mrb[0].mxu0 %v987
        %v2099 = vpop.f32.mrb[0].mxu0
        %v2100 = vadd.f32 %v1939, %v2099
        %v2101 = vpop.f32.mrb[0].mxu0
        %v2102 = vpop.f32.mrb[0].mxu0
        %v2103 = vadd.f32 %v1942, %v2102
        %v2104 = vpop.f32.mrb[0].mxu0
        %2105 = vmatprep.mubr.bf16.mxu0 0
        %2106 = vmatmul.mubr.bf16.gmra.mrb[0].mxu0 %v990
        %v2107 = vpop.f32.mrb[0].mxu0
        %v2108 = vadd.f32 %v1947, %v2107
        %v2109 = vpop.f32.mrb[0].mxu0
        %v2110 = vpop.f32.mrb[0].mxu0
        %v2111 = vadd.f32 %v1950, %v2110
        %v2112 = vpop.f32.mrb[0].mxu0
        %2113 = vmatprep.mubr.bf16.mxu0 0
        %2114 = vmatmul.mubr.bf16.gmra.mrb[0].mxu0 %v993
        %v2115 = vpop.f32.mrb[0].mxu0
        %v2116 = vadd.f32 %v1955, %v2115
        %v2117 = vpop.f32.mrb[0].mxu0
        %v2118 = vpop.f32.mrb[0].mxu0
        %v2119 = vadd.f32 %v1958, %v2118
        %v2120 = vpop.f32.mrb[0].mxu0
        %2121 = vmatprep.mubr.bf16.mxu0 0
        %2122 = vmatmul.mubr.bf16.gmra.mrb[0].mxu0 %v996
        %v2123 = vpop.f32.mrb[0].mxu0
        %v2124 = vadd.f32 %v1963, %v2123
        %v2125 = vpop.f32.mrb[0].mxu0
        %v2126 = vpop.f32.mrb[0].mxu0
        %v2127 = vadd.f32 %v1966, %v2126
        %v2128 = vpop.f32.mrb[0].mxu0
        %2129 = vmatprep.mubr.bf16.mxu0 0
        %2130 = vmatmul.mubr.bf16.gmra.mrb[0].mxu0 %v999
        %v2131 = vpop.f32.mrb[0].mxu0
        %v2132 = vadd.f32 %v1971, %v2131
        %v2133 = vpop.f32.mrb[0].mxu0
        %v2134 = vpop.f32.mrb[0].mxu0
        %v2135 = vadd.f32 %v1974, %v2134
        %v2136 = vpop.f32.mrb[0].mxu0
        %2137 = vmatprep.mubr.bf16.mxu0 0
        %2138 = vmatmul.mubr.bf16.gmra.mrb[0].mxu0 %v1002
        %v2139 = vpop.f32.mrb[0].mxu0
        %v2140 = vadd.f32 %v1979, %v2139
        %v2141 = vpop.f32.mrb[0].mxu0
        %v2142 = vpop.f32.mrb[0].mxu0
        %v2143 = vadd.f32 %v1982, %v2142
        %v2144 = vpop.f32.mrb[0].mxu0
        %2145 = vmatprep.mubr.bf16.mxu0 0
        %2146 = vmatmul.mubr.bf16.gmra.mrb[0].mxu0 %v1005
        %v2147 = vpop.f32.mrb[0].mxu0
        %v2148 = vadd.f32 %v1987, %v2147
        %v2149 = vpop.f32.mrb[0].mxu0
        %v2150 = vpop.f32.mrb[0].mxu0
        %v2151 = vadd.f32 %v1990, %v2150
        %v2152 = vpop.f32.mrb[0].mxu0
        %2153 = vmatprep.mubr.bf16.mxu0 0
        %2154 = vmatmul.mubr.bf16.gmra.mrb[0].mxu0 %v1008
        %v2155 = vpop.f32.mrb[0].mxu0
        %v2156 = vadd.f32 %v1995, %v2155
        %v2157 = vpop.f32.mrb[0].mxu0
        %v2158 = vpop.f32.mrb[0].mxu0
        %v2159 = vadd.f32 %v1998, %v2158
        %v2160 = vpop.f32.mrb[0].mxu0
        %2161 = vmatprep.mubr.bf16.mxu0 0
        %2162 = vmatmul.mubr.bf16.gmra.mrb[0].mxu0 %v1011
        %v2163 = vpop.f32.mrb[0].mxu0
        %v2164 = vadd.f32 %v2003, %v2163
        %v2165 = vpop.f32.mrb[0].mxu0
        %v2166 = vpop.f32.mrb[0].mxu0
        %v2167 = vadd.f32 %v2006, %v2166
        %v2168 = vpop.f32.mrb[0].mxu0
        %2169 = vmatprep.mubr.bf16.mxu0 0
        %2170 = vmatmul.mubr.bf16.gmra.mrb[0].mxu0 %v1014
        %v2171 = vpop.f32.mrb[0].mxu0
        %v2172 = vadd.f32 %v2011, %v2171
        %v2173 = vpop.f32.mrb[0].mxu0
        %v2174 = vpop.f32.mrb[0].mxu0
        %v2175 = vadd.f32 %v2014, %v2174
        %v2176 = vpop.f32.mrb[0].mxu0
        %2177 = vmatprep.mubr.bf16.mxu0 0
        %2178 = vmatmul.mubr.bf16.gmra.mrb[0].mxu0 %v1017
        %v2179 = vpop.f32.mrb[0].mxu0
        %v2180 = vadd.f32 %v2019, %v2179
        %v2181 = vpop.f32.mrb[0].mxu0
        %v2182 = vpop.f32.mrb[0].mxu0
        %v2183 = vadd.f32 %v2022, %v2182
        %v2184 = vpop.f32.mrb[0].mxu0
        %2185 = vmatprep.mubr.bf16.mxu0 0
        %2186 = vmatmul.mubr.bf16.gmra.mrb[0].mxu0 %v1020
        %v2187 = vpop.f32.mrb[0].mxu0
        %v2188 = vadd.f32 %v2027, %v2187
        %v2189 = vpop.f32.mrb[0].mxu0
        %v2190 = vpop.f32.mrb[0].mxu0
        %v2191 = vadd.f32 %v2030, %v2190
        %v2192 = vpop.f32.mrb[0].mxu0
        %2193 = vmatprep.mubr.bf16.mxu0 0
        %2194 = vmatmul.mubr.bf16.gmra.mrb[0].mxu0 %v1023
        %v2195 = vpop.f32.mrb[0].mxu0
        %v2196 = vadd.f32 %v2035, %v2195
        %v2197 = vpop.f32.mrb[0].mxu0
        %v2198 = vpop.f32.mrb[0].mxu0
        %v2199 = vadd.f32 %v2038, %v2198
        %v2200 = vpop.f32.mrb[0].mxu0
        %2201 = vmatprep.mubr.bf16.mxu0 0
        %2202 = vmatmul.mubr.bf16.gmra.mrb[0].mxu0 %v1026
        %v2203 = vpop.f32.mrb[0].mxu0
        %v2204 = vadd.f32 %v2043, %v2203
        %v2205 = vpop.f32.mrb[0].mxu0
        %v2206 = vpop.f32.mrb[0].mxu0
        %v2207 = vadd.f32 %v2046, %v2206
        %v2208 = vpop.f32.mrb[0].mxu0
        %2209 = vmatprep.mubr.bf16.mxu0 0
        %2210 = vmatmul.mubr.bf16.gmra.mrb[0].mxu0 %v1029
        %v2211 = vpop.f32.mrb[0].mxu0
        %v2212 = vadd.f32 %v2051, %v2211
        %v2213 = vpop.f32.mrb[0].mxu0
        %v2214 = vpop.f32.mrb[0].mxu0
        %v2215 = vadd.f32 %v2054, %v2214
        %v2216 = vpop.f32.mrb[0].mxu0
        %2217 = vdwg.mxu0
        %v2218 = vlaneseq
        %v2219 = vshrl.u32 %v2218, 7
        %v2220 = vadd.s32 %v2219, 8
        %v2221 = vrot.slane %v2092, 1
        %v2222 = vrot.slane %v2095, 1
        %v2223 = vrot.slane %v2100, 1
        %v2224 = vrot.slane %v2103, 1
        %v2225 = vrot.slane %v2108, 1
        %v2226 = vrot.slane %v2111, 1
        %v2227 = vrot.slane %v2116, 1
        %v2228 = vrot.slane %v2119, 1
        %v2229 = vrot.slane %v2124, 1
        %v2230 = vrot.slane %v2127, 1
        %v2231 = vrot.slane %v2132, 1
        %v2232 = vrot.slane %v2135, 1
        %v2233 = vrot.slane %v2140, 1
        %v2234 = vrot.slane %v2143, 1
        %v2235 = vrot.slane %v2148, 1
        %v2236 = vrot.slane %v2151, 1
        %v2237 = vrot.slane %v2156, 1
        %v2238 = vrot.slane %v2159, 1
        %v2239 = vrot.slane %v2164, 1
        %v2240 = vrot.slane %v2167, 1
        %v2241 = vrot.slane %v2172, 1
        %v2242 = vrot.slane %v2175, 1
        %v2243 = vrot.slane %v2180, 1
        %v2244 = vrot.slane %v2183, 1
        %v2245 = vrot.slane %v2188, 1
        %v2246 = vrot.slane %v2191, 1
        %v2247 = vrot.slane %v2196, 1
        %v2248 = vrot.slane %v2199, 1
        %v2249 = vrot.slane %v2204, 1
        %v2250 = vrot.slane %v2207, 1
        %v2251 = vrot.slane %v2212, 1
        %v2252 = vrot.slane %v2215, 1
        %vm2253 = vcmp.lt.s32.totalorder %v2219, 7
        %v2254 = vsel %vm2253, %v2251, %v2252
        %v2255 = vsel %vm2253, %v2250, %v2251
        %v2256 = vsel %vm2253, %v2249, %v2250
        %v2257 = vsel %vm2253, %v2248, %v2249
        %v2258 = vsel %vm2253, %v2247, %v2248
        %v2259 = vsel %vm2253, %v2246, %v2247
        %v2260 = vsel %vm2253, %v2245, %v2246
        %v2261 = vsel %vm2253, %v2244, %v2245
        %v2262 = vsel %vm2253, %v2243, %v2244
        %v2263 = vsel %vm2253, %v2242, %v2243
        %v2264 = vsel %vm2253, %v2241, %v2242
        %v2265 = vsel %vm2253, %v2240, %v2241
        %v2266 = vsel %vm2253, %v2239, %v2240
        %v2267 = vsel %vm2253, %v2238, %v2239
        %v2268 = vsel %vm2253, %v2237, %v2238
        %v2269 = vsel %vm2253, %v2236, %v2237
        %v2270 = vsel %vm2253, %v2235, %v2236
        %v2271 = vsel %vm2253, %v2234, %v2235
        %v2272 = vsel %vm2253, %v2233, %v2234
        %v2273 = vsel %vm2253, %v2232, %v2233
        %v2274 = vsel %vm2253, %v2231, %v2232
        %v2275 = vsel %vm2253, %v2230, %v2231
        %v2276 = vsel %vm2253, %v2229, %v2230
        %v2277 = vsel %vm2253, %v2228, %v2229
        %v2278 = vsel %vm2253, %v2227, %v2228
        %v2279 = vsel %vm2253, %v2226, %v2227
        %v2280 = vsel %vm2253, %v2225, %v2226
        %v2281 = vsel %vm2253, %v2224, %v2225
        %v2282 = vsel %vm2253, %v2223, %v2224
        %v2283 = vsel %vm2253, %v2222, %v2223
        %v2284 = vsel %vm2253, %v2221, %v2222
        %v2285 = vsel %vm2253, %v2252, %v2221
        %v2286 = vrot.slane %v1738, 7
        %v2287 = vrot.slane %v1742, 7
        %v2288 = vrot.slane %v1748, 7
        %v2289 = vrot.slane %v1752, 7
        %v2290 = vrot.slane %v1758, 7
        %v2291 = vrot.slane %v1762, 7
        %v2292 = vrot.slane %v1768, 7
        %v2293 = vrot.slane %v1772, 7
        %v2294 = vrot.slane %v1778, 7
        %v2295 = vrot.slane %v1782, 7
        %v2296 = vrot.slane %v1788, 7
        %v2297 = vrot.slane %v1792, 7
        %v2298 = vrot.slane %v1798, 7
        %v2299 = vrot.slane %v1802, 7
        %v2300 = vrot.slane %v1808, 7
        %v2301 = vrot.slane %v1812, 7
        %v2302 = vrot.slane %v1818, 7
        %v2303 = vrot.slane %v1822, 7
        %v2304 = vrot.slane %v1828, 7
        %v2305 = vrot.slane %v1832, 7
        %v2306 = vrot.slane %v1838, 7
        %v2307 = vrot.slane %v1842, 7
        %v2308 = vrot.slane %v1848, 7
        %v2309 = vrot.slane %v1852, 7
        %v2310 = vrot.slane %v1858, 7
        %v2311 = vrot.slane %v1862, 7
        %v2312 = vrot.slane %v1868, 7
        %v2313 = vrot.slane %v1872, 7
        %v2314 = vrot.slane %v1878, 7
        %v2315 = vrot.slane %v1882, 7
        %v2316 = vrot.slane %v1888, 7
        %v2317 = vrot.slane %v1892, 7
        %vm2318 = vcmp.lt.s32.totalorder %v2219, 1
        %v2319 = vsel %vm2318, %v2316, %v2317
        %v2320 = vsel %vm2318, %v2315, %v2316
        %v2321 = vsel %vm2318, %v2314, %v2315
        %v2322 = vsel %vm2318, %v2313, %v2314
        %v2323 = vsel %vm2318, %v2312, %v2313
        %v2324 = vsel %vm2318, %v2311, %v2312
        %v2325 = vsel %vm2318, %v2310, %v2311
        %v2326 = vsel %vm2318, %v2309, %v2310
        %v2327 = vsel %vm2318, %v2308, %v2309
        %v2328 = vsel %vm2318, %v2307, %v2308
        %v2329 = vsel %vm2318, %v2306, %v2307
        %v2330 = vsel %vm2318, %v2305, %v2306
        %v2331 = vsel %vm2318, %v2304, %v2305
        %v2332 = vsel %vm2318, %v2303, %v2304
        %v2333 = vsel %vm2318, %v2302, %v2303
        %v2334 = vsel %vm2318, %v2301, %v2302
        %v2335 = vsel %vm2318, %v2300, %v2301
        %v2336 = vsel %vm2318, %v2299, %v2300
        %v2337 = vsel %vm2318, %v2298, %v2299
        %v2338 = vsel %vm2318, %v2297, %v2298
        %v2339 = vsel %vm2318, %v2296, %v2297
        %v2340 = vsel %vm2318, %v2295, %v2296
        %v2341 = vsel %vm2318, %v2294, %v2295
        %v2342 = vsel %vm2318, %v2293, %v2294
        %v2343 = vsel %vm2318, %v2292, %v2293
        %v2344 = vsel %vm2318, %v2291, %v2292
        %v2345 = vsel %vm2318, %v2290, %v2291
        %v2346 = vsel %vm2318, %v2289, %v2290
        %v2347 = vsel %vm2318, %v2288, %v2289
        %v2348 = vsel %vm2318, %v2287, %v2288
        %v2349 = vsel %vm2318, %v2286, %v2287
        %v2350 = vsel %vm2318, %v2317, %v2286
        %vm2351 = vcmp.lt.s32.totalorder %v2219, 15
        %vm2352 = vcmp.lt.s32.totalorder %v2220, 15
        %v2353 = vsel %vm2351, 1, 0
        %v2354 = vsel %vm2352, 1, 0
        %vm2355 = vcmp.eq.s32.totalorder %v2353, 1
        %vm2356 = vcmp.eq.s32.totalorder %v2354, 1
        %v2357 = vsel %vm2355, %v2284, 0.0
        %v2358 = vsel %vm2356, %v2283, 0.0
        %v2359 = vsel %vm2355, %v2282, 0.0
        %v2360 = vsel %vm2356, %v2281, 0.0
        %v2361 = vsel %vm2355, %v2280, 0.0
        %v2362 = vsel %vm2356, %v2279, 0.0
        %v2363 = vsel %vm2355, %v2278, 0.0
        %v2364 = vsel %vm2356, %v2277, 0.0
        %v2365 = vsel %vm2355, %v2276, 0.0
        %v2366 = vsel %vm2356, %v2275, 0.0
        %v2367 = vsel %vm2355, %v2274, 0.0
        %v2368 = vsel %vm2356, %v2273, 0.0
        %v2369 = vsel %vm2355, %v2272, 0.0
        %v2370 = vsel %vm2356, %v2271, 0.0
        %v2371 = vsel %vm2355, %v2270, 0.0
        %v2372 = vsel %vm2356, %v2269, 0.0
        %v2373 = vsel %vm2355, %v2268, 0.0
        %v2374 = vsel %vm2356, %v2267, 0.0
        %v2375 = vsel %vm2355, %v2266, 0.0
        %v2376 = vsel %vm2356, %v2265, 0.0
        %v2377 = vsel %vm2355, %v2264, 0.0
        %v2378 = vsel %vm2356, %v2263, 0.0
        %v2379 = vsel %vm2355, %v2262, 0.0
        %v2380 = vsel %vm2356, %v2261, 0.0
        %v2381 = vsel %vm2355, %v2260, 0.0
        %v2382 = vsel %vm2356, %v2259, 0.0
        %v2383 = vsel %vm2355, %v2258, 0.0
        %v2384 = vsel %vm2356, %v2257, 0.0
        %v2385 = vsel %vm2355, %v2256, 0.0
        %v2386 = vsel %vm2356, %v2255, 0.0
        %v2387 = vsel %vm2355, %v2254, 0.0
        %v2388 = vsel %vm2356, %v2285, 0.0
        %v2389 = vadd.f32 %v1740, %v2357
        %v2390 = vadd.f32 %v1744, %v2358
        %v2391 = vadd.f32 %v1750, %v2359
        %v2392 = vadd.f32 %v1754, %v2360
        %v2393 = vadd.f32 %v1760, %v2361
        %v2394 = vadd.f32 %v1764, %v2362
        %v2395 = vadd.f32 %v1770, %v2363
        %v2396 = vadd.f32 %v1774, %v2364
        %v2397 = vadd.f32 %v1780, %v2365
        %v2398 = vadd.f32 %v1784, %v2366
        %v2399 = vadd.f32 %v1790, %v2367
        %v2400 = vadd.f32 %v1794, %v2368
        %v2401 = vadd.f32 %v1800, %v2369
        %v2402 = vadd.f32 %v1804, %v2370
        %v2403 = vadd.f32 %v1810, %v2371
        %v2404 = vadd.f32 %v1814, %v2372
        %v2405 = vadd.f32 %v1820, %v2373
        %v2406 = vadd.f32 %v1824, %v2374
        %v2407 = vadd.f32 %v1830, %v2375
        %v2408 = vadd.f32 %v1834, %v2376
        %v2409 = vadd.f32 %v1840, %v2377
        %v2410 = vadd.f32 %v1844, %v2378
        %v2411 = vadd.f32 %v1850, %v2379
        %v2412 = vadd.f32 %v1854, %v2380
        %v2413 = vadd.f32 %v1860, %v2381
        %v2414 = vadd.f32 %v1864, %v2382
        %v2415 = vadd.f32 %v1870, %v2383
        %v2416 = vadd.f32 %v1874, %v2384
        %v2417 = vadd.f32 %v1880, %v2385
        %v2418 = vadd.f32 %v1884, %v2386
        %v2419 = vadd.f32 %v1890, %v2387
        %v2420 = vadd.f32 %v1894, %v2388
        %vm2421 = vcmp.gt.s32.totalorder %v2219, 0
        %vm2422 = vcmp.gt.s32.totalorder %v2220, 0
        %v2423 = vsel %vm2421, 1, 0
        %v2424 = vsel %vm2422, 1, 0
        %vm2425 = vcmp.eq.s32.totalorder %v2423, 1
        %vm2426 = vcmp.eq.s32.totalorder %v2424, 1
        %v2427 = vsel %vm2425, %v2350, 0.0
        %v2428 = vsel %vm2426, %v2349, 0.0
        %v2429 = vsel %vm2425, %v2348, 0.0
        %v2430 = vsel %vm2426, %v2347, 0.0
        %v2431 = vsel %vm2425, %v2346, 0.0
        %v2432 = vsel %vm2426, %v2345, 0.0
        %v2433 = vsel %vm2425, %v2344, 0.0
        %v2434 = vsel %vm2426, %v2343, 0.0
        %v2435 = vsel %vm2425, %v2342, 0.0
        %v2436 = vsel %vm2426, %v2341, 0.0
        %v2437 = vsel %vm2425, %v2340, 0.0
        %v2438 = vsel %vm2426, %v2339, 0.0
        %v2439 = vsel %vm2425, %v2338, 0.0
        %v2440 = vsel %vm2426, %v2337, 0.0
        %v2441 = vsel %vm2425, %v2336, 0.0
        %v2442 = vsel %vm2426, %v2335, 0.0
        %v2443 = vsel %vm2425, %v2334, 0.0
        %v2444 = vsel %vm2426, %v2333, 0.0
        %v2445 = vsel %vm2425, %v2332, 0.0
        %v2446 = vsel %vm2426, %v2331, 0.0
        %v2447 = vsel %vm2425, %v2330, 0.0
        %v2448 = vsel %vm2426, %v2329, 0.0
        %v2449 = vsel %vm2425, %v2328, 0.0
        %v2450 = vsel %vm2426, %v2327, 0.0
        %v2451 = vsel %vm2425, %v2326, 0.0
        %v2452 = vsel %vm2426, %v2325, 0.0
        %v2453 = vsel %vm2425, %v2324, 0.0
        %v2454 = vsel %vm2426, %v2323, 0.0
        %v2455 = vsel %vm2425, %v2322, 0.0
        %v2456 = vsel %vm2426, %v2321, 0.0
        %v2457 = vsel %vm2425, %v2320, 0.0
        %v2458 = vsel %vm2426, %v2319, 0.0
        %v2459 = vadd.f32 %v2389, %v2427
        %v2460 = vadd.f32 %v2390, %v2428
        %v2461 = vadd.f32 %v2391, %v2429
        %v2462 = vadd.f32 %v2392, %v2430
        %v2463 = vadd.f32 %v2393, %v2431
        %v2464 = vadd.f32 %v2394, %v2432
        %v2465 = vadd.f32 %v2395, %v2433
        %v2466 = vadd.f32 %v2396, %v2434
        %v2467 = vadd.f32 %v2397, %v2435
        %v2468 = vadd.f32 %v2398, %v2436
        %v2469 = vadd.f32 %v2399, %v2437
        %v2470 = vadd.f32 %v2400, %v2438
        %v2471 = vadd.f32 %v2401, %v2439
        %v2472 = vadd.f32 %v2402, %v2440
        %v2473 = vadd.f32 %v2403, %v2441
        %v2474 = vadd.f32 %v2404, %v2442
        %v2475 = vadd.f32 %v2405, %v2443
        %v2476 = vadd.f32 %v2406, %v2444
        %v2477 = vadd.f32 %v2407, %v2445
        %v2478 = vadd.f32 %v2408, %v2446
        %v2479 = vadd.f32 %v2409, %v2447
        %v2480 = vadd.f32 %v2410, %v2448
        %v2481 = vadd.f32 %v2411, %v2449
        %v2482 = vadd.f32 %v2412, %v2450
        %v2483 = vadd.f32 %v2413, %v2451
        %v2484 = vadd.f32 %v2414, %v2452
        %v2485 = vadd.f32 %v2415, %v2453
        %v2486 = vadd.f32 %v2416, %v2454
        %v2487 = vadd.f32 %v2417, %v2455
        %v2488 = vadd.f32 %v2418, %v2456
        %v2489 = vadd.f32 %v2419, %v2457
        %v2490 = vadd.f32 %v2420, %v2458
        %v2491 = vld [vmem:[%s6] sm:$0x1]
        %v2493 = vlaneseq
        %v2494 = vshrl.u32 %v2493, 7
        %v2495 = vsub.s32 0, %v2494
        %v2496 = vrot.slane %v2491, %v2495
        %v2498 = vadd.f32 %v2459, %v2496
        %v2499 = vadd.f32 %v2460, %v2496
        %v2500 = vadd.f32 %v2461, %v2496
        %v2501 = vadd.f32 %v2462, %v2496
        %v2502 = vadd.f32 %v2463, %v2496
        %v2503 = vadd.f32 %v2464, %v2496
        %v2504 = vadd.f32 %v2465, %v2496
        %v2505 = vadd.f32 %v2466, %v2496
        %v2506 = vadd.f32 %v2467, %v2496
        %v2507 = vadd.f32 %v2468, %v2496
        %v2508 = vadd.f32 %v2469, %v2496
        %v2509 = vadd.f32 %v2470, %v2496
        %v2510 = vadd.f32 %v2471, %v2496
        %v2511 = vadd.f32 %v2472, %v2496
        %v2512 = vadd.f32 %v2473, %v2496
        %v2513 = vadd.f32 %v2474, %v2496
        %v2514 = vadd.f32 %v2475, %v2496
        %v2515 = vadd.f32 %v2476, %v2496
        %v2516 = vadd.f32 %v2477, %v2496
        %v2517 = vadd.f32 %v2478, %v2496
        %v2518 = vadd.f32 %v2479, %v2496
        %v2519 = vadd.f32 %v2480, %v2496
        %v2520 = vadd.f32 %v2481, %v2496
        %v2521 = vadd.f32 %v2482, %v2496
        %v2522 = vadd.f32 %v2483, %v2496
        %v2523 = vadd.f32 %v2484, %v2496
        %v2524 = vadd.f32 %v2485, %v2496
        %v2525 = vadd.f32 %v2486, %v2496
        %v2526 = vadd.f32 %v2487, %v2496
        %v2527 = vadd.f32 %v2488, %v2496
        %v2528 = vadd.f32 %v2489, %v2496
        %v2529 = vadd.f32 %v2490, %v2496
        %v2530 = vmax.f32 %v2498, 0.0
        %v2531 = vmax.f32 %v2499, 0.0
        %v2532 = vmax.f32 %v2500, 0.0
        %v2533 = vmax.f32 %v2501, 0.0
        %v2534 = vmax.f32 %v2502, 0.0
        %v2535 = vmax.f32 %v2503, 0.0
        %v2536 = vmax.f32 %v2504, 0.0
        %v2537 = vmax.f32 %v2505, 0.0
        %v2538 = vmax.f32 %v2506, 0.0
        %v2539 = vmax.f32 %v2507, 0.0
        %v2540 = vmax.f32 %v2508, 0.0
        %v2541 = vmax.f32 %v2509, 0.0
        %v2542 = vmax.f32 %v2510, 0.0
        %v2543 = vmax.f32 %v2511, 0.0
        %v2544 = vmax.f32 %v2512, 0.0
        %v2545 = vmax.f32 %v2513, 0.0
        %v2546 = vmax.f32 %v2514, 0.0
        %v2547 = vmax.f32 %v2515, 0.0
        %v2548 = vmax.f32 %v2516, 0.0
        %v2549 = vmax.f32 %v2517, 0.0
        %v2550 = vmax.f32 %v2518, 0.0
        %v2551 = vmax.f32 %v2519, 0.0
        %v2552 = vmax.f32 %v2520, 0.0
        %v2553 = vmax.f32 %v2521, 0.0
        %v2554 = vmax.f32 %v2522, 0.0
        %v2555 = vmax.f32 %v2523, 0.0
        %v2556 = vmax.f32 %v2524, 0.0
        %v2557 = vmax.f32 %v2525, 0.0
        %v2558 = vmax.f32 %v2526, 0.0
        %v2559 = vmax.f32 %v2527, 0.0
        %v2560 = vmax.f32 %v2528, 0.0
        %v2561 = vmax.f32 %v2529, 0.0
        %v2562 = vpack.c.bf16 %v2531, %v2530
        %v2563 = vpack.c.bf16 %v2533, %v2532
        %v2564 = vpack.c.bf16 %v2535, %v2534
        %v2565 = vpack.c.bf16 %v2537, %v2536
        %v2566 = vpack.c.bf16 %v2539, %v2538
        %v2567 = vpack.c.bf16 %v2541, %v2540
        %v2568 = vpack.c.bf16 %v2543, %v2542
        %v2569 = vpack.c.bf16 %v2545, %v2544
        %v2570 = vpack.c.bf16 %v2547, %v2546
        %v2571 = vpack.c.bf16 %v2549, %v2548
        %v2572 = vpack.c.bf16 %v2551, %v2550
        %v2573 = vpack.c.bf16 %v2553, %v2552
        %v2574 = vpack.c.bf16 %v2555, %v2554
        %v2575 = vpack.c.bf16 %v2557, %v2556
        %v2576 = vpack.c.bf16 %v2559, %v2558
        %v2577 = vpack.c.bf16 %v2561, %v2560
        %v2578 = vld [vmem:[#allocation11] sm:$0xf]
        %v2579 = vld [vmem:[#allocation11 + $0x4] sm:$0xf]
        %v2580 = vld [vmem:[#allocation11 + $0x8] sm:$0xf]
        %v2581 = vld [vmem:[#allocation11 + $0xc] sm:$0xf]
        %v2582 = vld [vmem:[#allocation11 + $0x10] sm:$0xf]
        %v2583 = vld [vmem:[#allocation11 + $0x14] sm:$0xf]
        %v2584 = vld [vmem:[#allocation11 + $0x18] sm:$0xf]
        %v2585 = vld [vmem:[#allocation11 + $0x1c] sm:$0xf]
        %v2586 = vld [vmem:[#allocation11 + $0x20] sm:$0xf]
        %v2587 = vld [vmem:[#allocation11 + $0x24] sm:$0xf]
        %v2588 = vld [vmem:[#allocation11 + $0x28] sm:$0xf]
        %v2589 = vld [vmem:[#allocation11 + $0x2c] sm:$0xf]
        %v2590 = vld [vmem:[#allocation11 + $0x30] sm:$0xf]
        %v2591 = vld [vmem:[#allocation11 + $0x34] sm:$0xf]
        %v2592 = vld [vmem:[#allocation11 + $0x38] sm:$0xf]
        %v2593 = vld [vmem:[#allocation11 + $0x3c] sm:$0xf]
        %v2594 = vld [vmem:[%s318] sm:$0xf]
        %v2595 = vld [vmem:[%s318 + $0x4] sm:$0xf]
        %v2596 = vld [vmem:[%s318 + $0x8] sm:$0xf]
        %v2597 = vld [vmem:[%s318 + $0xc] sm:$0xf]
        %v2598 = vld [vmem:[%s318 + $0x10] sm:$0xf]
        %v2599 = vld [vmem:[%s318 + $0x14] sm:$0xf]
        %v2600 = vld [vmem:[%s318 + $0x18] sm:$0xf]
        %v2601 = vld [vmem:[%s318 + $0x1c] sm:$0xf]
        %v2602 = vld [vmem:[%s318 + $0x20] sm:$0xf]
        %v2603 = vld [vmem:[%s318 + $0x24] sm:$0xf]
        %v2604 = vld [vmem:[%s318 + $0x28] sm:$0xf]
        %v2605 = vld [vmem:[%s318 + $0x2c] sm:$0xf]
        %v2606 = vld [vmem:[%s318 + $0x30] sm:$0xf]
        %v2607 = vld [vmem:[%s318 + $0x34] sm:$0xf]
        %v2608 = vld [vmem:[%s318 + $0x38] sm:$0xf]
        %v2609 = vld [vmem:[%s318 + $0x3c] sm:$0xf]
        %v2610 = vld [vmem:[%s318 + $0x40] sm:$0xf]
        %v2611 = vld [vmem:[%s318 + $0x44] sm:$0xf]
        %v2612 = vld [vmem:[%s318 + $0x48] sm:$0xf]
        %v2613 = vld [vmem:[%s318 + $0x4c] sm:$0xf]
        %v2614 = vld [vmem:[%s318 + $0x50] sm:$0xf]
        %v2615 = vld [vmem:[%s318 + $0x54] sm:$0xf]
        %v2616 = vld [vmem:[%s318 + $0x58] sm:$0xf]
        %v2617 = vld [vmem:[%s318 + $0x5c] sm:$0xf]
        %v2618 = vld [vmem:[%s318 + $0x60] sm:$0xf]
        %v2619 = vld [vmem:[%s318 + $0x64] sm:$0xf]
        %v2620 = vld [vmem:[%s318 + $0x68] sm:$0xf]
        %v2621 = vld [vmem:[%s318 + $0x6c] sm:$0xf]
        %v2622 = vld [vmem:[%s318 + $0x70] sm:$0xf]
        %v2623 = vld [vmem:[%s318 + $0x74] sm:$0xf]
        %v2624 = vld [vmem:[%s318 + $0x78] sm:$0xf]
        %v2625 = vld [vmem:[%s318 + $0x7c] sm:$0xf]
        %v2626 = vunpack.c.l.bf16 %v2594
        %v2627 = vunpack.c.l.bf16 %v2595
        %v2628 = vunpack.c.l.bf16 %v2596
        %v2629 = vunpack.c.l.bf16 %v2597
        %v2630 = vunpack.c.l.bf16 %v2598
        %v2631 = vunpack.c.l.bf16 %v2599
        %v2632 = vunpack.c.l.bf16 %v2600
        %v2633 = vunpack.c.l.bf16 %v2601
        %v2634 = vunpack.c.l.bf16 %v2602
        %v2635 = vunpack.c.l.bf16 %v2603
        %v2636 = vunpack.c.l.bf16 %v2604
        %v2637 = vunpack.c.l.bf16 %v2605
        %v2638 = vunpack.c.l.bf16 %v2606
        %v2639 = vunpack.c.l.bf16 %v2607
        %v2640 = vunpack.c.l.bf16 %v2608
        %v2641 = vunpack.c.l.bf16 %v2609
        %v2642 = vunpack.c.l.bf16 %v2610
        %v2643 = vunpack.c.l.bf16 %v2611
        %v2644 = vunpack.c.l.bf16 %v2612
        %v2645 = vunpack.c.l.bf16 %v2613
        %v2646 = vunpack.c.l.bf16 %v2614
        %v2647 = vunpack.c.l.bf16 %v2615
        %v2648 = vunpack.c.l.bf16 %v2616
        %v2649 = vunpack.c.l.bf16 %v2617
        %v2650 = vunpack.c.l.bf16 %v2618
        %v2651 = vunpack.c.l.bf16 %v2619
        %v2652 = vunpack.c.l.bf16 %v2620
        %v2653 = vunpack.c.l.bf16 %v2621
        %v2654 = vunpack.c.l.bf16 %v2622
        %v2655 = vunpack.c.l.bf16 %v2623
        %v2656 = vunpack.c.l.bf16 %v2624
        %v2657 = vunpack.c.l.bf16 %v2625
        %v2658 = vld [vmem:[%s7] sm:$0x1]
        %v2660 = vlaneseq
        %v2661 = vshrl.u32 %v2660, 7
        %v2662 = vsub.s32 0, %v2661
        %v2663 = vrot.slane %v2658, %v2662
        %v2681 = vunpack.c.l.b16 %v2578
        %v2682 = vunpack.c.l.b16 %v2579
        %v2683 = vunpack.c.l.b16 %v2580
        %v2684 = vunpack.c.l.b16 %v2581
        %v2685 = vunpack.c.l.b16 %v2582
        %v2686 = vunpack.c.l.b16 %v2583
        %v2687 = vunpack.c.l.b16 %v2584
        %v2688 = vunpack.c.l.b16 %v2585
        %v2689 = vunpack.c.l.b16 %v2586
        %v2690 = vunpack.c.l.b16 %v2587
        %v2691 = vunpack.c.l.b16 %v2588
        %v2692 = vunpack.c.l.b16 %v2589
        %v2693 = vunpack.c.l.b16 %v2590
        %v2694 = vunpack.c.l.b16 %v2591
        %v2695 = vunpack.c.l.b16 %v2592
        %v2696 = vunpack.c.l.b16 %v2593
        %v2697 = vpack.c.b16 %v2682, %v2681
        %v2698 = vpack.c.b16 %v2684, %v2683
        %v2699 = vpack.c.b16 %v2686, %v2685
        %v2700 = vpack.c.b16 %v2688, %v2687
        %v2701 = vpack.c.b16 %v2690, %v2689
        %v2702 = vpack.c.b16 %v2692, %v2691
        %v2703 = vpack.c.b16 %v2694, %v2693
        %v2704 = vpack.c.b16 %v2696, %v2695
        %2713 = vmatprep.subr.bf16.mxu0 0
        %2714 = vmatpush1.bf16.msra.mxu0 %v2697
        %2715 = vmatprep.subr.bf16.mxu0 0
        %2716 = vmatpush1.bf16.msra.mxu0 %v2698
        %2717 = vmatprep.subr.bf16.mxu0 0
        %2718 = vmatpush1.bf16.msra.mxu0 %v2699
        %2719 = vmatprep.subr.bf16.mxu0 0
        %2720 = vmatpush1.bf16.msra.mxu0 %v2700
        %2721 = vmatprep.subr.bf16.mxu0 0
        %2722 = vmatpush1.bf16.msra.mxu0 %v2701
        %2723 = vmatprep.subr.bf16.mxu0 0
        %2724 = vmatpush1.bf16.msra.mxu0 %v2702
        %2725 = vmatprep.subr.bf16.mxu0 0
        %2726 = vmatpush1.bf16.msra.mxu0 %v2703
        %2727 = vmatprep.subr.bf16.mxu0 0
        %2728 = vmatpush1.bf16.msra.mxu0 %v2704
        %2729 = vmatprep.subr.bf16.mxu0 0
        %2730 = vmatpush1.bf16.msra.mxu0 0
        %2731 = vmatprep.subr.bf16.mxu0 0
        %2732 = vmatpush1.bf16.msra.mxu0 0
        %2733 = vmatprep.subr.bf16.mxu0 0
        %2734 = vmatpush1.bf16.msra.mxu0 0
        %2735 = vmatprep.subr.bf16.mxu0 0
        %2736 = vmatpush1.bf16.msra.mxu0 0
        %2737 = vmatprep.subr.bf16.mxu0 0
        %2738 = vmatpush1.bf16.msra.mxu0 0
        %2739 = vmatprep.subr.bf16.mxu0 0
        %2740 = vmatpush1.bf16.msra.mxu0 0
        %2741 = vmatprep.subr.bf16.mxu0 0
        %2742 = vmatpush1.bf16.msra.mxu0 0
        %2743 = vmatprep.subr.bf16.mxu0 0
        %2744 = vmatpush1.bf16.msra.mxu0 0
        %2745 = vmatprep.mubr.bf16.mxu0 0
        %2746 = vmatmul.mubr.bf16.gmra.mrb[0].mxu0 %v2562
        %v2747 = vpop.f32.mrb[0].mxu0
        %v2748 = vadd.f32 %v2663, %v2747
        %v2749 = vpop.f32.mrb[0].mxu0
        %v2750 = vpop.f32.mrb[0].mxu0
        %v2751 = vadd.f32 %v2663, %v2750
        %v2752 = vpop.f32.mrb[0].mxu0
        %2753 = vmatprep.mubr.bf16.mxu0 0
        %2754 = vmatmul.mubr.bf16.gmra.mrb[0].mxu0 %v2563
        %v2755 = vpop.f32.mrb[0].mxu0
        %v2756 = vadd.f32 %v2663, %v2755
        %v2757 = vpop.f32.mrb[0].mxu0
        %v2758 = vpop.f32.mrb[0].mxu0
        %v2759 = vadd.f32 %v2663, %v2758
        %v2760 = vpop.f32.mrb[0].mxu0
        %2761 = vmatprep.mubr.bf16.mxu0 0
        %2762 = vmatmul.mubr.bf16.gmra.mrb[0].mxu0 %v2564
        %v2763 = vpop.f32.mrb[0].mxu0
        %v2764 = vadd.f32 %v2663, %v2763
        %v2765 = vpop.f32.mrb[0].mxu0
        %v2766 = vpop.f32.mrb[0].mxu0
        %v2767 = vadd.f32 %v2663, %v2766
        %v2768 = vpop.f32.mrb[0].mxu0
        %2769 = vmatprep.mubr.bf16.mxu0 0
        %2770 = vmatmul.mubr.bf16.gmra.mrb[0].mxu0 %v2565
        %v2771 = vpop.f32.mrb[0].mxu0
        %v2772 = vadd.f32 %v2663, %v2771
        %v2773 = vpop.f32.mrb[0].mxu0
        %v2774 = vpop.f32.mrb[0].mxu0
        %v2775 = vadd.f32 %v2663, %v2774
        %v2776 = vpop.f32.mrb[0].mxu0
        %2777 = vmatprep.mubr.bf16.mxu0 0
        %2778 = vmatmul.mubr.bf16.gmra.mrb[0].mxu0 %v2566
        %v2779 = vpop.f32.mrb[0].mxu0
        %v2780 = vadd.f32 %v2663, %v2779
        %v2781 = vpop.f32.mrb[0].mxu0
        %v2782 = vpop.f32.mrb[0].mxu0
        %v2783 = vadd.f32 %v2663, %v2782
        %v2784 = vpop.f32.mrb[0].mxu0
        %2785 = vmatprep.mubr.bf16.mxu0 0
        %2786 = vmatmul.mubr.bf16.gmra.mrb[0].mxu0 %v2567
        %v2787 = vpop.f32.mrb[0].mxu0
        %v2788 = vadd.f32 %v2663, %v2787
        %v2789 = vpop.f32.mrb[0].mxu0
        %v2790 = vpop.f32.mrb[0].mxu0
        %v2791 = vadd.f32 %v2663, %v2790
        %v2792 = vpop.f32.mrb[0].mxu0
        %2793 = vmatprep.mubr.bf16.mxu0 0
        %2794 = vmatmul.mubr.bf16.gmra.mrb[0].mxu0 %v2568
        %v2795 = vpop.f32.mrb[0].mxu0
        %v2796 = vadd.f32 %v2663, %v2795
        %v2797 = vpop.f32.mrb[0].mxu0
        %v2798 = vpop.f32.mrb[0].mxu0
        %v2799 = vadd.f32 %v2663, %v2798
        %v2800 = vpop.f32.mrb[0].mxu0
        %2801 = vmatprep.mubr.bf16.mxu0 0
        %2802 = vmatmul.mubr.bf16.gmra.mrb[0].mxu0 %v2569
        %v2803 = vpop.f32.mrb[0].mxu0
        %v2804 = vadd.f32 %v2663, %v2803
        %v2805 = vpop.f32.mrb[0].mxu0
        %v2806 = vpop.f32.mrb[0].mxu0
        %v2807 = vadd.f32 %v2663, %v2806
        %v2808 = vpop.f32.mrb[0].mxu0
        %2809 = vmatprep.mubr.bf16.mxu0 0
        %2810 = vmatmul.mubr.bf16.gmra.mrb[0].mxu0 %v2570
        %v2811 = vpop.f32.mrb[0].mxu0
        %v2812 = vadd.f32 %v2663, %v2811
        %v2813 = vpop.f32.mrb[0].mxu0
        %v2814 = vpop.f32.mrb[0].mxu0
        %v2815 = vadd.f32 %v2663, %v2814
        %v2816 = vpop.f32.mrb[0].mxu0
        %2817 = vmatprep.mubr.bf16.mxu0 0
        %2818 = vmatmul.mubr.bf16.gmra.mrb[0].mxu0 %v2571
        %v2819 = vpop.f32.mrb[0].mxu0
        %v2820 = vadd.f32 %v2663, %v2819
        %v2821 = vpop.f32.mrb[0].mxu0
        %v2822 = vpop.f32.mrb[0].mxu0
        %v2823 = vadd.f32 %v2663, %v2822
        %v2824 = vpop.f32.mrb[0].mxu0
        %2825 = vmatprep.mubr.bf16.mxu0 0
        %2826 = vmatmul.mubr.bf16.gmra.mrb[0].mxu0 %v2572
        %v2827 = vpop.f32.mrb[0].mxu0
        %v2828 = vadd.f32 %v2663, %v2827
        %v2829 = vpop.f32.mrb[0].mxu0
        %v2830 = vpop.f32.mrb[0].mxu0
        %v2831 = vadd.f32 %v2663, %v2830
        %v2832 = vpop.f32.mrb[0].mxu0
        %2833 = vmatprep.mubr.bf16.mxu0 0
        %2834 = vmatmul.mubr.bf16.gmra.mrb[0].mxu0 %v2573
        %v2835 = vpop.f32.mrb[0].mxu0
        %v2836 = vadd.f32 %v2663, %v2835
        %v2837 = vpop.f32.mrb[0].mxu0
        %v2838 = vpop.f32.mrb[0].mxu0
        %v2839 = vadd.f32 %v2663, %v2838
        %v2840 = vpop.f32.mrb[0].mxu0
        %2841 = vmatprep.mubr.bf16.mxu0 0
        %2842 = vmatmul.mubr.bf16.gmra.mrb[0].mxu0 %v2574
        %v2843 = vpop.f32.mrb[0].mxu0
        %v2844 = vadd.f32 %v2663, %v2843
        %v2845 = vpop.f32.mrb[0].mxu0
        %v2846 = vpop.f32.mrb[0].mxu0
        %v2847 = vadd.f32 %v2663, %v2846
        %v2848 = vpop.f32.mrb[0].mxu0
        %2849 = vmatprep.mubr.bf16.mxu0 0
        %2850 = vmatmul.mubr.bf16.gmra.mrb[0].mxu0 %v2575
        %v2851 = vpop.f32.mrb[0].mxu0
        %v2852 = vadd.f32 %v2663, %v2851
        %v2853 = vpop.f32.mrb[0].mxu0
        %v2854 = vpop.f32.mrb[0].mxu0
        %v2855 = vadd.f32 %v2663, %v2854
        %v2856 = vpop.f32.mrb[0].mxu0
        %2857 = vmatprep.mubr.bf16.mxu0 0
        %2858 = vmatmul.mubr.bf16.gmra.mrb[0].mxu0 %v2576
        %v2859 = vpop.f32.mrb[0].mxu0
        %v2860 = vadd.f32 %v2663, %v2859
        %v2861 = vpop.f32.mrb[0].mxu0
        %v2862 = vpop.f32.mrb[0].mxu0
        %v2863 = vadd.f32 %v2663, %v2862
        %v2864 = vpop.f32.mrb[0].mxu0
        %2865 = vmatprep.mubr.bf16.mxu0 0
        %2866 = vmatmul.mubr.bf16.gmra.mrb[0].mxu0 %v2577
        %v2867 = vpop.f32.mrb[0].mxu0
        %v2868 = vadd.f32 %v2663, %v2867
        %v2869 = vpop.f32.mrb[0].mxu0
        %v2870 = vpop.f32.mrb[0].mxu0
        %v2871 = vadd.f32 %v2663, %v2870
        %v2872 = vpop.f32.mrb[0].mxu0
        %2873 = vdwg.mxu0
        %v2874 = vadd.f32 %v2748, %v2626
        %v2875 = vadd.f32 %v2751, %v2627
        %v2876 = vadd.f32 %v2756, %v2628
        %v2877 = vadd.f32 %v2759, %v2629
        %v2878 = vadd.f32 %v2764, %v2630
        %v2879 = vadd.f32 %v2767, %v2631
        %v2880 = vadd.f32 %v2772, %v2632
        %v2881 = vadd.f32 %v2775, %v2633
        %v2882 = vadd.f32 %v2780, %v2634
        %v2883 = vadd.f32 %v2783, %v2635
        %v2884 = vadd.f32 %v2788, %v2636
        %v2885 = vadd.f32 %v2791, %v2637
        %v2886 = vadd.f32 %v2796, %v2638
        %v2887 = vadd.f32 %v2799, %v2639
        %v2888 = vadd.f32 %v2804, %v2640
        %v2889 = vadd.f32 %v2807, %v2641
        %v2890 = vadd.f32 %v2812, %v2642
        %v2891 = vadd.f32 %v2815, %v2643
        %v2892 = vadd.f32 %v2820, %v2644
        %v2893 = vadd.f32 %v2823, %v2645
        %v2894 = vadd.f32 %v2828, %v2646
        %v2895 = vadd.f32 %v2831, %v2647
        %v2896 = vadd.f32 %v2836, %v2648
        %v2897 = vadd.f32 %v2839, %v2649
        %v2898 = vadd.f32 %v2844, %v2650
        %v2899 = vadd.f32 %v2847, %v2651
        %v2900 = vadd.f32 %v2852, %v2652
        %v2901 = vadd.f32 %v2855, %v2653
        %v2902 = vadd.f32 %v2860, %v2654
        %v2903 = vadd.f32 %v2863, %v2655
        %v2904 = vadd.f32 %v2868, %v2656
        %v2905 = vadd.f32 %v2871, %v2657
        %v2906 = vmax.f32 %v2874, 0.0
        %v2907 = vmax.f32 %v2875, 0.0
        %v2908 = vmax.f32 %v2876, 0.0
        %v2909 = vmax.f32 %v2877, 0.0
        %v2910 = vmax.f32 %v2878, 0.0
        %v2911 = vmax.f32 %v2879, 0.0
        %v2912 = vmax.f32 %v2880, 0.0
        %v2913 = vmax.f32 %v2881, 0.0
        %v2914 = vmax.f32 %v2882, 0.0
        %v2915 = vmax.f32 %v2883, 0.0
        %v2916 = vmax.f32 %v2884, 0.0
        %v2917 = vmax.f32 %v2885, 0.0
        %v2918 = vmax.f32 %v2886, 0.0
        %v2919 = vmax.f32 %v2887, 0.0
        %v2920 = vmax.f32 %v2888, 0.0
        %v2921 = vmax.f32 %v2889, 0.0
        %v2922 = vmax.f32 %v2890, 0.0
        %v2923 = vmax.f32 %v2891, 0.0
        %v2924 = vmax.f32 %v2892, 0.0
        %v2925 = vmax.f32 %v2893, 0.0
        %v2926 = vmax.f32 %v2894, 0.0
        %v2927 = vmax.f32 %v2895, 0.0
        %v2928 = vmax.f32 %v2896, 0.0
        %v2929 = vmax.f32 %v2897, 0.0
        %v2930 = vmax.f32 %v2898, 0.0
        %v2931 = vmax.f32 %v2899, 0.0
        %v2932 = vmax.f32 %v2900, 0.0
        %v2933 = vmax.f32 %v2901, 0.0
        %v2934 = vmax.f32 %v2902, 0.0
        %v2935 = vmax.f32 %v2903, 0.0
        %v2936 = vmax.f32 %v2904, 0.0
        %v2937 = vmax.f32 %v2905, 0.0
        %v2938 = vpack.c.bf16 %v2907, %v2906
        %v2939 = vpack.c.bf16 %v2909, %v2908
        %v2940 = vpack.c.bf16 %v2911, %v2910
        %v2941 = vpack.c.bf16 %v2913, %v2912
        %v2942 = vpack.c.bf16 %v2915, %v2914
        %v2943 = vpack.c.bf16 %v2917, %v2916
        %v2944 = vpack.c.bf16 %v2919, %v2918
        %v2945 = vpack.c.bf16 %v2921, %v2920
        %v2946 = vpack.c.bf16 %v2923, %v2922
        %v2947 = vpack.c.bf16 %v2925, %v2924
        %v2948 = vpack.c.bf16 %v2927, %v2926
        %v2949 = vpack.c.bf16 %v2929, %v2928
        %v2950 = vpack.c.bf16 %v2931, %v2930
        %v2951 = vpack.c.bf16 %v2933, %v2932
        %v2952 = vpack.c.bf16 %v2935, %v2934
        %v2953 = vpack.c.bf16 %v2937, %v2936
        %v2970 = vunpack.c.l.b16 %v2938
        %v2971 = vunpack.c.h.b16 %v2938
        %v2972 = vunpack.c.l.b16 %v2939
        %v2973 = vunpack.c.h.b16 %v2939
        %v2974 = vunpack.c.l.b16 %v2940
        %v2975 = vunpack.c.h.b16 %v2940
        %v2976 = vunpack.c.l.b16 %v2941
        %v2977 = vunpack.c.h.b16 %v2941
        %v2978 = vunpack.c.l.b16 %v2942
        %v2979 = vunpack.c.h.b16 %v2942
        %v2980 = vunpack.c.l.b16 %v2943
        %v2981 = vunpack.c.h.b16 %v2943
        %v2982 = vunpack.c.l.b16 %v2944
        %v2983 = vunpack.c.h.b16 %v2944
        %v2984 = vunpack.c.l.b16 %v2945
        %v2985 = vunpack.c.h.b16 %v2945
        %v2986 = vunpack.c.l.b16 %v2946
        %v2987 = vunpack.c.h.b16 %v2946
        %v2988 = vunpack.c.l.b16 %v2947
        %v2989 = vunpack.c.h.b16 %v2947
        %v2990 = vunpack.c.l.b16 %v2948
        %v2991 = vunpack.c.h.b16 %v2948
        %v2992 = vunpack.c.l.b16 %v2949
        %v2993 = vunpack.c.h.b16 %v2949
        %v2994 = vunpack.c.l.b16 %v2950
        %v2995 = vunpack.c.h.b16 %v2950
        %v2996 = vunpack.c.l.b16 %v2951
        %v2997 = vunpack.c.h.b16 %v2951
        %v2998 = vunpack.c.l.b16 %v2952
        %v2999 = vunpack.c.h.b16 %v2952
        %v3000 = vunpack.c.l.b16 %v2953
        %v3001 = vunpack.c.h.b16 %v2953
        %v3002 = vpack.c.b16 %v2970, %v2970
        %v3003 = vpack.c.b16 %v2971, %v2971
        %v3004 = vpack.c.b16 %v2972, %v2972
        %v3005 = vpack.c.b16 %v2973, %v2973
        %v3006 = vpack.c.b16 %v2974, %v2974
        %v3007 = vpack.c.b16 %v2975, %v2975
        %v3008 = vpack.c.b16 %v2976, %v2976
        %v3009 = vpack.c.b16 %v2977, %v2977
        %v3010 = vpack.c.b16 %v2978, %v2978
        %v3011 = vpack.c.b16 %v2979, %v2979
        %v3012 = vpack.c.b16 %v2980, %v2980
        %v3013 = vpack.c.b16 %v2981, %v2981
        %v3014 = vpack.c.b16 %v2982, %v2982
        %v3015 = vpack.c.b16 %v2983, %v2983
        %v3016 = vpack.c.b16 %v2984, %v2984
        %v3017 = vpack.c.b16 %v2985, %v2985
        %v3018 = vpack.c.b16 %v2986, %v2986
        %v3019 = vpack.c.b16 %v2987, %v2987
        %v3020 = vpack.c.b16 %v2988, %v2988
        %v3021 = vpack.c.b16 %v2989, %v2989
        %v3022 = vpack.c.b16 %v2990, %v2990
        %v3023 = vpack.c.b16 %v2991, %v2991
        %v3024 = vpack.c.b16 %v2992, %v2992
        %v3025 = vpack.c.b16 %v2993, %v2993
        %v3026 = vpack.c.b16 %v2994, %v2994
        %v3027 = vpack.c.b16 %v2995, %v2995
        %v3028 = vpack.c.b16 %v2996, %v2996
        %v3029 = vpack.c.b16 %v2997, %v2997
        %v3030 = vpack.c.b16 %v2998, %v2998
        %v3031 = vpack.c.b16 %v2999, %v2999
        %v3032 = vpack.c.b16 %v3000, %v3000
        %v3033 = vpack.c.b16 %v3001, %v3001
        %3066 = vst [vmem:[%s360] sm:$0xf] %v3002
        %3067 = vst [vmem:[%s360 + $0x4] sm:$0xf] %v3003
        %3068 = vst [vmem:[%s360 + $0x8] sm:$0xf] %v3004
        %3069 = vst [vmem:[%s360 + $0xc] sm:$0xf] %v3005
        %3070 = vst [vmem:[%s360 + $0x10] sm:$0xf] %v3006
        %3071 = vst [vmem:[%s360 + $0x14] sm:$0xf] %v3007
        %3072 = vst [vmem:[%s360 + $0x18] sm:$0xf] %v3008
        %3073 = vst [vmem:[%s360 + $0x1c] sm:$0xf] %v3009
        %3074 = vst [vmem:[%s360 + $0x20] sm:$0xf] %v3010
        %3075 = vst [vmem:[%s360 + $0x24] sm:$0xf] %v3011
        %3076 = vst [vmem:[%s360 + $0x28] sm:$0xf] %v3012
        %3077 = vst [vmem:[%s360 + $0x2c] sm:$0xf] %v3013
        %3078 = vst [vmem:[%s360 + $0x30] sm:$0xf] %v3014
        %3079 = vst [vmem:[%s360 + $0x34] sm:$0xf] %v3015
        %3080 = vst [vmem:[%s360 + $0x38] sm:$0xf] %v3016
        %3081 = vst [vmem:[%s360 + $0x3c] sm:$0xf] %v3017
        %3082 = vst [vmem:[%s360 + $0x40] sm:$0xf] %v3018
        %3083 = vst [vmem:[%s360 + $0x44] sm:$0xf] %v3019
        %3084 = vst [vmem:[%s360 + $0x48] sm:$0xf] %v3020
        %3085 = vst [vmem:[%s360 + $0x4c] sm:$0xf] %v3021
        %3086 = vst [vmem:[%s360 + $0x50] sm:$0xf] %v3022
        %3087 = vst [vmem:[%s360 + $0x54] sm:$0xf] %v3023
        %3088 = vst [vmem:[%s360 + $0x58] sm:$0xf] %v3024
        %3089 = vst [vmem:[%s360 + $0x5c] sm:$0xf] %v3025
        %3090 = vst [vmem:[%s360 + $0x60] sm:$0xf] %v3026
        %3091 = vst [vmem:[%s360 + $0x64] sm:$0xf] %v3027
        %3092 = vst [vmem:[%s360 + $0x68] sm:$0xf] %v3028
        %3093 = vst [vmem:[%s360 + $0x6c] sm:$0xf] %v3029
        %3094 = vst [vmem:[%s360 + $0x70] sm:$0xf] %v3030
        %3095 = vst [vmem:[%s360 + $0x74] sm:$0xf] %v3031
        %3096 = vst [vmem:[%s360 + $0x78] sm:$0xf] %v3032
        %3097 = vst [vmem:[%s360 + $0x7c] sm:$0xf] %v3033
        %s3098 = sand.u32 %s203, 1
        %s3099 = scalar_lea.sflag [#allocation7], %s3098
        %s3100 = sand.u32 %s203, 1
        %s3101 = smul.addr %s3100, 128
        %s3102 = scalar_lea.vmem [#allocation13], %s3101
        // Predicated region
        $region97: #{tpu_custom_call.1} parent=47 // pred_check
          %p3103 = pneg %p213
        $region98: #{tpu_custom_call.1} parent=47 // pred_check_branch
          %3105 = sbr.rel (%p3103) target = $region100
        $region99: #{tpu_custom_call.1} parent=47 // pred_region
          %s3106 = smul.u32 16, %s32
          %s3108 = ssub.s32 2048, 2048
          %3109 = vsyncadd %s3099, %s3108
          %s3110 = smul.addr %s3106, 2
          %s3111 = smul.addr %s31, 32
          %s3112 = sadd.s32 %s3110, %s3111
          %s3113 = smul.addr %s3112, 64
          %s3114 = scalar_lea.hbm %s8, %s3113
          %s3115 = sshll.u32 %s3102, 4
          %s3116 = int_to_ptr.vmem [resolvable:$true] %s3115
          %3121 = dma.vmem_to_hbm [thread:$0]  %s3116, 2048, %s3114, %s3099, 64, 64, 4
        $region100: #{tpu_custom_call.1} parent=47 // pred_fallthru
          _
      $region48: #{tpu_custom_call.1} parent=5 // pred_fallthru
        _
      %p3122 = scmp.le.s32.totalorder 2, %s22
      // Predicated region
      $region101: #{tpu_custom_call.1} parent=5 // pred_check
        %p3123 = pneg %p3122
      $region102: #{tpu_custom_call.1} parent=5 // pred_check_branch
        %3125 = sbr.rel (%p3123) target = $region104
      $region103: #{tpu_custom_call.1} parent=5 // pred_region
        %s3126 = ssub.s32 %s22, 2
        // Predicated region
        $region105: #{tpu_custom_call.1} parent=103 // pred_check
          %p3127 = pneg %p219
        $region106: #{tpu_custom_call.1} parent=103 // pred_check_branch
          %3129 = sbr.rel (%p3127) target = $region108
        $region107: #{tpu_custom_call.1} parent=103 // pred_region
          %s3130 = sand.u32 %s204, 1
          %s3131 = scalar_lea.sflag [#allocation7], %s3130
          %s3132 = sand.u32 %s204, 1
          %s3133 = smul.addr %s3132, 128
          %s3134 = scalar_lea.vmem [#allocation13], %s3133
          %3135 = dma.done %s3131, 2048
        $region108: #{tpu_custom_call.1} parent=103 // pred_fallthru
          _
      $region104: #{tpu_custom_call.1} parent=5 // pred_fallthru
        _
    $region6: #{tpu_custom_call.1} parent=1 // loop_footer
      %s26 = sadd.s32 1, %s22
    $region7: #{tpu_custom_call.1} parent=1 // loop_footer_branch
      %21 = sbr.rel target = $region3
    $region8: #{tpu_custom_call.1} parent=1 // loop_exit
      _
    %3136 = vsyncpa [#allocation6], 1
    %s3137 = scalar_lea.sflag [#allocation6], 1
    %3138 = vsyncpa %s3137, 1
    %3139 = vsyncpa [#allocation9], 1
    %3140 = vsyncpa [#allocation12], 1
    %3141 = vsyncpa [#allocation7], 1
    %s3142 = scalar_lea.sflag [#allocation7], 1
    %3143 = vsyncpa %s3142, 1
  %3144 = vsyncmov [#allocation4]
  %s3145 = vpop.sfrf %3144
  %p3146 = scmp.eq.s32.totalorder %s3145, 0
  %p3147 = pneg %p3146
  %3149 = shalt.err (%p3147)
  %s3150 = scalar_lea.sflag [#allocation4], 1
  %3151 = vsyncmov %s3150
  %s3152 = vpop.sfrf %3151
  %p3153 = scmp.eq.s32.totalorder %s3152, 0
  %p3154 = pneg %p3153
  %3156 = shalt.err (%p3154)

</llo_original>
